<compile_context>
chip_gen: v7x
topology: tpu7x:2x2x1
jax: 0.10.0
libtpu: 0.0.40
codegen_flags: <defaults>
</compile_context>

<pallas_src>
import functools

import jax
import jax.numpy as jnp
from jax.experimental import pallas as pl
from jax.experimental.pallas import tpu as pltpu


# ----------------------------- Pallas kernel ------------------------------

def wide_basic_kernel(x_ref, s1_ref, sh1_ref, w1_ref, bias1_ref,
                      s2_ref, sh2_ref, w2_ref, b2_ref, *rest, has_sc_conv):
    """Whole wide_basic block for one sample.

    x_ref    : (1, H*W, Cin)     f32   input sample (channels-last, spatial flattened)
    s1/sh1   : (1, Cin)          f32   folded bn1 scale / shift
    w1_ref   : (9*Cin, Cmid)     bf16  conv1 taps, im2col-packed (h, w, cin) x cout
    bias1_ref: (1, 1, Cmid)      f32   conv1 bias + Dense_0(silu(temb)) for this sample
    s2/sh2   : (1, Cmid)         f32   folded bn2 scale / shift
    w2_ref   : (9*Cmid, Cout)    bf16  conv2 taps, im2col-packed
    b2_ref   : (1, Cout)         f32   conv2 bias
    if has_sc_conv: rest = (wsc (Cin,Cout) bf16, bsc (1,Cout) f32, o_ref, scratches)
    else          : rest = (o_ref, scratches)                 # identity shortcut
    scratches: pad1 (H+2,W+2,Cin) f32, col1 (H*W,9*Cin) bf16,
               pad2 (H+2,W+2,Cmid) f32, col2 (H*W,9*Cmid) bf16
    """
    if has_sc_conv:
        wsc_ref, bsc_ref, o_ref, pad1_ref, col1_ref, pad2_ref, col2_ref = rest
    else:
        o_ref, pad1_ref, col1_ref, pad2_ref, col2_ref = rest

    Hp, Wp, Cin = pad1_ref.shape
    H, W = Hp - 2, Wp - 2
    HW = H * W
    Cmid = pad2_ref.shape[-1]

    # Zero ONLY the 1-pixel halo border (interior is fully overwritten below).
    # Done every step (O(H*C), negligible) rather than pl.when(program_id==0) so
    # it stays correct if the "parallel" batch axis is split across TensorCores
    # and a core never executes step 0.
    def zero_border(ref, c):
        ref[0:1, :, :] = jnp.zeros((1, Wp, c), ref.dtype)
        ref[Hp - 1:Hp, :, :] = jnp.zeros((1, Wp, c), ref.dtype)
        ref[:, 0:1, :] = jnp.zeros((Hp, 1, c), ref.dtype)
        ref[:, Wp - 1:Wp, :] = jnp.zeros((Hp, 1, c), ref.dtype)

    zero_border(pad1_ref, Cin)
    zero_border(pad2_ref, Cmid)

    # ---- stage 1: bn1 + relu -> padded scratch interior (zero border == SAME pad)
    h1 = jnp.maximum(x_ref[0] * s1_ref[...] + sh1_ref[...], 0.0)
    pad1_ref[1:H + 1, 1:W + 1, :] = h1.reshape(H, W, Cin)

    # ---- im2col pack: 9 shifted windows -> one (HW, 9*Cin) bf16 slab
    for k in range(9):
        dh, dw = k // 3, k % 3
        col1_ref[:, k * Cin:(k + 1) * Cin] = (
            pad1_ref[dh:dh + H, dw:dw + W, :].reshape(HW, Cin).astype(jnp.bfloat16))

    # ---- conv1 as ONE K=9*Cin MXU matmul (+ conv bias + temb bias)
    out1 = jnp.dot(col1_ref[...], w1_ref[...],
                   preferred_element_type=jnp.float32) + bias1_ref[0]

    # dropout: identity in eval mode.
    # TODO(synk): train-mode BatchNorm statistics and Dropout masking.

    # ---- stage 2: bn2 + relu -> padded scratch 2 (out1 never leaves VMEM)
    h2 = jnp.maximum(out1 * s2_ref[...] + sh2_ref[...], 0.0)
    pad2_ref[1:H + 1, 1:W + 1, :] = h2.reshape(H, W, Cmid)

    for k in range(9):
        dh, dw = k // 3, k % 3
        col2_ref[:, k * Cmid:(k + 1) * Cmid] = (
            pad2_ref[dh:dh + H, dw:dw + W, :].reshape(HW, Cmid).astype(jnp.bfloat16))

    acc2 = jnp.dot(col2_ref[...], w2_ref[...], preferred_element_type=jnp.float32)

    # ---- shortcut (1x1 conv iff in_planes != planes, else identity)
    if has_sc_conv:
        sc = jnp.dot(x_ref[0].astype(jnp.bfloat16), wsc_ref[...],
                     preferred_element_type=jnp.float32) + bsc_ref[...]
    else:
        sc = x_ref[0]

    o_ref[0] = acc2 + b2_ref[...] + sc


# ------------------------------ wrapper -------------------------------------

def _compiler_params():
    # Generation-aware VMEM budget: ~75% of physical -> ~96 MiB on v5e/v6e
    # (128 MiB), ~48 MiB on v7x (64 MiB), leaving compiler-scratch headroom.
    try:
        cap = pltpu.get_tpu_info().vmem_capacity_bytes
    except Exception:  # query unavailable -> conservative (v7x-safe) default
        cap = 64 * 1024 * 1024
    return pltpu.CompilerParams(
        dimension_semantics=("parallel",),       # batch axis: pipeline + megacore
        vmem_limit_bytes=int(cap) * 3 // 4)


def wide_basic_forward(x, temb, p, eps=1e-5, data_format="NCHW"):
    if data_format == "NCHW":
        x = jnp.transpose(x, (0, 2, 3, 1))       # NCHW -> NHWC
    x = x.astype(jnp.float32)
    N, H, W, Cin = x.shape
    Cmid = p["w1"].shape[-1]
    Cout = p["w2"].shape[-1]
    HW = H * W
    has_sc_conv = "wsc" in p
    if not has_sc_conv:
        assert Cin == Cout, "identity shortcut requires in_planes == planes"

    # Fold eval-mode BatchNorm into per-channel scale/shift (f32).
    s1 = (p["bn1_gamma"] / jnp.sqrt(p["bn1_var"] + eps)).reshape(1, Cin)
    sh1 = (p["bn1_beta"] - p["bn1_mean"] * s1[0]).reshape(1, Cin)
    s2 = (p["bn2_gamma"] / jnp.sqrt(p["bn2_var"] + eps)).reshape(1, Cmid)
    sh2 = (p["bn2_beta"] - p["bn2_mean"] * s2[0]).reshape(1, Cmid)

    # temb path in plain XLA (micro-matmul), pre-combined with conv1's bias.
    tbias = jax.nn.silu(temb.astype(jnp.float32)) @ p["dense_w"] + p["dense_b"]
    bias1 = (tbias + p["b1"][None, :]).reshape(N, 1, Cmid)

    # im2col-packed bf16 weights (cast once; accumulation stays f32 in-kernel).
    w1_t = p["w1"].reshape(9 * Cin, Cmid).astype(jnp.bfloat16)
    w2_t = p["w2"].reshape(9 * Cmid, Cout).astype(jnp.bfloat16)

    x2d = x.reshape(N, HW, Cin)

    # TODO(synk): for wide layers, mark the constant-index weight/scale/bias specs
    #             pipeline_mode=pl.Buffered(1) to avoid double-buffering ~MBs of
    #             weights; at these toy widths the saving is negligible.
    in_specs = [
        pl.BlockSpec((1, HW, Cin), lambda i: (i, 0, 0)),        # x
        pl.BlockSpec((1, Cin), lambda i: (0, 0)),               # bn1 scale
        pl.BlockSpec((1, Cin), lambda i: (0, 0)),               # bn1 shift
        pl.BlockSpec((9 * Cin, Cmid), lambda i: (0, 0)),        # conv1 taps (bf16)
        pl.BlockSpec((1, 1, Cmid), lambda i: (i, 0, 0)),        # per-sample bias1
        pl.BlockSpec((1, Cmid), lambda i: (0, 0)),              # bn2 scale
        pl.BlockSpec((1, Cmid), lambda i: (0, 0)),              # bn2 shift
        pl.BlockSpec((9 * Cmid, Cout), lambda i: (0, 0)),       # conv2 taps (bf16)
        pl.BlockSpec((1, Cout), lambda i: (0, 0)),              # conv2 bias
    ]
    args = [x2d, s1, sh1, w1_t, bias1, s2, sh2, w2_t, p["b2"].reshape(1, Cout)]
    if has_sc_conv:
        in_specs += [pl.BlockSpec((Cin, Cout), lambda i: (0, 0)),
                     pl.BlockSpec((1, Cout), lambda i: (0, 0))]
        args += [p["wsc"].astype(jnp.bfloat16), p["bsc"].reshape(1, Cout)]

    out = pl.pallas_call(
        functools.partial(wide_basic_kernel, has_sc_conv=has_sc_conv),
        out_shape=jax.ShapeDtypeStruct((N, HW, Cout), jnp.float32),
        grid=(N,),
        in_specs=in_specs,
        out_specs=pl.BlockSpec((1, HW, Cout), lambda i: (i, 0, 0)),
        scratch_shapes=[
            pltpu.VMEM((H + 2, W + 2, Cin), jnp.float32),    # pad1 (zero border)
            pltpu.VMEM((HW, 9 * Cin), jnp.bfloat16),         # col1 (im2col slab)
            pltpu.VMEM((H + 2, W + 2, Cmid), jnp.float32),   # pad2
            pltpu.VMEM((HW, 9 * Cmid), jnp.bfloat16),        # col2
        ],
        compiler_params=_compiler_params(),
    )(*args)

    out = out.reshape(N, H, W, Cout)
    if data_format == "NCHW":
        out = jnp.transpose(out, (0, 3, 1, 2))   # NHWC -> NCHW
    return out


# ------------------------------ params / reference ---------------------------

def init_params(key, in_planes, planes, temb_dim):
    ks = jax.random.split(key, 16)
    rn = lambda k, shape, s=0.1: s * jax.random.normal(k, shape, jnp.float32)
    p = dict(
        bn1_gamma=1.0 + rn(ks[0], (in_planes,)),
        bn1_beta=rn(ks[1], (in_planes,)),
        bn1_mean=rn(ks[2], (in_planes,)),
        bn1_var=jnp.abs(1.0 + rn(ks[3], (in_planes,))),
        w1=rn(ks[4], (3, 3, in_planes, planes)),        # HWIO
        b1=rn(ks[5], (planes,)),
        dense_w=rn(ks[6], (temb_dim, planes)),          # Dense_0 weight (transposed)
        dense_b=jnp.zeros((planes,), jnp.float32),      # nn.init.zeros_
        bn2_gamma=1.0 + rn(ks[7], (planes,)),
        bn2_beta=rn(ks[8], (planes,)),
        bn2_mean=rn(ks[9], (planes,)),
        bn2_var=jnp.abs(1.0 + rn(ks[10], (planes,))),
        w2=rn(ks[11], (3, 3, planes, planes)),          # HWIO
        b2=rn(ks[12], (planes,)),
    )
    if in_planes != planes:   # PyTorch: shortcut conv iff stride != 1 or in != out
        p["wsc"] = rn(ks[13], (in_planes, planes))      # 1x1 conv as (Cin, Cout)
        p["bsc"] = rn(ks[14], (planes,))
    return p


def reference_forward(x_nchw, temb, p, eps=1e-5, mxu_dtype=jnp.float32):
    """Pure-JAX reference.  mxu_dtype=bfloat16 reproduces the kernel's operand
    precision (f32 accumulation); float32 is the PyTorch-faithful math."""
    x = jnp.transpose(x_nchw, (0, 2, 3, 1)).astype(jnp.float32)
    N, H, W, _ = x.shape

    def bn(v, g, b, m, var):
        return (v - m) / jnp.sqrt(var + eps) * g + b

    def conv3x3(v, w, b):
        vp = jnp.pad(v.astype(mxu_dtype), ((0, 0), (1, 1), (1, 1), (0, 0)))
        Co = w.shape[-1]
        out = jnp.zeros(v.shape[:3] + (Co,), jnp.float32)
        for dh in range(3):
            for dw in range(3):
                out = out + jnp.einsum(
                    "nhwc,cd->nhwd", vp[:, dh:dh + H, dw:dw + W, :],
                    w[dh, dw].astype(mxu_dtype),
                    preferred_element_type=jnp.float32)
        return out + b

    h = jax.nn.relu(bn(x, p["bn1_gamma"], p["bn1_beta"], p["bn1_mean"], p["bn1_var"]))
    out = conv3x3(h, p["w1"], p["b1"])
    tb = jax.nn.silu(temb) @ p["dense_w"] + p["dense_b"]
    out = out + tb[:, None, None, :]
    h2 = jax.nn.relu(bn(out, p["bn2_gamma"], p["bn2_beta"], p["bn2_mean"], p["bn2_var"]))
    out = conv3x3(h2, p["w2"], p["b2"])
    if "wsc" in p:
        sc = jnp.einsum("nhwc,cd->nhwd", x.astype(mxu_dtype),
                        p["wsc"].astype(mxu_dtype),
                        preferred_element_type=jnp.float32) + p["bsc"]
    else:
        sc = x
    out = out + sc
    return jnp.transpose(out, (0, 3, 1, 2))


# ---------------------------------- main ------------------------------------

if __name__ == "__main__":
    key = jax.random.PRNGKey(0)
    kx, kt, kp, kp2 = jax.random.split(key, 4)

    # Config 1: in_planes != planes  ->  1x1-conv shortcut path.
    in_planes, planes, temb_dim = 4, 8, 32
    N, H, W = 2, 16, 16
    x = jax.random.normal(kx, (N, in_planes, H, W), jnp.float32)    # NCHW
    temb = jax.random.normal(kt, (N, temb_dim), jnp.float32)
    params = init_params(kp, in_planes, planes, temb_dim)

    out = jax.block_until_ready(wide_basic_forward(x, temb, params))
    assert out.shape == (N, planes, H, W), out.shape

    # Strict check vs. a reference using the same bf16-operand / f32-accumulate math.
    ref_bf16 = reference_forward(x, temb, params, mxu_dtype=jnp.bfloat16)
    assert jnp.allclose(out, ref_bf16, rtol=1e-3, atol=1e-3), (
        float(jnp.max(jnp.abs(out - ref_bf16))))
    # Looser check vs. the full-f32 (PyTorch-faithful) reference.
    ref_f32 = reference_forward(x, temb, params, mxu_dtype=jnp.float32)
    assert jnp.allclose(out, ref_f32, rtol=5e-2, atol=5e-2), (
        float(jnp.max(jnp.abs(out - ref_f32))))

    # Config 2: in_planes == planes  ->  identity shortcut (matches PyTorch).
    x2 = jax.random.normal(kx, (N, planes, H, W), jnp.float32)
    params2 = init_params(kp2, planes, planes, temb_dim)
    out2 = jax.block_until_ready(wide_basic_forward(x2, temb, params2))
    ref2 = reference_forward(x2, temb, params2, mxu_dtype=jnp.bfloat16)
    assert out2.shape == (N, planes, H, W), out2.shape
    assert jnp.allclose(out2, ref2, rtol=1e-3, atol=1e-3), (
        float(jnp.max(jnp.abs(out2 - ref2))))

    print("KERNEL_OK")
</pallas_src>

<mosaic_0001>
module attributes {stable_mosaic.version = 11 : i64} {
  func.func @wide_basic_kernel(%arg0: i32, %arg1: memref<1x256x4xf32, #tpu.memory_space<vmem>>, %arg2: memref<1x4xf32, #tpu.memory_space<vmem>>, %arg3: memref<1x4xf32, #tpu.memory_space<vmem>>, %arg4: memref<36x8xbf16, #tpu.memory_space<vmem>>, %arg5: memref<1x1x8xf32, #tpu.memory_space<vmem>>, %arg6: memref<1x8xf32, #tpu.memory_space<vmem>>, %arg7: memref<1x8xf32, #tpu.memory_space<vmem>>, %arg8: memref<72x8xbf16, #tpu.memory_space<vmem>>, %arg9: memref<1x8xf32, #tpu.memory_space<vmem>>, %arg10: memref<4x8xbf16, #tpu.memory_space<vmem>>, %arg11: memref<1x8xf32, #tpu.memory_space<vmem>>, %arg12: memref<1x256x8xf32, #tpu.memory_space<vmem>>, %arg13: memref<18x18x4xf32, #tpu.memory_space<vmem>>, %arg14: memref<256x36xbf16, #tpu.memory_space<vmem>>, %arg15: memref<18x18x8xf32, #tpu.memory_space<vmem>>, %arg16: memref<256x72xbf16, #tpu.memory_space<vmem>>) attributes {dimension_semantics = [#tpu.dimension_semantics<parallel>], iteration_bounds = array<i64: 2>, scalar_prefetch = 0 : i64, scratch_operands = 4 : i64, tpu.core_type = #tpu.core_type<tc>, window_params = [{transform_indices = @transform_0, window_bounds = array<i64: 1, 256, 4>}, {pipeline_mode = #tpu.pipeline_mode<synchronous>, transform_indices = @transform_1, window_bounds = array<i64: 1, 4>}, {pipeline_mode = #tpu.pipeline_mode<synchronous>, transform_indices = @transform_2, window_bounds = array<i64: 1, 4>}, {pipeline_mode = #tpu.pipeline_mode<synchronous>, transform_indices = @transform_3, window_bounds = array<i64: 36, 8>}, {transform_indices = @transform_4, window_bounds = array<i64: 1, 1, 8>}, {pipeline_mode = #tpu.pipeline_mode<synchronous>, transform_indices = @transform_5, window_bounds = array<i64: 1, 8>}, {pipeline_mode = #tpu.pipeline_mode<synchronous>, transform_indices = @transform_6, window_bounds = array<i64: 1, 8>}, {pipeline_mode = #tpu.pipeline_mode<synchronous>, transform_indices = @transform_7, window_bounds = array<i64: 72, 8>}, {pipeline_mode = #tpu.pipeline_mode<synchronous>, transform_indices = @transform_8, window_bounds = array<i64: 1, 8>}, {pipeline_mode = #tpu.pipeline_mode<synchronous>, transform_indices = @transform_9, window_bounds = array<i64: 4, 8>}, {pipeline_mode = #tpu.pipeline_mode<synchronous>, transform_indices = @transform_10, window_bounds = array<i64: 1, 8>}, {transform_indices = @transform_11, window_bounds = array<i64: 1, 256, 8>}]} {
    %cst = arith.constant 0.000000e+00 : f32
    %0 = vector.broadcast %cst : f32 to vector<1x18x4xf32>
    %c0 = arith.constant 0 : index
    %c0_0 = arith.constant 0 : index
    %c0_1 = arith.constant 0 : index
    %1 = vector.load %arg13[%c0, %c0_0, %c0_1] : memref<18x18x4xf32, #tpu.memory_space<vmem>>, vector<1x18x4xf32>
    tpu.vector_store %arg13[%c0, %c0_0, %c0_1], %0 {strides = array<i32>} : memref<18x18x4xf32, #tpu.memory_space<vmem>>, vector<1x18x4xf32>,
    %cst_2 = arith.constant 0.000000e+00 : f32
    %2 = vector.broadcast %cst_2 : f32 to vector<1x18x4xf32>
    %c17 = arith.constant 17 : index
    %c0_3 = arith.constant 0 : index
    %c0_4 = arith.constant 0 : index
    %3 = vector.load %arg13[%c17, %c0_3, %c0_4] : memref<18x18x4xf32, #tpu.memory_space<vmem>>, vector<1x18x4xf32>
    tpu.vector_store %arg13[%c17, %c0_3, %c0_4], %2 {strides = array<i32>} : memref<18x18x4xf32, #tpu.memory_space<vmem>>, vector<1x18x4xf32>,
    %cst_5 = arith.constant 0.000000e+00 : f32
    %4 = vector.broadcast %cst_5 : f32 to vector<18x1x4xf32>
    %c0_6 = arith.constant 0 : index
    %c0_7 = arith.constant 0 : index
    %c0_8 = arith.constant 0 : index
    %5 = vector.load %arg13[%c0_6, %c0_7, %c0_8] : memref<18x18x4xf32, #tpu.memory_space<vmem>>, vector<18x1x4xf32>
    tpu.vector_store %arg13[%c0_6, %c0_7, %c0_8], %4 {strides = array<i32>} : memref<18x18x4xf32, #tpu.memory_space<vmem>>, vector<18x1x4xf32>,
    %cst_9 = arith.constant 0.000000e+00 : f32
    %6 = vector.broadcast %cst_9 : f32 to vector<18x1x4xf32>
    %c0_10 = arith.constant 0 : index
    %c17_11 = arith.constant 17 : index
    %c0_12 = arith.constant 0 : index
    %7 = vector.load %arg13[%c0_10, %c17_11, %c0_12] : memref<18x18x4xf32, #tpu.memory_space<vmem>>, vector<18x1x4xf32>
    tpu.vector_store %arg13[%c0_10, %c17_11, %c0_12], %6 {strides = array<i32>} : memref<18x18x4xf32, #tpu.memory_space<vmem>>, vector<18x1x4xf32>,
    %cst_13 = arith.constant 0.000000e+00 : f32
    %8 = vector.broadcast %cst_13 : f32 to vector<1x18x8xf32>
    %c0_14 = arith.constant 0 : index
    %c0_15 = arith.constant 0 : index
    %c0_16 = arith.constant 0 : index
    %9 = vector.load %arg15[%c0_14, %c0_15, %c0_16] : memref<18x18x8xf32, #tpu.memory_space<vmem>>, vector<1x18x8xf32>
    tpu.vector_store %arg15[%c0_14, %c0_15, %c0_16], %8 {strides = array<i32>} : memref<18x18x8xf32, #tpu.memory_space<vmem>>, vector<1x18x8xf32>,
    %cst_17 = arith.constant 0.000000e+00 : f32
    %10 = vector.broadcast %cst_17 : f32 to vector<1x18x8xf32>
    %c17_18 = arith.constant 17 : index
    %c0_19 = arith.constant 0 : index
    %c0_20 = arith.constant 0 : index
    %11 = vector.load %arg15[%c17_18, %c0_19, %c0_20] : memref<18x18x8xf32, #tpu.memory_space<vmem>>, vector<1x18x8xf32>
    tpu.vector_store %arg15[%c17_18, %c0_19, %c0_20], %10 {strides = array<i32>} : memref<18x18x8xf32, #tpu.memory_space<vmem>>, vector<1x18x8xf32>,
    %cst_21 = arith.constant 0.000000e+00 : f32
    %12 = vector.broadcast %cst_21 : f32 to vector<18x1x8xf32>
    %c0_22 = arith.constant 0 : index
    %c0_23 = arith.constant 0 : index
    %c0_24 = arith.constant 0 : index
    %13 = vector.load %arg15[%c0_22, %c0_23, %c0_24] : memref<18x18x8xf32, #tpu.memory_space<vmem>>, vector<18x1x8xf32>
    tpu.vector_store %arg15[%c0_22, %c0_23, %c0_24], %12 {strides = array<i32>} : memref<18x18x8xf32, #tpu.memory_space<vmem>>, vector<18x1x8xf32>,
    %cst_25 = arith.constant 0.000000e+00 : f32
    %14 = vector.broadcast %cst_25 : f32 to vector<18x1x8xf32>
    %c0_26 = arith.constant 0 : index
    %c17_27 = arith.constant 17 : index
    %c0_28 = arith.constant 0 : index
    %15 = vector.load %arg15[%c0_26, %c17_27, %c0_28] : memref<18x18x8xf32, #tpu.memory_space<vmem>>, vector<18x1x8xf32>
    tpu.vector_store %arg15[%c0_26, %c17_27, %c0_28], %14 {strides = array<i32>} : memref<18x18x8xf32, #tpu.memory_space<vmem>>, vector<18x1x8xf32>,
    %c0_29 = arith.constant 0 : index
    %c0_30 = arith.constant 0 : index
    %c0_31 = arith.constant 0 : index
    %16 = vector.load %arg1[%c0_29, %c0_30, %c0_31] : memref<1x256x4xf32, #tpu.memory_space<vmem>>, vector<1x256x4xf32>
    %17 = vector.shape_cast %16 : vector<1x256x4xf32> to vector<256x4xf32>
    %c0_32 = arith.constant 0 : index
    %c0_33 = arith.constant 0 : index
    %18 = vector.load %arg2[%c0_32, %c0_33] : memref<1x4xf32, #tpu.memory_space<vmem>>, vector<1x4xf32>
    %19 = vector.broadcast %18 : vector<1x4xf32> to vector<256x4xf32>
    %20 = arith.mulf %17, %19 : vector<256x4xf32>
    %c0_34 = arith.constant 0 : index
    %c0_35 = arith.constant 0 : index
    %21 = vector.load %arg3[%c0_34, %c0_35] : memref<1x4xf32, #tpu.memory_space<vmem>>, vector<1x4xf32>
    %22 = vector.broadcast %21 : vector<1x4xf32> to vector<256x4xf32>
    %23 = arith.addf %20, %22 : vector<256x4xf32>
    %cst_36 = arith.constant 0.000000e+00 : f32
    %24 = vector.broadcast %cst_36 : f32 to vector<256x4xf32>
    %25 = arith.maximumf %23, %24 : vector<256x4xf32>
    %26 = vector.shape_cast %25 : vector<256x4xf32> to vector<16x16x4xf32>
    %c1 = arith.constant 1 : index
    %c1_37 = arith.constant 1 : index
    %c0_38 = arith.constant 0 : index
    %27 = vector.load %arg13[%c1, %c1_37, %c0_38] : memref<18x18x4xf32, #tpu.memory_space<vmem>>, vector<16x16x4xf32>
    tpu.vector_store %arg13[%c1, %c1_37, %c0_38], %26 {strides = array<i32>} : memref<18x18x4xf32, #tpu.memory_space<vmem>>, vector<16x16x4xf32>,
    %c0_39 = arith.constant 0 : index
    %c0_40 = arith.constant 0 : index
    %c0_41 = arith.constant 0 : index
    %28 = vector.load %arg13[%c0_39, %c0_40, %c0_41] : memref<18x18x4xf32, #tpu.memory_space<vmem>>, vector<16x16x4xf32>
    %29 = vector.shape_cast %28 : vector<16x16x4xf32> to vector<256x4xf32>
    %30 = arith.truncf %29 : vector<256x4xf32> to vector<256x4xbf16>
    %c0_42 = arith.constant 0 : index
    %c0_43 = arith.constant 0 : index
    %31 = vector.load %arg14[%c0_42, %c0_43] : memref<256x36xbf16, #tpu.memory_space<vmem>>, vector<256x4xbf16>
    tpu.vector_store %arg14[%c0_42, %c0_43], %30 {strides = array<i32>} : memref<256x36xbf16, #tpu.memory_space<vmem>>, vector<256x4xbf16>,
    %c0_44 = arith.constant 0 : index
    %c1_45 = arith.constant 1 : index
    %c0_46 = arith.constant 0 : index
    %32 = vector.load %arg13[%c0_44, %c1_45, %c0_46] : memref<18x18x4xf32, #tpu.memory_space<vmem>>, vector<16x16x4xf32>
    %33 = vector.shape_cast %32 : vector<16x16x4xf32> to vector<256x4xf32>
    %34 = arith.truncf %33 : vector<256x4xf32> to vector<256x4xbf16>
    %c0_47 = arith.constant 0 : index
    %c4 = arith.constant 4 : index
    %35 = vector.load %arg14[%c0_47, %c4] : memref<256x36xbf16, #tpu.memory_space<vmem>>, vector<256x4xbf16>
    tpu.vector_store %arg14[%c0_47, %c4], %34 {strides = array<i32>} : memref<256x36xbf16, #tpu.memory_space<vmem>>, vector<256x4xbf16>,
    %c0_48 = arith.constant 0 : index
    %c2 = arith.constant 2 : index
    %c0_49 = arith.constant 0 : index
    %36 = vector.load %arg13[%c0_48, %c2, %c0_49] : memref<18x18x4xf32, #tpu.memory_space<vmem>>, vector<16x16x4xf32>
    %37 = vector.shape_cast %36 : vector<16x16x4xf32> to vector<256x4xf32>
    %38 = arith.truncf %37 : vector<256x4xf32> to vector<256x4xbf16>
    %c0_50 = arith.constant 0 : index
    %c8 = arith.constant 8 : index
    %39 = vector.load %arg14[%c0_50, %c8] : memref<256x36xbf16, #tpu.memory_space<vmem>>, vector<256x4xbf16>
    tpu.vector_store %arg14[%c0_50, %c8], %38 {strides = array<i32>} : memref<256x36xbf16, #tpu.memory_space<vmem>>, vector<256x4xbf16>,
    %c1_51 = arith.constant 1 : index
    %c0_52 = arith.constant 0 : index
    %c0_53 = arith.constant 0 : index
    %40 = vector.load %arg13[%c1_51, %c0_52, %c0_53] : memref<18x18x4xf32, #tpu.memory_space<vmem>>, vector<16x16x4xf32>
    %41 = vector.shape_cast %40 : vector<16x16x4xf32> to vector<256x4xf32>
    %42 = arith.truncf %41 : vector<256x4xf32> to vector<256x4xbf16>
    %c0_54 = arith.constant 0 : index
    %c12 = arith.constant 12 : index
    %43 = vector.load %arg14[%c0_54, %c12] : memref<256x36xbf16, #tpu.memory_space<vmem>>, vector<256x4xbf16>
    tpu.vector_store %arg14[%c0_54, %c12], %42 {strides = array<i32>} : memref<256x36xbf16, #tpu.memory_space<vmem>>, vector<256x4xbf16>,
    %c1_55 = arith.constant 1 : index
    %c1_56 = arith.constant 1 : index
    %c0_57 = arith.constant 0 : index
    %44 = vector.load %arg13[%c1_55, %c1_56, %c0_57] : memref<18x18x4xf32, #tpu.memory_space<vmem>>, vector<16x16x4xf32>
    %45 = vector.shape_cast %44 : vector<16x16x4xf32> to vector<256x4xf32>
    %46 = arith.truncf %45 : vector<256x4xf32> to vector<256x4xbf16>
    %c0_58 = arith.constant 0 : index
    %c16 = arith.constant 16 : index
    %47 = vector.load %arg14[%c0_58, %c16] : memref<256x36xbf16, #tpu.memory_space<vmem>>, vector<256x4xbf16>
    tpu.vector_store %arg14[%c0_58, %c16], %46 {strides = array<i32>} : memref<256x36xbf16, #tpu.memory_space<vmem>>, vector<256x4xbf16>,
    %c1_59 = arith.constant 1 : index
    %c2_60 = arith.constant 2 : index
    %c0_61 = arith.constant 0 : index
    %48 = vector.load %arg13[%c1_59, %c2_60, %c0_61] : memref<18x18x4xf32, #tpu.memory_space<vmem>>, vector<16x16x4xf32>
    %49 = vector.shape_cast %48 : vector<16x16x4xf32> to vector<256x4xf32>
    %50 = arith.truncf %49 : vector<256x4xf32> to vector<256x4xbf16>
    %c0_62 = arith.constant 0 : index
    %c20 = arith.constant 20 : index
    %51 = vector.load %arg14[%c0_62, %c20] : memref<256x36xbf16, #tpu.memory_space<vmem>>, vector<256x4xbf16>
    tpu.vector_store %arg14[%c0_62, %c20], %50 {strides = array<i32>} : memref<256x36xbf16, #tpu.memory_space<vmem>>, vector<256x4xbf16>,
    %c2_63 = arith.constant 2 : index
    %c0_64 = arith.constant 0 : index
    %c0_65 = arith.constant 0 : index
    %52 = vector.load %arg13[%c2_63, %c0_64, %c0_65] : memref<18x18x4xf32, #tpu.memory_space<vmem>>, vector<16x16x4xf32>
    %53 = vector.shape_cast %52 : vector<16x16x4xf32> to vector<256x4xf32>
    %54 = arith.truncf %53 : vector<256x4xf32> to vector<256x4xbf16>
    %c0_66 = arith.constant 0 : index
    %c24 = arith.constant 24 : index
    %55 = vector.load %arg14[%c0_66, %c24] : memref<256x36xbf16, #tpu.memory_space<vmem>>, vector<256x4xbf16>
    tpu.vector_store %arg14[%c0_66, %c24], %54 {strides = array<i32>} : memref<256x36xbf16, #tpu.memory_space<vmem>>, vector<256x4xbf16>,
    %c2_67 = arith.constant 2 : index
    %c1_68 = arith.constant 1 : index
    %c0_69 = arith.constant 0 : index
    %56 = vector.load %arg13[%c2_67, %c1_68, %c0_69] : memref<18x18x4xf32, #tpu.memory_space<vmem>>, vector<16x16x4xf32>
    %57 = vector.shape_cast %56 : vector<16x16x4xf32> to vector<256x4xf32>
    %58 = arith.truncf %57 : vector<256x4xf32> to vector<256x4xbf16>
    %c0_70 = arith.constant 0 : index
    %c28 = arith.constant 28 : index
    %59 = vector.load %arg14[%c0_70, %c28] : memref<256x36xbf16, #tpu.memory_space<vmem>>, vector<256x4xbf16>
    tpu.vector_store %arg14[%c0_70, %c28], %58 {strides = array<i32>} : memref<256x36xbf16, #tpu.memory_space<vmem>>, vector<256x4xbf16>,
    %c2_71 = arith.constant 2 : index
    %c2_72 = arith.constant 2 : index
    %c0_73 = arith.constant 0 : index
    %60 = vector.load %arg13[%c2_71, %c2_72, %c0_73] : memref<18x18x4xf32, #tpu.memory_space<vmem>>, vector<16x16x4xf32>
    %61 = vector.shape_cast %60 : vector<16x16x4xf32> to vector<256x4xf32>
    %62 = arith.truncf %61 : vector<256x4xf32> to vector<256x4xbf16>
    %c0_74 = arith.constant 0 : index
    %c32 = arith.constant 32 : index
    %63 = vector.load %arg14[%c0_74, %c32] : memref<256x36xbf16, #tpu.memory_space<vmem>>, vector<256x4xbf16>
    tpu.vector_store %arg14[%c0_74, %c32], %62 {strides = array<i32>} : memref<256x36xbf16, #tpu.memory_space<vmem>>, vector<256x4xbf16>,
    %c0_75 = arith.constant 0 : index
    %c0_76 = arith.constant 0 : index
    %64 = vector.load %arg14[%c0_75, %c0_76] : memref<256x36xbf16, #tpu.memory_space<vmem>>, vector<256x36xbf16>
    %c0_77 = arith.constant 0 : index
    %c0_78 = arith.constant 0 : index
    %65 = vector.load %arg4[%c0_77, %c0_78] : memref<36x8xbf16, #tpu.memory_space<vmem>>, vector<36x8xbf16>
    %cst_79 = arith.constant dense<0.000000e+00> : vector<256x8xf32>
    %66 = tpu.matmul %64, %65, %cst_79 {dimension_numbers = #tpu.dot_dimension_numbers<[1], [0], [0], [1], [0, 0, 1, 1], [], []>} : vector<256x36xbf16>, vector<36x8xbf16>, vector<256x8xf32> -> vector<256x8xf32>
    %c0_80 = arith.constant 0 : index
    %c0_81 = arith.constant 0 : index
    %c0_82 = arith.constant 0 : index
    %67 = vector.load %arg5[%c0_80, %c0_81, %c0_82] : memref<1x1x8xf32, #tpu.memory_space<vmem>>, vector<1x1x8xf32>
    %68 = vector.shape_cast %67 : vector<1x1x8xf32> to vector<1x8xf32>
    %69 = vector.broadcast %68 : vector<1x8xf32> to vector<256x8xf32>
    %70 = arith.addf %66, %69 : vector<256x8xf32>
    %c0_83 = arith.constant 0 : index
    %c0_84 = arith.constant 0 : index
    %71 = vector.load %arg6[%c0_83, %c0_84] : memref<1x8xf32, #tpu.memory_space<vmem>>, vector<1x8xf32>
    %72 = vector.broadcast %71 : vector<1x8xf32> to vector<256x8xf32>
    %73 = arith.mulf %70, %72 : vector<256x8xf32>
    %c0_85 = arith.constant 0 : index
    %c0_86 = arith.constant 0 : index
    %74 = vector.load %arg7[%c0_85, %c0_86] : memref<1x8xf32, #tpu.memory_space<vmem>>, vector<1x8xf32>
    %75 = vector.broadcast %74 : vector<1x8xf32> to vector<256x8xf32>
    %76 = arith.addf %73, %75 : vector<256x8xf32>
    %cst_87 = arith.constant 0.000000e+00 : f32
    %77 = vector.broadcast %cst_87 : f32 to vector<256x8xf32>
    %78 = arith.maximumf %76, %77 : vector<256x8xf32>
    %79 = vector.shape_cast %78 : vector<256x8xf32> to vector<16x16x8xf32>
    %c1_88 = arith.constant 1 : index
    %c1_89 = arith.constant 1 : index
    %c0_90 = arith.constant 0 : index
    %80 = vector.load %arg15[%c1_88, %c1_89, %c0_90] : memref<18x18x8xf32, #tpu.memory_space<vmem>>, vector<16x16x8xf32>
    tpu.vector_store %arg15[%c1_88, %c1_89, %c0_90], %79 {strides = array<i32>} : memref<18x18x8xf32, #tpu.memory_space<vmem>>, vector<16x16x8xf32>,
    %c0_91 = arith.constant 0 : index
    %c0_92 = arith.constant 0 : index
    %c0_93 = arith.constant 0 : index
    %81 = vector.load %arg15[%c0_91, %c0_92, %c0_93] : memref<18x18x8xf32, #tpu.memory_space<vmem>>, vector<16x16x8xf32>
    %82 = vector.shape_cast %81 : vector<16x16x8xf32> to vector<256x8xf32>
    %83 = arith.truncf %82 : vector<256x8xf32> to vector<256x8xbf16>
    %c0_94 = arith.constant 0 : index
    %c0_95 = arith.constant 0 : index
    %84 = vector.load %arg16[%c0_94, %c0_95] : memref<256x72xbf16, #tpu.memory_space<vmem>>, vector<256x8xbf16>
    tpu.vector_store %arg16[%c0_94, %c0_95], %83 {strides = array<i32>} : memref<256x72xbf16, #tpu.memory_space<vmem>>, vector<256x8xbf16>,
    %c0_96 = arith.constant 0 : index
    %c1_97 = arith.constant 1 : index
    %c0_98 = arith.constant 0 : index
    %85 = vector.load %arg15[%c0_96, %c1_97, %c0_98] : memref<18x18x8xf32, #tpu.memory_space<vmem>>, vector<16x16x8xf32>
    %86 = vector.shape_cast %85 : vector<16x16x8xf32> to vector<256x8xf32>
    %87 = arith.truncf %86 : vector<256x8xf32> to vector<256x8xbf16>
    %c0_99 = arith.constant 0 : index
    %c8_100 = arith.constant 8 : index
    %88 = vector.load %arg16[%c0_99, %c8_100] : memref<256x72xbf16, #tpu.memory_space<vmem>>, vector<256x8xbf16>
    tpu.vector_store %arg16[%c0_99, %c8_100], %87 {strides = array<i32>} : memref<256x72xbf16, #tpu.memory_space<vmem>>, vector<256x8xbf16>,
    %c0_101 = arith.constant 0 : index
    %c2_102 = arith.constant 2 : index
    %c0_103 = arith.constant 0 : index
    %89 = vector.load %arg15[%c0_101, %c2_102, %c0_103] : memref<18x18x8xf32, #tpu.memory_space<vmem>>, vector<16x16x8xf32>
    %90 = vector.shape_cast %89 : vector<16x16x8xf32> to vector<256x8xf32>
    %91 = arith.truncf %90 : vector<256x8xf32> to vector<256x8xbf16>
    %c0_104 = arith.constant 0 : index
    %c16_105 = arith.constant 16 : index
    %92 = vector.load %arg16[%c0_104, %c16_105] : memref<256x72xbf16, #tpu.memory_space<vmem>>, vector<256x8xbf16>
    tpu.vector_store %arg16[%c0_104, %c16_105], %91 {strides = array<i32>} : memref<256x72xbf16, #tpu.memory_space<vmem>>, vector<256x8xbf16>,
    %c1_106 = arith.constant 1 : index
    %c0_107 = arith.constant 0 : index
    %c0_108 = arith.constant 0 : index
    %93 = vector.load %arg15[%c1_106, %c0_107, %c0_108] : memref<18x18x8xf32, #tpu.memory_space<vmem>>, vector<16x16x8xf32>
    %94 = vector.shape_cast %93 : vector<16x16x8xf32> to vector<256x8xf32>
    %95 = arith.truncf %94 : vector<256x8xf32> to vector<256x8xbf16>
    %c0_109 = arith.constant 0 : index
    %c24_110 = arith.constant 24 : index
    %96 = vector.load %arg16[%c0_109, %c24_110] : memref<256x72xbf16, #tpu.memory_space<vmem>>, vector<256x8xbf16>
    tpu.vector_store %arg16[%c0_109, %c24_110], %95 {strides = array<i32>} : memref<256x72xbf16, #tpu.memory_space<vmem>>, vector<256x8xbf16>,
    %c1_111 = arith.constant 1 : index
    %c1_112 = arith.constant 1 : index
    %c0_113 = arith.constant 0 : index
    %97 = vector.load %arg15[%c1_111, %c1_112, %c0_113] : memref<18x18x8xf32, #tpu.memory_space<vmem>>, vector<16x16x8xf32>
    %98 = vector.shape_cast %97 : vector<16x16x8xf32> to vector<256x8xf32>
    %99 = arith.truncf %98 : vector<256x8xf32> to vector<256x8xbf16>
    %c0_114 = arith.constant 0 : index
    %c32_115 = arith.constant 32 : index
    %100 = vector.load %arg16[%c0_114, %c32_115] : memref<256x72xbf16, #tpu.memory_space<vmem>>, vector<256x8xbf16>
    tpu.vector_store %arg16[%c0_114, %c32_115], %99 {strides = array<i32>} : memref<256x72xbf16, #tpu.memory_space<vmem>>, vector<256x8xbf16>,
    %c1_116 = arith.constant 1 : index
    %c2_117 = arith.constant 2 : index
    %c0_118 = arith.constant 0 : index
    %101 = vector.load %arg15[%c1_116, %c2_117, %c0_118] : memref<18x18x8xf32, #tpu.memory_space<vmem>>, vector<16x16x8xf32>
    %102 = vector.shape_cast %101 : vector<16x16x8xf32> to vector<256x8xf32>
    %103 = arith.truncf %102 : vector<256x8xf32> to vector<256x8xbf16>
    %c0_119 = arith.constant 0 : index
    %c40 = arith.constant 40 : index
    %104 = vector.load %arg16[%c0_119, %c40] : memref<256x72xbf16, #tpu.memory_space<vmem>>, vector<256x8xbf16>
    tpu.vector_store %arg16[%c0_119, %c40], %103 {strides = array<i32>} : memref<256x72xbf16, #tpu.memory_space<vmem>>, vector<256x8xbf16>,
    %c2_120 = arith.constant 2 : index
    %c0_121 = arith.constant 0 : index
    %c0_122 = arith.constant 0 : index
    %105 = vector.load %arg15[%c2_120, %c0_121, %c0_122] : memref<18x18x8xf32, #tpu.memory_space<vmem>>, vector<16x16x8xf32>
    %106 = vector.shape_cast %105 : vector<16x16x8xf32> to vector<256x8xf32>
    %107 = arith.truncf %106 : vector<256x8xf32> to vector<256x8xbf16>
    %c0_123 = arith.constant 0 : index
    %c48 = arith.constant 48 : index
    %108 = vector.load %arg16[%c0_123, %c48] : memref<256x72xbf16, #tpu.memory_space<vmem>>, vector<256x8xbf16>
    tpu.vector_store %arg16[%c0_123, %c48], %107 {strides = array<i32>} : memref<256x72xbf16, #tpu.memory_space<vmem>>, vector<256x8xbf16>,
    %c2_124 = arith.constant 2 : index
    %c1_125 = arith.constant 1 : index
    %c0_126 = arith.constant 0 : index
    %109 = vector.load %arg15[%c2_124, %c1_125, %c0_126] : memref<18x18x8xf32, #tpu.memory_space<vmem>>, vector<16x16x8xf32>
    %110 = vector.shape_cast %109 : vector<16x16x8xf32> to vector<256x8xf32>
    %111 = arith.truncf %110 : vector<256x8xf32> to vector<256x8xbf16>
    %c0_127 = arith.constant 0 : index
    %c56 = arith.constant 56 : index
    %112 = vector.load %arg16[%c0_127, %c56] : memref<256x72xbf16, #tpu.memory_space<vmem>>, vector<256x8xbf16>
    tpu.vector_store %arg16[%c0_127, %c56], %111 {strides = array<i32>} : memref<256x72xbf16, #tpu.memory_space<vmem>>, vector<256x8xbf16>,
    %c2_128 = arith.constant 2 : index
    %c2_129 = arith.constant 2 : index
    %c0_130 = arith.constant 0 : index
    %113 = vector.load %arg15[%c2_128, %c2_129, %c0_130] : memref<18x18x8xf32, #tpu.memory_space<vmem>>, vector<16x16x8xf32>
    %114 = vector.shape_cast %113 : vector<16x16x8xf32> to vector<256x8xf32>
    %115 = arith.truncf %114 : vector<256x8xf32> to vector<256x8xbf16>
    %c0_131 = arith.constant 0 : index
    %c64 = arith.constant 64 : index
    %116 = vector.load %arg16[%c0_131, %c64] : memref<256x72xbf16, #tpu.memory_space<vmem>>, vector<256x8xbf16>
    tpu.vector_store %arg16[%c0_131, %c64], %115 {strides = array<i32>} : memref<256x72xbf16, #tpu.memory_space<vmem>>, vector<256x8xbf16>,
    %c0_132 = arith.constant 0 : index
    %c0_133 = arith.constant 0 : index
    %117 = vector.load %arg16[%c0_132, %c0_133] : memref<256x72xbf16, #tpu.memory_space<vmem>>, vector<256x72xbf16>
    %c0_134 = arith.constant 0 : index
    %c0_135 = arith.constant 0 : index
    %118 = vector.load %arg8[%c0_134, %c0_135] : memref<72x8xbf16, #tpu.memory_space<vmem>>, vector<72x8xbf16>
    %cst_136 = arith.constant dense<0.000000e+00> : vector<256x8xf32>
    %119 = tpu.matmul %117, %118, %cst_136 {dimension_numbers = #tpu.dot_dimension_numbers<[1], [0], [0], [1], [0, 0, 1, 1], [], []>} : vector<256x72xbf16>, vector<72x8xbf16>, vector<256x8xf32> -> vector<256x8xf32>
    %c0_137 = arith.constant 0 : index
    %c0_138 = arith.constant 0 : index
    %c0_139 = arith.constant 0 : index
    %120 = vector.load %arg1[%c0_137, %c0_138, %c0_139] : memref<1x256x4xf32, #tpu.memory_space<vmem>>, vector<1x256x4xf32>
    %121 = vector.shape_cast %120 : vector<1x256x4xf32> to vector<256x4xf32>
    %122 = arith.truncf %121 : vector<256x4xf32> to vector<256x4xbf16>
    %c0_140 = arith.constant 0 : index
    %c0_141 = arith.constant 0 : index
    %123 = vector.load %arg10[%c0_140, %c0_141] : memref<4x8xbf16, #tpu.memory_space<vmem>>, vector<4x8xbf16>
    %cst_142 = arith.constant dense<0.000000e+00> : vector<256x8xf32>
    %124 = tpu.matmul %122, %123, %cst_142 {dimension_numbers = #tpu.dot_dimension_numbers<[1], [0], [0], [1], [0, 0, 1, 1], [], []>} : vector<256x4xbf16>, vector<4x8xbf16>, vector<256x8xf32> -> vector<256x8xf32>
    %c0_143 = arith.constant 0 : index
    %c0_144 = arith.constant 0 : index
    %125 = vector.load %arg11[%c0_143, %c0_144] : memref<1x8xf32, #tpu.memory_space<vmem>>, vector<1x8xf32>
    %126 = vector.broadcast %125 : vector<1x8xf32> to vector<256x8xf32>
    %127 = arith.addf %124, %126 : vector<256x8xf32>
    %c0_145 = arith.constant 0 : index
    %c0_146 = arith.constant 0 : index
    %128 = vector.load %arg9[%c0_145, %c0_146] : memref<1x8xf32, #tpu.memory_space<vmem>>, vector<1x8xf32>
    %129 = vector.broadcast %128 : vector<1x8xf32> to vector<256x8xf32>
    %130 = arith.addf %119, %129 : vector<256x8xf32>
    %131 = arith.addf %130, %127 : vector<256x8xf32>
    %c0_147 = arith.constant 0 : index
    %c0_148 = arith.constant 0 : index
    %c0_149 = arith.constant 0 : index
    %132 = vector.load %arg12[%c0_147, %c0_148, %c0_149] : memref<1x256x8xf32, #tpu.memory_space<vmem>>, vector<1x256x8xf32>
    %133 = vector.shape_cast %132 : vector<1x256x8xf32> to vector<256x8xf32>
    %134 = vector.shape_cast %131 : vector<256x8xf32> to vector<1x256x8xf32>
    tpu.vector_store %arg12[%c0_147, %c0_148, %c0_149], %134 {strides = array<i32>} : memref<1x256x8xf32, #tpu.memory_space<vmem>>, vector<1x256x8xf32>,
    return
  }
  func.func @transform_0(%arg0: i32) -> (i32, i32, i32) {
    %c0_i32 = arith.constant 0 : i32
    %c0_i32_0 = arith.constant 0 : i32
    %c0_i32_1 = arith.constant 0 : i32
    return %arg0, %c0_i32, %c0_i32_0 : i32, i32, i32
  }
  func.func @transform_1(%arg0: i32) -> (i32, i32) {
    %c0_i32 = arith.constant 0 : i32
    %c0_i32_0 = arith.constant 0 : i32
    %c0_i32_1 = arith.constant 0 : i32
    return %c0_i32, %c0_i32_0 : i32, i32
  }
  func.func @transform_2(%arg0: i32) -> (i32, i32) {
    %c0_i32 = arith.constant 0 : i32
    %c0_i32_0 = arith.constant 0 : i32
    %c0_i32_1 = arith.constant 0 : i32
    return %c0_i32, %c0_i32_0 : i32, i32
  }
  func.func @transform_3(%arg0: i32) -> (i32, i32) {
    %c0_i32 = arith.constant 0 : i32
    %c0_i32_0 = arith.constant 0 : i32
    %c0_i32_1 = arith.constant 0 : i32
    return %c0_i32, %c0_i32_0 : i32, i32
  }
  func.func @transform_4(%arg0: i32) -> (i32, i32, i32) {
    %c0_i32 = arith.constant 0 : i32
    %c0_i32_0 = arith.constant 0 : i32
    %c0_i32_1 = arith.constant 0 : i32
    return %arg0, %c0_i32, %c0_i32_0 : i32, i32, i32
  }
  func.func @transform_5(%arg0: i32) -> (i32, i32) {
    %c0_i32 = arith.constant 0 : i32
    %c0_i32_0 = arith.constant 0 : i32
    %c0_i32_1 = arith.constant 0 : i32
    return %c0_i32, %c0_i32_0 : i32, i32
  }
  func.func @transform_6(%arg0: i32) -> (i32, i32) {
    %c0_i32 = arith.constant 0 : i32
    %c0_i32_0 = arith.constant 0 : i32
    %c0_i32_1 = arith.constant 0 : i32
    return %c0_i32, %c0_i32_0 : i32, i32
  }
  func.func @transform_7(%arg0: i32) -> (i32, i32) {
    %c0_i32 = arith.constant 0 : i32
    %c0_i32_0 = arith.constant 0 : i32
    %c0_i32_1 = arith.constant 0 : i32
    return %c0_i32, %c0_i32_0 : i32, i32
  }
  func.func @transform_8(%arg0: i32) -> (i32, i32) {
    %c0_i32 = arith.constant 0 : i32
    %c0_i32_0 = arith.constant 0 : i32
    %c0_i32_1 = arith.constant 0 : i32
    return %c0_i32, %c0_i32_0 : i32, i32
  }
  func.func @transform_9(%arg0: i32) -> (i32, i32) {
    %c0_i32 = arith.constant 0 : i32
    %c0_i32_0 = arith.constant 0 : i32
    %c0_i32_1 = arith.constant 0 : i32
    return %c0_i32, %c0_i32_0 : i32, i32
  }
  func.func @transform_10(%arg0: i32) -> (i32, i32) {
    %c0_i32 = arith.constant 0 : i32
    %c0_i32_0 = arith.constant 0 : i32
    %c0_i32_1 = arith.constant 0 : i32
    return %c0_i32, %c0_i32_0 : i32, i32
  }
  func.func @transform_11(%arg0: i32) -> (i32, i32, i32) {
    %c0_i32 = arith.constant 0 : i32
    %c0_i32_0 = arith.constant 0 : i32
    %c0_i32_1 = arith.constant 0 : i32
    return %arg0, %c0_i32, %c0_i32_0 : i32, i32, i32
  }
}

</mosaic_0001>

<llo_original>
// kernel: tpu_custom_call.1
$region0: #{tpu_custom_call.1}
  #allocation0 [shape = 'u32[]', space=smem, size = 0x4, offset = 0x4, fixed_abs, tag = 'smem constant byte address 0x4 - core index']
  #allocation1 [shape = 'u32[144,128]{1,0:T(1,128)}', space=vmem, size = 0x12000, scoped, tag = 'internal scratch']
  #allocation2 [shape = 'f32[18,18,4]{2,1,0:T(8,128)}', space=vmem, size = 0x36000, scoped, tag = 'scratch operand']
  #allocation3 [shape = 'bf16[256,36]{1,0:T(16,128)(2,1)}', space=vmem, size = 0x10000, scoped, tag = 'scratch operand']
  #allocation4 [shape = 'f32[18,18,8]{2,1,0:T(8,128)}', space=vmem, size = 0x36000, scoped, tag = 'scratch operand']
  #allocation5 [shape = 'bf16[256,72]{1,0:T(16,128)(2,1)}', space=vmem, size = 0x10000, scoped, tag = 'scratch operand']
  %s0 = inlined_call_operand.vmem [shape: f32[2,256,4], index: 0, kind: input, shape index: {}]
  %s1 = inlined_call_operand.vmem [shape: f32[1,4], index: 1, kind: input, shape index: {}]
  %s2 = inlined_call_operand.vmem [shape: f32[1,4], index: 2, kind: input, shape index: {}]
  %s3 = inlined_call_operand.vmem [shape: bf16[36,8], index: 3, kind: input, shape index: {}]
  %s4 = inlined_call_operand.vmem [shape: f32[2,1,8], index: 4, kind: input, shape index: {}]
  %s5 = inlined_call_operand.vmem [shape: f32[1,8], index: 5, kind: input, shape index: {}]
  %s6 = inlined_call_operand.vmem [shape: f32[1,8], index: 6, kind: input, shape index: {}]
  %s7 = inlined_call_operand.vmem [shape: bf16[72,8], index: 7, kind: input, shape index: {}]
  %s8 = inlined_call_operand.vmem [shape: f32[1,8], index: 8, kind: input, shape index: {}]
  %s9 = inlined_call_operand.vmem [shape: bf16[4,8], index: 9, kind: input, shape index: {}]
  %s10 = inlined_call_operand.vmem [shape: f32[1,8], index: 10, kind: input, shape index: {}]
  %s11 = inlined_call_operand.vmem [shape: f32[2,256,8], index: 11, kind: output, shape index: {}]
  %s12 = sld [smem:[#allocation0]]
  $region77: #{tpu_custom_call.1} parent=0
    _
  %s14 = ssub.s32 1, %s12
  %s15 = scalar_select 0, %s14, %s12
  loop: start=0, step=1, limit=4
  $region2: #{tpu_custom_call.1} parent=0 // loop_pre_header
    _
  $region3: #{tpu_custom_call.1} parent=0 // loop_header
    %s17 = sphi 0, %s21
    %p18 = scmp.ge.s32.totalorder %s17, 4
    %s27 = sphi 0, %s29
    %s30 = sphi 0, %s27
    %s31 = sphi 0, %s30
    %s47 = sphi 0, %s31
    %s51 = sphi 0, %s51
    %s53 = sphi 0, %s51
    %s54 = sphi 0, %s53
    %s68 = sphi 0, %s54
    %s72 = sphi 0, %s72
    %s74 = sphi 0, %s72
    %s75 = sphi 0, %s74
    %s89 = sphi 0, %s75
    %s93 = sphi 0, %s93
    %s95 = sphi 0, %s93
    %s96 = sphi 0, %s95
    %s110 = sphi 0, %s96
    %s116 = sphi 0, %s118
    %s119 = sphi 0, %s116
    %s120 = sphi 0, %s119
    %s136 = sphi 0, %s120
    %s140 = sphi 0, %s140
    %s142 = sphi 0, %s140
    %s143 = sphi 0, %s142
    %s157 = sphi 0, %s143
    %s161 = sphi 0, %s161
    %s163 = sphi 0, %s161
    %s164 = sphi 0, %s163
    %s178 = sphi 0, %s164
    %s182 = sphi 0, %s182
    %s184 = sphi 0, %s182
    %s185 = sphi 0, %s184
    %s199 = sphi 0, %s185
    %s203 = sphi 0, %s203
    %s205 = sphi 0, %s203
    %s206 = sphi 0, %s205
    %s220 = sphi 0, %s206
    %s224 = sphi 0, %s224
    %s226 = sphi 0, %s224
    %s227 = sphi 0, %s226
    %s241 = sphi 0, %s227
    %s245 = sphi 0, %s245
    %s247 = sphi 0, %s245
    %s248 = sphi 0, %s247
    %s262 = sphi 0, %s248
    %s268 = sphi 0, %s270
    %s271 = sphi 0, %s268
    %s272 = sphi 0, %s271
    %s288 = sphi 0, %s272
  $region4: #{tpu_custom_call.1} parent=0 // loop_header_branch
    %20 = sbr.rel (%p18) target = $region8
  $region5: #{tpu_custom_call.1} parent=0 // loop_body
    %s22 = ssub.s32 %s17, 1
    %s23 = ssub.s32 %s17, 2
    %s24 = sadd.s32 %s17, 1
    %s25 = ssub.s32 %s17, %s24
    %p26 = scmp.eq.s32.totalorder %s25, 0
    %s28 = sadd.s32 %s27, 1
    %s29 = scalar_select %p26, %s27, %s28
    %p32 = pneg %p26
    %p33 = scmp.eq.s32.totalorder %s17, 1
    %p34 = por %p32, %p33
    %p35 = scmp.ne.s32.totalorder %s27, %s30
    %p36 = scmp.eq.s32.totalorder %s17, 0
    %p37 = por %p35, %p36
    %p38 = scmp.ne.s32.totalorder %s27, %s30
    %p39 = scmp.eq.s32.totalorder %s22, 1
    %p40 = por %p38, %p39
    %p41 = scmp.ne.s32.totalorder %s30, %s31
    %p42 = scmp.eq.s32.totalorder %s22, 0
    %p43 = por %p41, %p42
    %p44 = scmp.ne.s32.totalorder %s30, %s31
    %p45 = scmp.eq.s32.totalorder %s23, 1
    %p46 = por %p44, %p45
    %p48 = scmp.ne.s32.totalorder %s31, %s47
    %p49 = scmp.eq.s32.totalorder %s23, 0
    %p50 = por %p48, %p49
    %s52 = sadd.s32 %s51, 1
    %p55 = scmp.eq.s32.totalorder %s17, 1
    %p56 = scmp.ne.s32.totalorder %s51, %s53
    %p57 = scmp.eq.s32.totalorder %s17, 0
    %p58 = por %p56, %p57
    %p59 = scmp.ne.s32.totalorder %s51, %s53
    %p60 = scmp.eq.s32.totalorder %s22, 1
    %p61 = por %p59, %p60
    %p62 = scmp.ne.s32.totalorder %s53, %s54
    %p63 = scmp.eq.s32.totalorder %s22, 0
    %p64 = por %p62, %p63
    %p65 = scmp.ne.s32.totalorder %s53, %s54
    %p66 = scmp.eq.s32.totalorder %s23, 1
    %p67 = por %p65, %p66
    %p69 = scmp.ne.s32.totalorder %s54, %s68
    %p70 = scmp.eq.s32.totalorder %s23, 0
    %p71 = por %p69, %p70
    %s73 = sadd.s32 %s72, 1
    %p76 = scmp.eq.s32.totalorder %s17, 1
    %p77 = scmp.ne.s32.totalorder %s72, %s74
    %p78 = scmp.eq.s32.totalorder %s17, 0
    %p79 = por %p77, %p78
    %p80 = scmp.ne.s32.totalorder %s72, %s74
    %p81 = scmp.eq.s32.totalorder %s22, 1
    %p82 = por %p80, %p81
    %p83 = scmp.ne.s32.totalorder %s74, %s75
    %p84 = scmp.eq.s32.totalorder %s22, 0
    %p85 = por %p83, %p84
    %p86 = scmp.ne.s32.totalorder %s74, %s75
    %p87 = scmp.eq.s32.totalorder %s23, 1
    %p88 = por %p86, %p87
    %p90 = scmp.ne.s32.totalorder %s75, %s89
    %p91 = scmp.eq.s32.totalorder %s23, 0
    %p92 = por %p90, %p91
    %s94 = sadd.s32 %s93, 1
    %p97 = scmp.eq.s32.totalorder %s17, 1
    %p98 = scmp.ne.s32.totalorder %s93, %s95
    %p99 = scmp.eq.s32.totalorder %s17, 0
    %p100 = por %p98, %p99
    %p101 = scmp.ne.s32.totalorder %s93, %s95
    %p102 = scmp.eq.s32.totalorder %s22, 1
    %p103 = por %p101, %p102
    %p104 = scmp.ne.s32.totalorder %s95, %s96
    %p105 = scmp.eq.s32.totalorder %s22, 0
    %p106 = por %p104, %p105
    %p107 = scmp.ne.s32.totalorder %s95, %s96
    %p108 = scmp.eq.s32.totalorder %s23, 1
    %p109 = por %p107, %p108
    %p111 = scmp.ne.s32.totalorder %s96, %s110
    %p112 = scmp.eq.s32.totalorder %s23, 0
    %p113 = por %p111, %p112
    %s114 = ssub.s32 %s17, %s24
    %p115 = scmp.eq.s32.totalorder %s114, 0
    %s117 = sadd.s32 %s116, 1
    %s118 = scalar_select %p115, %s116, %s117
    %p121 = pneg %p115
    %p122 = scmp.eq.s32.totalorder %s17, 1
    %p123 = por %p121, %p122
    %p124 = scmp.ne.s32.totalorder %s116, %s119
    %p125 = scmp.eq.s32.totalorder %s17, 0
    %p126 = por %p124, %p125
    %p127 = scmp.ne.s32.totalorder %s116, %s119
    %p128 = scmp.eq.s32.totalorder %s22, 1
    %p129 = por %p127, %p128
    %p130 = scmp.ne.s32.totalorder %s119, %s120
    %p131 = scmp.eq.s32.totalorder %s22, 0
    %p132 = por %p130, %p131
    %p133 = scmp.ne.s32.totalorder %s119, %s120
    %p134 = scmp.eq.s32.totalorder %s23, 1
    %p135 = por %p133, %p134
    %p137 = scmp.ne.s32.totalorder %s120, %s136
    %p138 = scmp.eq.s32.totalorder %s23, 0
    %p139 = por %p137, %p138
    %s141 = sadd.s32 %s140, 1
    %p144 = scmp.eq.s32.totalorder %s17, 1
    %p145 = scmp.ne.s32.totalorder %s140, %s142
    %p146 = scmp.eq.s32.totalorder %s17, 0
    %p147 = por %p145, %p146
    %p148 = scmp.ne.s32.totalorder %s140, %s142
    %p149 = scmp.eq.s32.totalorder %s22, 1
    %p150 = por %p148, %p149
    %p151 = scmp.ne.s32.totalorder %s142, %s143
    %p152 = scmp.eq.s32.totalorder %s22, 0
    %p153 = por %p151, %p152
    %p154 = scmp.ne.s32.totalorder %s142, %s143
    %p155 = scmp.eq.s32.totalorder %s23, 1
    %p156 = por %p154, %p155
    %p158 = scmp.ne.s32.totalorder %s143, %s157
    %p159 = scmp.eq.s32.totalorder %s23, 0
    %p160 = por %p158, %p159
    %s162 = sadd.s32 %s161, 1
    %p165 = scmp.eq.s32.totalorder %s17, 1
    %p166 = scmp.ne.s32.totalorder %s161, %s163
    %p167 = scmp.eq.s32.totalorder %s17, 0
    %p168 = por %p166, %p167
    %p169 = scmp.ne.s32.totalorder %s161, %s163
    %p170 = scmp.eq.s32.totalorder %s22, 1
    %p171 = por %p169, %p170
    %p172 = scmp.ne.s32.totalorder %s163, %s164
    %p173 = scmp.eq.s32.totalorder %s22, 0
    %p174 = por %p172, %p173
    %p175 = scmp.ne.s32.totalorder %s163, %s164
    %p176 = scmp.eq.s32.totalorder %s23, 1
    %p177 = por %p175, %p176
    %p179 = scmp.ne.s32.totalorder %s164, %s178
    %p180 = scmp.eq.s32.totalorder %s23, 0
    %p181 = por %p179, %p180
    %s183 = sadd.s32 %s182, 1
    %p186 = scmp.eq.s32.totalorder %s17, 1
    %p187 = scmp.ne.s32.totalorder %s182, %s184
    %p188 = scmp.eq.s32.totalorder %s17, 0
    %p189 = por %p187, %p188
    %p190 = scmp.ne.s32.totalorder %s182, %s184
    %p191 = scmp.eq.s32.totalorder %s22, 1
    %p192 = por %p190, %p191
    %p193 = scmp.ne.s32.totalorder %s184, %s185
    %p194 = scmp.eq.s32.totalorder %s22, 0
    %p195 = por %p193, %p194
    %p196 = scmp.ne.s32.totalorder %s184, %s185
    %p197 = scmp.eq.s32.totalorder %s23, 1
    %p198 = por %p196, %p197
    %p200 = scmp.ne.s32.totalorder %s185, %s199
    %p201 = scmp.eq.s32.totalorder %s23, 0
    %p202 = por %p200, %p201
    %s204 = sadd.s32 %s203, 1
    %p207 = scmp.eq.s32.totalorder %s17, 1
    %p208 = scmp.ne.s32.totalorder %s203, %s205
    %p209 = scmp.eq.s32.totalorder %s17, 0
    %p210 = por %p208, %p209
    %p211 = scmp.ne.s32.totalorder %s203, %s205
    %p212 = scmp.eq.s32.totalorder %s22, 1
    %p213 = por %p211, %p212
    %p214 = scmp.ne.s32.totalorder %s205, %s206
    %p215 = scmp.eq.s32.totalorder %s22, 0
    %p216 = por %p214, %p215
    %p217 = scmp.ne.s32.totalorder %s205, %s206
    %p218 = scmp.eq.s32.totalorder %s23, 1
    %p219 = por %p217, %p218
    %p221 = scmp.ne.s32.totalorder %s206, %s220
    %p222 = scmp.eq.s32.totalorder %s23, 0
    %p223 = por %p221, %p222
    %s225 = sadd.s32 %s224, 1
    %p228 = scmp.eq.s32.totalorder %s17, 1
    %p229 = scmp.ne.s32.totalorder %s224, %s226
    %p230 = scmp.eq.s32.totalorder %s17, 0
    %p231 = por %p229, %p230
    %p232 = scmp.ne.s32.totalorder %s224, %s226
    %p233 = scmp.eq.s32.totalorder %s22, 1
    %p234 = por %p232, %p233
    %p235 = scmp.ne.s32.totalorder %s226, %s227
    %p236 = scmp.eq.s32.totalorder %s22, 0
    %p237 = por %p235, %p236
    %p238 = scmp.ne.s32.totalorder %s226, %s227
    %p239 = scmp.eq.s32.totalorder %s23, 1
    %p240 = por %p238, %p239
    %p242 = scmp.ne.s32.totalorder %s227, %s241
    %p243 = scmp.eq.s32.totalorder %s23, 0
    %p244 = por %p242, %p243
    %s246 = sadd.s32 %s245, 1
    %p249 = scmp.eq.s32.totalorder %s17, 1
    %p250 = scmp.ne.s32.totalorder %s245, %s247
    %p251 = scmp.eq.s32.totalorder %s17, 0
    %p252 = por %p250, %p251
    %p253 = scmp.ne.s32.totalorder %s245, %s247
    %p254 = scmp.eq.s32.totalorder %s22, 1
    %p255 = por %p253, %p254
    %p256 = scmp.ne.s32.totalorder %s247, %s248
    %p257 = scmp.eq.s32.totalorder %s22, 0
    %p258 = por %p256, %p257
    %p259 = scmp.ne.s32.totalorder %s247, %s248
    %p260 = scmp.eq.s32.totalorder %s23, 1
    %p261 = por %p259, %p260
    %p263 = scmp.ne.s32.totalorder %s248, %s262
    %p264 = scmp.eq.s32.totalorder %s23, 0
    %p265 = por %p263, %p264
    %s266 = ssub.s32 %s17, %s24
    %p267 = scmp.eq.s32.totalorder %s266, 0
    %s269 = sadd.s32 %s268, 1
    %s270 = scalar_select %p267, %s268, %s269
    %p273 = pneg %p267
    %p274 = scmp.eq.s32.totalorder %s17, 1
    %p275 = por %p273, %p274
    %p276 = scmp.ne.s32.totalorder %s268, %s271
    %p277 = scmp.eq.s32.totalorder %s17, 0
    %p278 = por %p276, %p277
    %p279 = scmp.ne.s32.totalorder %s268, %s271
    %p280 = scmp.eq.s32.totalorder %s22, 1
    %p281 = por %p279, %p280
    %p282 = scmp.ne.s32.totalorder %s271, %s272
    %p283 = scmp.eq.s32.totalorder %s22, 0
    %p284 = por %p282, %p283
    %p285 = scmp.ne.s32.totalorder %s271, %s272
    %p286 = scmp.eq.s32.totalorder %s23, 1
    %p287 = por %p285, %p286
    %p289 = scmp.ne.s32.totalorder %s272, %s288
    %p290 = scmp.eq.s32.totalorder %s23, 0
    %p291 = por %p289, %p290
    %p292 = scmp.le.s32.totalorder 1, %s17
    %p293 = scmp.lt.s32.totalorder %s17, 3
    %p294 = pnand %p292, %p293
    %p295 = pneg %p294
    // Predicated region
    $region9: #{tpu_custom_call.1} parent=5 // pred_check
      _
    $region10: #{tpu_custom_call.1} parent=5 // pred_check_branch
      %297 = sbr.rel (%p294) target = $region12
    $region11: #{tpu_custom_call.1} parent=5 // pred_region
      %s298 = ssub.s32 %s17, 1
      // Predicated region
      $region13: #{tpu_custom_call.1} parent=11 // pred_check
        %p299 = pneg %p64
      $region14: #{tpu_custom_call.1} parent=11 // pred_check_branch
        %301 = sbr.rel (%p299) target = $region16
      $region15: #{tpu_custom_call.1} parent=11 // pred_region
        _
      $region16: #{tpu_custom_call.1} parent=11 // pred_fallthru
        _
      // Predicated region
      $region17: #{tpu_custom_call.1} parent=11 // pred_check
        %p302 = pneg %p85
      $region18: #{tpu_custom_call.1} parent=11 // pred_check_branch
        %304 = sbr.rel (%p302) target = $region20
      $region19: #{tpu_custom_call.1} parent=11 // pred_region
        _
      $region20: #{tpu_custom_call.1} parent=11 // pred_fallthru
        _
      // Predicated region
      $region21: #{tpu_custom_call.1} parent=11 // pred_check
        %p305 = pneg %p106
      $region22: #{tpu_custom_call.1} parent=11 // pred_check_branch
        %307 = sbr.rel (%p305) target = $region24
      $region23: #{tpu_custom_call.1} parent=11 // pred_region
        _
      $region24: #{tpu_custom_call.1} parent=11 // pred_fallthru
        _
      // Predicated region
      $region25: #{tpu_custom_call.1} parent=11 // pred_check
        %p308 = pneg %p153
      $region26: #{tpu_custom_call.1} parent=11 // pred_check_branch
        %310 = sbr.rel (%p308) target = $region28
      $region27: #{tpu_custom_call.1} parent=11 // pred_region
        _
      $region28: #{tpu_custom_call.1} parent=11 // pred_fallthru
        _
      // Predicated region
      $region29: #{tpu_custom_call.1} parent=11 // pred_check
        %p311 = pneg %p174
      $region30: #{tpu_custom_call.1} parent=11 // pred_check_branch
        %313 = sbr.rel (%p311) target = $region32
      $region31: #{tpu_custom_call.1} parent=11 // pred_region
        _
      $region32: #{tpu_custom_call.1} parent=11 // pred_fallthru
        _
      // Predicated region
      $region33: #{tpu_custom_call.1} parent=11 // pred_check
        %p314 = pneg %p195
      $region34: #{tpu_custom_call.1} parent=11 // pred_check_branch
        %316 = sbr.rel (%p314) target = $region36
      $region35: #{tpu_custom_call.1} parent=11 // pred_region
        _
      $region36: #{tpu_custom_call.1} parent=11 // pred_fallthru
        _
      // Predicated region
      $region37: #{tpu_custom_call.1} parent=11 // pred_check
        %p317 = pneg %p216
      $region38: #{tpu_custom_call.1} parent=11 // pred_check_branch
        %319 = sbr.rel (%p317) target = $region40
      $region39: #{tpu_custom_call.1} parent=11 // pred_region
        _
      $region40: #{tpu_custom_call.1} parent=11 // pred_fallthru
        _
      // Predicated region
      $region41: #{tpu_custom_call.1} parent=11 // pred_check
        %p320 = pneg %p237
      $region42: #{tpu_custom_call.1} parent=11 // pred_check_branch
        %322 = sbr.rel (%p320) target = $region44
      $region43: #{tpu_custom_call.1} parent=11 // pred_region
        _
      $region44: #{tpu_custom_call.1} parent=11 // pred_fallthru
        _
      // Predicated region
      $region45: #{tpu_custom_call.1} parent=11 // pred_check
        %p323 = pneg %p258
      $region46: #{tpu_custom_call.1} parent=11 // pred_check_branch
        %325 = sbr.rel (%p323) target = $region48
      $region47: #{tpu_custom_call.1} parent=11 // pred_region
        _
      $region48: #{tpu_custom_call.1} parent=11 // pred_fallthru
        _
    $region12: #{tpu_custom_call.1} parent=5 // pred_fallthru
      _
    %p326 = scmp.lt.s32.totalorder %s17, 2
    // Predicated region
    $region49: #{tpu_custom_call.1} parent=5 // pred_check
      %p327 = pneg %p326
    $region50: #{tpu_custom_call.1} parent=5 // pred_check_branch
      %329 = sbr.rel (%p327) target = $region52
    $region51: #{tpu_custom_call.1} parent=5 // pred_region
      // Predicated region
      $region53: #{tpu_custom_call.1} parent=51 // pred_check
        %p330 = pneg %p37
      $region54: #{tpu_custom_call.1} parent=51 // pred_check_branch
        %332 = sbr.rel (%p330) target = $region56
      $region55: #{tpu_custom_call.1} parent=51 // pred_region
        %p333 = scmp.lt.s32.totalorder %s17, 1
        %s334 = scalar_select %p333, %s17, 1
        %s335 = smul.addr %s334, 32
        %s336 = smul.addr %s335, 8
        %s337 = scalar_lea.vmem %s0, %s336
      $region56: #{tpu_custom_call.1} parent=51 // pred_fallthru
        _
      // Predicated region
      $region57: #{tpu_custom_call.1} parent=51 // pred_check
        %p338 = pneg %p126
      $region58: #{tpu_custom_call.1} parent=51 // pred_check_branch
        %340 = sbr.rel (%p338) target = $region60
      $region59: #{tpu_custom_call.1} parent=51 // pred_region
        %p341 = scmp.lt.s32.totalorder %s17, 1
        %s342 = scalar_select %p341, %s17, 1
        %s343 = scalar_lea.vmem %s4, %s342
      $region60: #{tpu_custom_call.1} parent=51 // pred_fallthru
        _
    $region52: #{tpu_custom_call.1} parent=5 // pred_fallthru
      _
    %p344 = scmp.le.s32.totalorder 1, %s17
    %p345 = scmp.lt.s32.totalorder %s17, 3
    %p346 = pnand %p344, %p345
    %p347 = pneg %p346
    // Predicated region
    $region61: #{tpu_custom_call.1} parent=5 // pred_check
      _
    $region62: #{tpu_custom_call.1} parent=5 // pred_check_branch
      %349 = sbr.rel (%p346) target = $region64
    $region63: #{tpu_custom_call.1} parent=5 // pred_region
      %s350 = ssub.s32 %s17, 1
      %p351 = scmp.lt.s32.totalorder %s22, 1
      %s352 = scalar_select %p351, %s22, 1
      %s353 = smul.addr %s352, 32
      %s354 = smul.addr %s353, 8
      %s355 = scalar_lea.vmem %s0, %s354
      %p356 = pneg %p43
      %p357 = pneg %p40
      %p358 = pneg %p64
      %p359 = pneg %p61
      %p360 = pneg %p85
      %p361 = pneg %p82
      %p362 = pneg %p106
      %p363 = pneg %p103
      %p364 = scmp.lt.s32.totalorder %s22, 1
      %s365 = scalar_select %p364, %s22, 1
      %s366 = scalar_lea.vmem %s4, %s365
      %p367 = pneg %p132
      %p368 = pneg %p129
      %p369 = pneg %p153
      %p370 = pneg %p150
      %p371 = pneg %p174
      %p372 = pneg %p171
      %p373 = pneg %p195
      %p374 = pneg %p192
      %p375 = pneg %p216
      %p376 = pneg %p213
      %p377 = pneg %p237
      %p378 = pneg %p234
      %p379 = pneg %p258
      %p380 = pneg %p255
      %p381 = pneg %p284
      %p382 = pneg %p281
      %p383 = scmp.lt.s32.totalorder %s22, 1
      %s384 = scalar_select %p383, %s22, 1
      %s385 = smul.addr %s384, 32
      %s386 = smul.addr %s385, 8
      %s387 = scalar_lea.vmem %s11, %s386
      %p388 = scmp.lt.s32.totalorder %s22, 1
      %s389 = scalar_select %p388, %s22, 1
      %s390 = smul.addr %s389, 32
      %s391 = smul.addr %s390, 8
      %s392 = scalar_lea.vmem %s0, %s391
      %p393 = scmp.lt.s32.totalorder %s22, 1
      %s394 = scalar_select %p393, %s22, 1
      %s395 = scalar_lea.vmem %s4, %s394
      %p396 = scmp.lt.s32.totalorder %s22, 1
      %s397 = scalar_select %p396, %s22, 1
      %s398 = smul.addr %s397, 32
      %s399 = smul.addr %s398, 8
      %s400 = scalar_lea.vmem %s11, %s399
      %vm402 = vcmask 31744
      %403 = vst.msk [vmem:[#allocation2] sm:$0xff] %vm402, 0.0
      %404 = vst.msk [vmem:[#allocation2 + $0x8] sm:$0xff] %vm402, 0.0
      %vm405 = vcmask 25600
      %406 = vst.msk [vmem:[#allocation2 + $0x10] sm:$0x3] %vm405, 0.0
      %s407 = scalar_lea.vmem [#allocation2], 408
      %408 = vst.msk [vmem:[%s407] sm:$0xff] %vm402, 0.0
      %409 = vst.msk [vmem:[%s407 + $0x8] sm:$0xff] %vm402, 0.0
      %410 = vst.msk [vmem:[%s407 + $0x10] sm:$0x3] %vm405, 0.0
      %vm411 = vcmask 24576
      %412 = vst.msk [vmem:[#allocation2] sm:$0x1] %vm411, 0.0
      %413 = vst.msk [vmem:[#allocation2 + $0x18] sm:$0x1] %vm411, 0.0
      %414 = vst.msk [vmem:[#allocation2 + $0x30] sm:$0x1] %vm411, 0.0
      %415 = vst.msk [vmem:[#allocation2 + $0x48] sm:$0x1] %vm411, 0.0
      %416 = vst.msk [vmem:[#allocation2 + $0x60] sm:$0x1] %vm411, 0.0
      %417 = vst.msk [vmem:[#allocation2 + $0x78] sm:$0x1] %vm411, 0.0
      %418 = vst.msk [vmem:[#allocation2 + $0x90] sm:$0x1] %vm411, 0.0
      %419 = vst.msk [vmem:[#allocation2 + $0xa8] sm:$0x1] %vm411, 0.0
      %420 = vst.msk [vmem:[#allocation2 + $0xc0] sm:$0x1] %vm411, 0.0
      %421 = vst.msk [vmem:[#allocation2 + $0xd8] sm:$0x1] %vm411, 0.0
      %422 = vst.msk [vmem:[#allocation2 + $0xf0] sm:$0x1] %vm411, 0.0
      %423 = vst.msk [vmem:[#allocation2 + $0x108] sm:$0x1] %vm411, 0.0
      %424 = vst.msk [vmem:[#allocation2 + $0x120] sm:$0x1] %vm411, 0.0
      %425 = vst.msk [vmem:[#allocation2 + $0x138] sm:$0x1] %vm411, 0.0
      %426 = vst.msk [vmem:[#allocation2 + $0x150] sm:$0x1] %vm411, 0.0
      %427 = vst.msk [vmem:[#allocation2 + $0x168] sm:$0x1] %vm411, 0.0
      %428 = vst.msk [vmem:[#allocation2 + $0x180] sm:$0x1] %vm411, 0.0
      %429 = vst.msk [vmem:[#allocation2 + $0x198] sm:$0x1] %vm411, 0.0
      %430 = vst.msk [vmem:[#allocation2 + $0x11] sm:$0x1] %vm411, 0.0
      %431 = vst.msk [vmem:[#allocation2 + $0x29] sm:$0x1] %vm411, 0.0
      %432 = vst.msk [vmem:[#allocation2 + $0x41] sm:$0x1] %vm411, 0.0
      %433 = vst.msk [vmem:[#allocation2 + $0x59] sm:$0x1] %vm411, 0.0
      %434 = vst.msk [vmem:[#allocation2 + $0x71] sm:$0x1] %vm411, 0.0
      %435 = vst.msk [vmem:[#allocation2 + $0x89] sm:$0x1] %vm411, 0.0
      %436 = vst.msk [vmem:[#allocation2 + $0xa1] sm:$0x1] %vm411, 0.0
      %437 = vst.msk [vmem:[#allocation2 + $0xb9] sm:$0x1] %vm411, 0.0
      %438 = vst.msk [vmem:[#allocation2 + $0xd1] sm:$0x1] %vm411, 0.0
      %439 = vst.msk [vmem:[#allocation2 + $0xe9] sm:$0x1] %vm411, 0.0
      %440 = vst.msk [vmem:[#allocation2 + $0x101] sm:$0x1] %vm411, 0.0
      %441 = vst.msk [vmem:[#allocation2 + $0x119] sm:$0x1] %vm411, 0.0
      %442 = vst.msk [vmem:[#allocation2 + $0x131] sm:$0x1] %vm411, 0.0
      %443 = vst.msk [vmem:[#allocation2 + $0x149] sm:$0x1] %vm411, 0.0
      %444 = vst.msk [vmem:[#allocation2 + $0x161] sm:$0x1] %vm411, 0.0
      %445 = vst.msk [vmem:[#allocation2 + $0x179] sm:$0x1] %vm411, 0.0
      %446 = vst.msk [vmem:[#allocation2 + $0x191] sm:$0x1] %vm411, 0.0
      %447 = vst.msk [vmem:[#allocation2 + $0x1a9] sm:$0x1] %vm411, 0.0
      %vm448 = vcmask 64512
      %449 = vst.msk [vmem:[#allocation4] sm:$0xff] %vm448, 0.0
      %450 = vst.msk [vmem:[#allocation4 + $0x8] sm:$0xff] %vm448, 0.0
      %vm451 = vcmask 58368
      %452 = vst.msk [vmem:[#allocation4 + $0x10] sm:$0x3] %vm451, 0.0
      %s453 = scalar_lea.vmem [#allocation4], 408
      %454 = vst.msk [vmem:[%s453] sm:$0xff] %vm448, 0.0
      %455 = vst.msk [vmem:[%s453 + $0x8] sm:$0xff] %vm448, 0.0
      %456 = vst.msk [vmem:[%s453 + $0x10] sm:$0x3] %vm451, 0.0
      %vm457 = vcmask 57344
      %458 = vst.msk [vmem:[#allocation4] sm:$0x1] %vm457, 0.0
      %459 = vst.msk [vmem:[#allocation4 + $0x18] sm:$0x1] %vm457, 0.0
      %460 = vst.msk [vmem:[#allocation4 + $0x30] sm:$0x1] %vm457, 0.0
      %461 = vst.msk [vmem:[#allocation4 + $0x48] sm:$0x1] %vm457, 0.0
      %462 = vst.msk [vmem:[#allocation4 + $0x60] sm:$0x1] %vm457, 0.0
      %463 = vst.msk [vmem:[#allocation4 + $0x78] sm:$0x1] %vm457, 0.0
      %464 = vst.msk [vmem:[#allocation4 + $0x90] sm:$0x1] %vm457, 0.0
      %465 = vst.msk [vmem:[#allocation4 + $0xa8] sm:$0x1] %vm457, 0.0
      %466 = vst.msk [vmem:[#allocation4 + $0xc0] sm:$0x1] %vm457, 0.0
      %467 = vst.msk [vmem:[#allocation4 + $0xd8] sm:$0x1] %vm457, 0.0
      %468 = vst.msk [vmem:[#allocation4 + $0xf0] sm:$0x1] %vm457, 0.0
      %469 = vst.msk [vmem:[#allocation4 + $0x108] sm:$0x1] %vm457, 0.0
      %470 = vst.msk [vmem:[#allocation4 + $0x120] sm:$0x1] %vm457, 0.0
      %471 = vst.msk [vmem:[#allocation4 + $0x138] sm:$0x1] %vm457, 0.0
      %472 = vst.msk [vmem:[#allocation4 + $0x150] sm:$0x1] %vm457, 0.0
      %473 = vst.msk [vmem:[#allocation4 + $0x168] sm:$0x1] %vm457, 0.0
      %474 = vst.msk [vmem:[#allocation4 + $0x180] sm:$0x1] %vm457, 0.0
      %475 = vst.msk [vmem:[#allocation4 + $0x198] sm:$0x1] %vm457, 0.0
      %476 = vst.msk [vmem:[#allocation4 + $0x11] sm:$0x1] %vm457, 0.0
      %477 = vst.msk [vmem:[#allocation4 + $0x29] sm:$0x1] %vm457, 0.0
      %478 = vst.msk [vmem:[#allocation4 + $0x41] sm:$0x1] %vm457, 0.0
      %479 = vst.msk [vmem:[#allocation4 + $0x59] sm:$0x1] %vm457, 0.0
      %480 = vst.msk [vmem:[#allocation4 + $0x71] sm:$0x1] %vm457, 0.0
      %481 = vst.msk [vmem:[#allocation4 + $0x89] sm:$0x1] %vm457, 0.0
      %482 = vst.msk [vmem:[#allocation4 + $0xa1] sm:$0x1] %vm457, 0.0
      %483 = vst.msk [vmem:[#allocation4 + $0xb9] sm:$0x1] %vm457, 0.0
      %484 = vst.msk [vmem:[#allocation4 + $0xd1] sm:$0x1] %vm457, 0.0
      %485 = vst.msk [vmem:[#allocation4 + $0xe9] sm:$0x1] %vm457, 0.0
      %486 = vst.msk [vmem:[#allocation4 + $0x101] sm:$0x1] %vm457, 0.0
      %487 = vst.msk [vmem:[#allocation4 + $0x119] sm:$0x1] %vm457, 0.0
      %488 = vst.msk [vmem:[#allocation4 + $0x131] sm:$0x1] %vm457, 0.0
      %489 = vst.msk [vmem:[#allocation4 + $0x149] sm:$0x1] %vm457, 0.0
      %490 = vst.msk [vmem:[#allocation4 + $0x161] sm:$0x1] %vm457, 0.0
      %491 = vst.msk [vmem:[#allocation4 + $0x179] sm:$0x1] %vm457, 0.0
      %492 = vst.msk [vmem:[#allocation4 + $0x191] sm:$0x1] %vm457, 0.0
      %493 = vst.msk [vmem:[#allocation4 + $0x1a9] sm:$0x1] %vm457, 0.0
      %v494 = vld [vmem:[%s392] sm:$0xff]
      %v495 = vld [vmem:[%s392 + $0x8] sm:$0xff]
      %v496 = vld [vmem:[%s392 + $0x10] sm:$0xff]
      %v497 = vld [vmem:[%s392 + $0x18] sm:$0xff]
      %v498 = vld [vmem:[%s392 + $0x20] sm:$0xff]
      %v499 = vld [vmem:[%s392 + $0x28] sm:$0xff]
      %v500 = vld [vmem:[%s392 + $0x30] sm:$0xff]
      %v501 = vld [vmem:[%s392 + $0x38] sm:$0xff]
      %v502 = vld [vmem:[%s392 + $0x40] sm:$0xff]
      %v503 = vld [vmem:[%s392 + $0x48] sm:$0xff]
      %v504 = vld [vmem:[%s392 + $0x50] sm:$0xff]
      %v505 = vld [vmem:[%s392 + $0x58] sm:$0xff]
      %v506 = vld [vmem:[%s392 + $0x60] sm:$0xff]
      %v507 = vld [vmem:[%s392 + $0x68] sm:$0xff]
      %v508 = vld [vmem:[%s392 + $0x70] sm:$0xff]
      %v509 = vld [vmem:[%s392 + $0x78] sm:$0xff]
      %v510 = vld [vmem:[%s392 + $0x80] sm:$0xff]
      %v511 = vld [vmem:[%s392 + $0x88] sm:$0xff]
      %v512 = vld [vmem:[%s392 + $0x90] sm:$0xff]
      %v513 = vld [vmem:[%s392 + $0x98] sm:$0xff]
      %v514 = vld [vmem:[%s392 + $0xa0] sm:$0xff]
      %v515 = vld [vmem:[%s392 + $0xa8] sm:$0xff]
      %v516 = vld [vmem:[%s392 + $0xb0] sm:$0xff]
      %v517 = vld [vmem:[%s392 + $0xb8] sm:$0xff]
      %v518 = vld [vmem:[%s392 + $0xc0] sm:$0xff]
      %v519 = vld [vmem:[%s392 + $0xc8] sm:$0xff]
      %v520 = vld [vmem:[%s392 + $0xd0] sm:$0xff]
      %v521 = vld [vmem:[%s392 + $0xd8] sm:$0xff]
      %v522 = vld [vmem:[%s392 + $0xe0] sm:$0xff]
      %v523 = vld [vmem:[%s392 + $0xe8] sm:$0xff]
      %v524 = vld [vmem:[%s392 + $0xf0] sm:$0xff]
      %v525 = vld [vmem:[%s392 + $0xf8] sm:$0xff]
      %v526 = vld [vmem:[%s1] sm:$0x1]
      %v528 = vlaneseq
      %v529 = vshrl.u32 %v528, 7
      %v530 = vsub.s32 0, %v529
      %v531 = vrot.slane %v526, %v530
      %v533 = vmul.f32 %v494, %v531
      %v534 = vmul.f32 %v495, %v531
      %v535 = vmul.f32 %v496, %v531
      %v536 = vmul.f32 %v497, %v531
      %v537 = vmul.f32 %v498, %v531
      %v538 = vmul.f32 %v499, %v531
      %v539 = vmul.f32 %v500, %v531
      %v540 = vmul.f32 %v501, %v531
      %v541 = vmul.f32 %v502, %v531
      %v542 = vmul.f32 %v503, %v531
      %v543 = vmul.f32 %v504, %v531
      %v544 = vmul.f32 %v505, %v531
      %v545 = vmul.f32 %v506, %v531
      %v546 = vmul.f32 %v507, %v531
      %v547 = vmul.f32 %v508, %v531
      %v548 = vmul.f32 %v509, %v531
      %v549 = vmul.f32 %v510, %v531
      %v550 = vmul.f32 %v511, %v531
      %v551 = vmul.f32 %v512, %v531
      %v552 = vmul.f32 %v513, %v531
      %v553 = vmul.f32 %v514, %v531
      %v554 = vmul.f32 %v515, %v531
      %v555 = vmul.f32 %v516, %v531
      %v556 = vmul.f32 %v517, %v531
      %v557 = vmul.f32 %v518, %v531
      %v558 = vmul.f32 %v519, %v531
      %v559 = vmul.f32 %v520, %v531
      %v560 = vmul.f32 %v521, %v531
      %v561 = vmul.f32 %v522, %v531
      %v562 = vmul.f32 %v523, %v531
      %v563 = vmul.f32 %v524, %v531
      %v564 = vmul.f32 %v525, %v531
      %v565 = vld [vmem:[%s2] sm:$0x1]
      %v567 = vlaneseq
      %v568 = vshrl.u32 %v567, 7
      %v569 = vsub.s32 0, %v568
      %v570 = vrot.slane %v565, %v569
      %v572 = vadd.f32 %v533, %v570
      %v573 = vadd.f32 %v534, %v570
      %v574 = vadd.f32 %v535, %v570
      %v575 = vadd.f32 %v536, %v570
      %v576 = vadd.f32 %v537, %v570
      %v577 = vadd.f32 %v538, %v570
      %v578 = vadd.f32 %v539, %v570
      %v579 = vadd.f32 %v540, %v570
      %v580 = vadd.f32 %v541, %v570
      %v581 = vadd.f32 %v542, %v570
      %v582 = vadd.f32 %v543, %v570
      %v583 = vadd.f32 %v544, %v570
      %v584 = vadd.f32 %v545, %v570
      %v585 = vadd.f32 %v546, %v570
      %v586 = vadd.f32 %v547, %v570
      %v587 = vadd.f32 %v548, %v570
      %v588 = vadd.f32 %v549, %v570
      %v589 = vadd.f32 %v550, %v570
      %v590 = vadd.f32 %v551, %v570
      %v591 = vadd.f32 %v552, %v570
      %v592 = vadd.f32 %v553, %v570
      %v593 = vadd.f32 %v554, %v570
      %v594 = vadd.f32 %v555, %v570
      %v595 = vadd.f32 %v556, %v570
      %v596 = vadd.f32 %v557, %v570
      %v597 = vadd.f32 %v558, %v570
      %v598 = vadd.f32 %v559, %v570
      %v599 = vadd.f32 %v560, %v570
      %v600 = vadd.f32 %v561, %v570
      %v601 = vadd.f32 %v562, %v570
      %v602 = vadd.f32 %v563, %v570
      %v603 = vadd.f32 %v564, %v570
      %v604 = vmax.f32 %v572, 0.0
      %v605 = vmax.f32 %v573, 0.0
      %v606 = vmax.f32 %v574, 0.0
      %v607 = vmax.f32 %v575, 0.0
      %v608 = vmax.f32 %v576, 0.0
      %v609 = vmax.f32 %v577, 0.0
      %v610 = vmax.f32 %v578, 0.0
      %v611 = vmax.f32 %v579, 0.0
      %v612 = vmax.f32 %v580, 0.0
      %v613 = vmax.f32 %v581, 0.0
      %v614 = vmax.f32 %v582, 0.0
      %v615 = vmax.f32 %v583, 0.0
      %v616 = vmax.f32 %v584, 0.0
      %v617 = vmax.f32 %v585, 0.0
      %v618 = vmax.f32 %v586, 0.0
      %v619 = vmax.f32 %v587, 0.0
      %v620 = vmax.f32 %v588, 0.0
      %v621 = vmax.f32 %v589, 0.0
      %v622 = vmax.f32 %v590, 0.0
      %v623 = vmax.f32 %v591, 0.0
      %v624 = vmax.f32 %v592, 0.0
      %v625 = vmax.f32 %v593, 0.0
      %v626 = vmax.f32 %v594, 0.0
      %v627 = vmax.f32 %v595, 0.0
      %v628 = vmax.f32 %v596, 0.0
      %v629 = vmax.f32 %v597, 0.0
      %v630 = vmax.f32 %v598, 0.0
      %v631 = vmax.f32 %v599, 0.0
      %v632 = vmax.f32 %v600, 0.0
      %v633 = vmax.f32 %v601, 0.0
      %v634 = vmax.f32 %v602, 0.0
      %v635 = vmax.f32 %v603, 0.0
      %s636 = scalar_lea.vmem [#allocation2], 24
      %637 = vst.msk [vmem:[%s636 + $0x1] sm:$0xff] %vm402, %v604
      %638 = vst.msk [vmem:[%s636 + $0x9] sm:$0xff] %vm402, %v605
      %639 = vst.msk [vmem:[%s636 + $0x19] sm:$0xff] %vm402, %v606
      %640 = vst.msk [vmem:[%s636 + $0x21] sm:$0xff] %vm402, %v607
      %641 = vst.msk [vmem:[%s636 + $0x31] sm:$0xff] %vm402, %v608
      %642 = vst.msk [vmem:[%s636 + $0x39] sm:$0xff] %vm402, %v609
      %643 = vst.msk [vmem:[%s636 + $0x49] sm:$0xff] %vm402, %v610
      %644 = vst.msk [vmem:[%s636 + $0x51] sm:$0xff] %vm402, %v611
      %645 = vst.msk [vmem:[%s636 + $0x61] sm:$0xff] %vm402, %v612
      %646 = vst.msk [vmem:[%s636 + $0x69] sm:$0xff] %vm402, %v613
      %647 = vst.msk [vmem:[%s636 + $0x79] sm:$0xff] %vm402, %v614
      %648 = vst.msk [vmem:[%s636 + $0x81] sm:$0xff] %vm402, %v615
      %649 = vst.msk [vmem:[%s636 + $0x91] sm:$0xff] %vm402, %v616
      %650 = vst.msk [vmem:[%s636 + $0x99] sm:$0xff] %vm402, %v617
      %651 = vst.msk [vmem:[%s636 + $0xa9] sm:$0xff] %vm402, %v618
      %652 = vst.msk [vmem:[%s636 + $0xb1] sm:$0xff] %vm402, %v619
      %653 = vst.msk [vmem:[%s636 + $0xc1] sm:$0xff] %vm402, %v620
      %654 = vst.msk [vmem:[%s636 + $0xc9] sm:$0xff] %vm402, %v621
      %655 = vst.msk [vmem:[%s636 + $0xd9] sm:$0xff] %vm402, %v622
      %656 = vst.msk [vmem:[%s636 + $0xe1] sm:$0xff] %vm402, %v623
      %657 = vst.msk [vmem:[%s636 + $0xf1] sm:$0xff] %vm402, %v624
      %658 = vst.msk [vmem:[%s636 + $0xf9] sm:$0xff] %vm402, %v625
      %659 = vst.msk [vmem:[%s636 + $0x109] sm:$0xff] %vm402, %v626
      %660 = vst.msk [vmem:[%s636 + $0x111] sm:$0xff] %vm402, %v627
      %661 = vst.msk [vmem:[%s636 + $0x121] sm:$0xff] %vm402, %v628
      %662 = vst.msk [vmem:[%s636 + $0x129] sm:$0xff] %vm402, %v629
      %663 = vst.msk [vmem:[%s636 + $0x139] sm:$0xff] %vm402, %v630
      %664 = vst.msk [vmem:[%s636 + $0x141] sm:$0xff] %vm402, %v631
      %665 = vst.msk [vmem:[%s636 + $0x151] sm:$0xff] %vm402, %v632
      %666 = vst.msk [vmem:[%s636 + $0x159] sm:$0xff] %vm402, %v633
      %667 = vst.msk [vmem:[%s636 + $0x169] sm:$0xff] %vm402, %v634
      %668 = vst.msk [vmem:[%s636 + $0x171] sm:$0xff] %vm402, %v635
      %v669 = vld [vmem:[#allocation2] sm:$0xff]
      %v670 = vld [vmem:[#allocation2 + $0x8] sm:$0xff]
      %v671 = vld [vmem:[#allocation2 + $0x18] sm:$0xff]
      %v672 = vld [vmem:[#allocation2 + $0x20] sm:$0xff]
      %v673 = vld [vmem:[#allocation2 + $0x30] sm:$0xff]
      %v674 = vld [vmem:[#allocation2 + $0x38] sm:$0xff]
      %v675 = vld [vmem:[#allocation2 + $0x48] sm:$0xff]
      %v676 = vld [vmem:[#allocation2 + $0x50] sm:$0xff]
      %v677 = vld [vmem:[#allocation2 + $0x60] sm:$0xff]
      %v678 = vld [vmem:[#allocation2 + $0x68] sm:$0xff]
      %v679 = vld [vmem:[#allocation2 + $0x78] sm:$0xff]
      %v680 = vld [vmem:[#allocation2 + $0x80] sm:$0xff]
      %v681 = vld [vmem:[#allocation2 + $0x90] sm:$0xff]
      %v682 = vld [vmem:[#allocation2 + $0x98] sm:$0xff]
      %v683 = vld [vmem:[#allocation2 + $0xa8] sm:$0xff]
      %v684 = vld [vmem:[#allocation2 + $0xb0] sm:$0xff]
      %v685 = vld [vmem:[#allocation2 + $0xc0] sm:$0xff]
      %v686 = vld [vmem:[#allocation2 + $0xc8] sm:$0xff]
      %v687 = vld [vmem:[#allocation2 + $0xd8] sm:$0xff]
      %v688 = vld [vmem:[#allocation2 + $0xe0] sm:$0xff]
      %v689 = vld [vmem:[#allocation2 + $0xf0] sm:$0xff]
      %v690 = vld [vmem:[#allocation2 + $0xf8] sm:$0xff]
      %v691 = vld [vmem:[#allocation2 + $0x108] sm:$0xff]
      %v692 = vld [vmem:[#allocation2 + $0x110] sm:$0xff]
      %v693 = vld [vmem:[#allocation2 + $0x120] sm:$0xff]
      %v694 = vld [vmem:[#allocation2 + $0x128] sm:$0xff]
      %v695 = vld [vmem:[#allocation2 + $0x138] sm:$0xff]
      %v696 = vld [vmem:[#allocation2 + $0x140] sm:$0xff]
      %v697 = vld [vmem:[#allocation2 + $0x150] sm:$0xff]
      %v698 = vld [vmem:[#allocation2 + $0x158] sm:$0xff]
      %v699 = vld [vmem:[#allocation2 + $0x168] sm:$0xff]
      %v700 = vld [vmem:[#allocation2 + $0x170] sm:$0xff]
      %v701 = vpack.c.bf16 %v670, %v669
      %v702 = vpack.c.bf16 %v672, %v671
      %v703 = vpack.c.bf16 %v674, %v673
      %v704 = vpack.c.bf16 %v676, %v675
      %v705 = vpack.c.bf16 %v678, %v677
      %v706 = vpack.c.bf16 %v680, %v679
      %v707 = vpack.c.bf16 %v682, %v681
      %v708 = vpack.c.bf16 %v684, %v683
      %v709 = vpack.c.bf16 %v686, %v685
      %v710 = vpack.c.bf16 %v688, %v687
      %v711 = vpack.c.bf16 %v690, %v689
      %v712 = vpack.c.bf16 %v692, %v691
      %v713 = vpack.c.bf16 %v694, %v693
      %v714 = vpack.c.bf16 %v696, %v695
      %v715 = vpack.c.bf16 %v698, %v697
      %v716 = vpack.c.bf16 %v700, %v699
      %717 = vst.msk [vmem:[#allocation3] sm:$0xff] %vm402, %v701
      %718 = vst.msk [vmem:[#allocation3 + $0x8] sm:$0xff] %vm402, %v702
      %719 = vst.msk [vmem:[#allocation3 + $0x10] sm:$0xff] %vm402, %v703
      %720 = vst.msk [vmem:[#allocation3 + $0x18] sm:$0xff] %vm402, %v704
      %721 = vst.msk [vmem:[#allocation3 + $0x20] sm:$0xff] %vm402, %v705
      %722 = vst.msk [vmem:[#allocation3 + $0x28] sm:$0xff] %vm402, %v706
      %723 = vst.msk [vmem:[#allocation3 + $0x30] sm:$0xff] %vm402, %v707
      %724 = vst.msk [vmem:[#allocation3 + $0x38] sm:$0xff] %vm402, %v708
      %725 = vst.msk [vmem:[#allocation3 + $0x40] sm:$0xff] %vm402, %v709
      %726 = vst.msk [vmem:[#allocation3 + $0x48] sm:$0xff] %vm402, %v710
      %727 = vst.msk [vmem:[#allocation3 + $0x50] sm:$0xff] %vm402, %v711
      %728 = vst.msk [vmem:[#allocation3 + $0x58] sm:$0xff] %vm402, %v712
      %729 = vst.msk [vmem:[#allocation3 + $0x60] sm:$0xff] %vm402, %v713
      %730 = vst.msk [vmem:[#allocation3 + $0x68] sm:$0xff] %vm402, %v714
      %731 = vst.msk [vmem:[#allocation3 + $0x70] sm:$0xff] %vm402, %v715
      %732 = vst.msk [vmem:[#allocation3 + $0x78] sm:$0xff] %vm402, %v716
      %v733 = vld [vmem:[#allocation2 + $0x1] sm:$0xff]
      %v734 = vld [vmem:[#allocation2 + $0x9] sm:$0xff]
      %v735 = vld [vmem:[#allocation2 + $0x19] sm:$0xff]
      %v736 = vld [vmem:[#allocation2 + $0x21] sm:$0xff]
      %v737 = vld [vmem:[#allocation2 + $0x31] sm:$0xff]
      %v738 = vld [vmem:[#allocation2 + $0x39] sm:$0xff]
      %v739 = vld [vmem:[#allocation2 + $0x49] sm:$0xff]
      %v740 = vld [vmem:[#allocation2 + $0x51] sm:$0xff]
      %v741 = vld [vmem:[#allocation2 + $0x61] sm:$0xff]
      %v742 = vld [vmem:[#allocation2 + $0x69] sm:$0xff]
      %v743 = vld [vmem:[#allocation2 + $0x79] sm:$0xff]
      %v744 = vld [vmem:[#allocation2 + $0x81] sm:$0xff]
      %v745 = vld [vmem:[#allocation2 + $0x91] sm:$0xff]
      %v746 = vld [vmem:[#allocation2 + $0x99] sm:$0xff]
      %v747 = vld [vmem:[#allocation2 + $0xa9] sm:$0xff]
      %v748 = vld [vmem:[#allocation2 + $0xb1] sm:$0xff]
      %v749 = vld [vmem:[#allocation2 + $0xc1] sm:$0xff]
      %v750 = vld [vmem:[#allocation2 + $0xc9] sm:$0xff]
      %v751 = vld [vmem:[#allocation2 + $0xd9] sm:$0xff]
      %v752 = vld [vmem:[#allocation2 + $0xe1] sm:$0xff]
      %v753 = vld [vmem:[#allocation2 + $0xf1] sm:$0xff]
      %v754 = vld [vmem:[#allocation2 + $0xf9] sm:$0xff]
      %v755 = vld [vmem:[#allocation2 + $0x109] sm:$0xff]
      %v756 = vld [vmem:[#allocation2 + $0x111] sm:$0xff]
      %v757 = vld [vmem:[#allocation2 + $0x121] sm:$0xff]
      %v758 = vld [vmem:[#allocation2 + $0x129] sm:$0xff]
      %v759 = vld [vmem:[#allocation2 + $0x139] sm:$0xff]
      %v760 = vld [vmem:[#allocation2 + $0x141] sm:$0xff]
      %v761 = vld [vmem:[#allocation2 + $0x151] sm:$0xff]
      %v762 = vld [vmem:[#allocation2 + $0x159] sm:$0xff]
      %v763 = vld [vmem:[#allocation2 + $0x169] sm:$0xff]
      %v764 = vld [vmem:[#allocation2 + $0x171] sm:$0xff]
      %v765 = vpack.c.bf16 %v734, %v733
      %v766 = vpack.c.bf16 %v736, %v735
      %v767 = vpack.c.bf16 %v738, %v737
      %v768 = vpack.c.bf16 %v740, %v739
      %v769 = vpack.c.bf16 %v742, %v741
      %v770 = vpack.c.bf16 %v744, %v743
      %v771 = vpack.c.bf16 %v746, %v745
      %v772 = vpack.c.bf16 %v748, %v747
      %v773 = vpack.c.bf16 %v750, %v749
      %v774 = vpack.c.bf16 %v752, %v751
      %v775 = vpack.c.bf16 %v754, %v753
      %v776 = vpack.c.bf16 %v756, %v755
      %v777 = vpack.c.bf16 %v758, %v757
      %v778 = vpack.c.bf16 %v760, %v759
      %v779 = vpack.c.bf16 %v762, %v761
      %v780 = vpack.c.bf16 %v764, %v763
      %797 = vrot.lane.b32.xlu0 %v765, 4
      %v798 = vpop.permute.xlu0 %797
      %799 = vrot.lane.b32.xlu0 %v766, 4
      %v800 = vpop.permute.xlu0 %799
      %801 = vrot.lane.b32.xlu0 %v767, 4
      %v802 = vpop.permute.xlu0 %801
      %803 = vrot.lane.b32.xlu0 %v768, 4
      %v804 = vpop.permute.xlu0 %803
      %805 = vrot.lane.b32.xlu0 %v769, 4
      %v806 = vpop.permute.xlu0 %805
      %807 = vrot.lane.b32.xlu0 %v770, 4
      %v808 = vpop.permute.xlu0 %807
      %809 = vrot.lane.b32.xlu0 %v771, 4
      %v810 = vpop.permute.xlu0 %809
      %811 = vrot.lane.b32.xlu0 %v772, 4
      %v812 = vpop.permute.xlu0 %811
      %813 = vrot.lane.b32.xlu0 %v773, 4
      %v814 = vpop.permute.xlu0 %813
      %815 = vrot.lane.b32.xlu0 %v774, 4
      %v816 = vpop.permute.xlu0 %815
      %817 = vrot.lane.b32.xlu0 %v775, 4
      %v818 = vpop.permute.xlu0 %817
      %819 = vrot.lane.b32.xlu0 %v776, 4
      %v820 = vpop.permute.xlu0 %819
      %821 = vrot.lane.b32.xlu0 %v777, 4
      %v822 = vpop.permute.xlu0 %821
      %823 = vrot.lane.b32.xlu0 %v778, 4
      %v824 = vpop.permute.xlu0 %823
      %825 = vrot.lane.b32.xlu0 %v779, 4
      %v826 = vpop.permute.xlu0 %825
      %827 = vrot.lane.b32.xlu0 %v780, 4
      %v828 = vpop.permute.xlu0 %827
      %vm845 = vcmask 64544
      %846 = vst.msk [vmem:[#allocation3] sm:$0xff] %vm845, %v798
      %847 = vst.msk [vmem:[#allocation3 + $0x8] sm:$0xff] %vm845, %v800
      %848 = vst.msk [vmem:[#allocation3 + $0x10] sm:$0xff] %vm845, %v802
      %849 = vst.msk [vmem:[#allocation3 + $0x18] sm:$0xff] %vm845, %v804
      %850 = vst.msk [vmem:[#allocation3 + $0x20] sm:$0xff] %vm845, %v806
      %851 = vst.msk [vmem:[#allocation3 + $0x28] sm:$0xff] %vm845, %v808
      %852 = vst.msk [vmem:[#allocation3 + $0x30] sm:$0xff] %vm845, %v810
      %853 = vst.msk [vmem:[#allocation3 + $0x38] sm:$0xff] %vm845, %v812
      %854 = vst.msk [vmem:[#allocation3 + $0x40] sm:$0xff] %vm845, %v814
      %855 = vst.msk [vmem:[#allocation3 + $0x48] sm:$0xff] %vm845, %v816
      %856 = vst.msk [vmem:[#allocation3 + $0x50] sm:$0xff] %vm845, %v818
      %857 = vst.msk [vmem:[#allocation3 + $0x58] sm:$0xff] %vm845, %v820
      %858 = vst.msk [vmem:[#allocation3 + $0x60] sm:$0xff] %vm845, %v822
      %859 = vst.msk [vmem:[#allocation3 + $0x68] sm:$0xff] %vm845, %v824
      %860 = vst.msk [vmem:[#allocation3 + $0x70] sm:$0xff] %vm845, %v826
      %861 = vst.msk [vmem:[#allocation3 + $0x78] sm:$0xff] %vm845, %v828
      %v862 = vld [vmem:[#allocation2 + $0x2] sm:$0xff]
      %v863 = vld [vmem:[#allocation2 + $0xa] sm:$0xff]
      %v864 = vld [vmem:[#allocation2 + $0x1a] sm:$0xff]
      %v865 = vld [vmem:[#allocation2 + $0x22] sm:$0xff]
      %v866 = vld [vmem:[#allocation2 + $0x32] sm:$0xff]
      %v867 = vld [vmem:[#allocation2 + $0x3a] sm:$0xff]
      %v868 = vld [vmem:[#allocation2 + $0x4a] sm:$0xff]
      %v869 = vld [vmem:[#allocation2 + $0x52] sm:$0xff]
      %v870 = vld [vmem:[#allocation2 + $0x62] sm:$0xff]
      %v871 = vld [vmem:[#allocation2 + $0x6a] sm:$0xff]
      %v872 = vld [vmem:[#allocation2 + $0x7a] sm:$0xff]
      %v873 = vld [vmem:[#allocation2 + $0x82] sm:$0xff]
      %v874 = vld [vmem:[#allocation2 + $0x92] sm:$0xff]
      %v875 = vld [vmem:[#allocation2 + $0x9a] sm:$0xff]
      %v876 = vld [vmem:[#allocation2 + $0xaa] sm:$0xff]
      %v877 = vld [vmem:[#allocation2 + $0xb2] sm:$0xff]
      %v878 = vld [vmem:[#allocation2 + $0xc2] sm:$0xff]
      %v879 = vld [vmem:[#allocation2 + $0xca] sm:$0xff]
      %v880 = vld [vmem:[#allocation2 + $0xda] sm:$0xff]
      %v881 = vld [vmem:[#allocation2 + $0xe2] sm:$0xff]
      %v882 = vld [vmem:[#allocation2 + $0xf2] sm:$0xff]
      %v883 = vld [vmem:[#allocation2 + $0xfa] sm:$0xff]
      %v884 = vld [vmem:[#allocation2 + $0x10a] sm:$0xff]
      %v885 = vld [vmem:[#allocation2 + $0x112] sm:$0xff]
      %v886 = vld [vmem:[#allocation2 + $0x122] sm:$0xff]
      %v887 = vld [vmem:[#allocation2 + $0x12a] sm:$0xff]
      %v888 = vld [vmem:[#allocation2 + $0x13a] sm:$0xff]
      %v889 = vld [vmem:[#allocation2 + $0x142] sm:$0xff]
      %v890 = vld [vmem:[#allocation2 + $0x152] sm:$0xff]
      %v891 = vld [vmem:[#allocation2 + $0x15a] sm:$0xff]
      %v892 = vld [vmem:[#allocation2 + $0x16a] sm:$0xff]
      %v893 = vld [vmem:[#allocation2 + $0x172] sm:$0xff]
      %v894 = vpack.c.bf16 %v863, %v862
      %v895 = vpack.c.bf16 %v865, %v864
      %v896 = vpack.c.bf16 %v867, %v866
      %v897 = vpack.c.bf16 %v869, %v868
      %v898 = vpack.c.bf16 %v871, %v870
      %v899 = vpack.c.bf16 %v873, %v872
      %v900 = vpack.c.bf16 %v875, %v874
      %v901 = vpack.c.bf16 %v877, %v876
      %v902 = vpack.c.bf16 %v879, %v878
      %v903 = vpack.c.bf16 %v881, %v880
      %v904 = vpack.c.bf16 %v883, %v882
      %v905 = vpack.c.bf16 %v885, %v884
      %v906 = vpack.c.bf16 %v887, %v886
      %v907 = vpack.c.bf16 %v889, %v888
      %v908 = vpack.c.bf16 %v891, %v890
      %v909 = vpack.c.bf16 %v893, %v892
      %926 = vrot.lane.b32.xlu0 %v894, 8
      %v927 = vpop.permute.xlu0 %926
      %928 = vrot.lane.b32.xlu0 %v895, 8
      %v929 = vpop.permute.xlu0 %928
      %930 = vrot.lane.b32.xlu0 %v896, 8
      %v931 = vpop.permute.xlu0 %930
      %932 = vrot.lane.b32.xlu0 %v897, 8
      %v933 = vpop.permute.xlu0 %932
      %934 = vrot.lane.b32.xlu0 %v898, 8
      %v935 = vpop.permute.xlu0 %934
      %936 = vrot.lane.b32.xlu0 %v899, 8
      %v937 = vpop.permute.xlu0 %936
      %938 = vrot.lane.b32.xlu0 %v900, 8
      %v939 = vpop.permute.xlu0 %938
      %940 = vrot.lane.b32.xlu0 %v901, 8
      %v941 = vpop.permute.xlu0 %940
      %942 = vrot.lane.b32.xlu0 %v902, 8
      %v943 = vpop.permute.xlu0 %942
      %944 = vrot.lane.b32.xlu0 %v903, 8
      %v945 = vpop.permute.xlu0 %944
      %946 = vrot.lane.b32.xlu0 %v904, 8
      %v947 = vpop.permute.xlu0 %946
      %948 = vrot.lane.b32.xlu0 %v905, 8
      %v949 = vpop.permute.xlu0 %948
      %950 = vrot.lane.b32.xlu0 %v906, 8
      %v951 = vpop.permute.xlu0 %950
      %952 = vrot.lane.b32.xlu0 %v907, 8
      %v953 = vpop.permute.xlu0 %952
      %954 = vrot.lane.b32.xlu0 %v908, 8
      %v955 = vpop.permute.xlu0 %954
      %956 = vrot.lane.b32.xlu0 %v909, 8
      %v957 = vpop.permute.xlu0 %956
      %vm974 = vcmask 97344
      %975 = vst.msk [vmem:[#allocation3] sm:$0xff] %vm974, %v927
      %976 = vst.msk [vmem:[#allocation3 + $0x8] sm:$0xff] %vm974, %v929
      %977 = vst.msk [vmem:[#allocation3 + $0x10] sm:$0xff] %vm974, %v931
      %978 = vst.msk [vmem:[#allocation3 + $0x18] sm:$0xff] %vm974, %v933
      %979 = vst.msk [vmem:[#allocation3 + $0x20] sm:$0xff] %vm974, %v935
      %980 = vst.msk [vmem:[#allocation3 + $0x28] sm:$0xff] %vm974, %v937
      %981 = vst.msk [vmem:[#allocation3 + $0x30] sm:$0xff] %vm974, %v939
      %982 = vst.msk [vmem:[#allocation3 + $0x38] sm:$0xff] %vm974, %v941
      %983 = vst.msk [vmem:[#allocation3 + $0x40] sm:$0xff] %vm974, %v943
      %984 = vst.msk [vmem:[#allocation3 + $0x48] sm:$0xff] %vm974, %v945
      %985 = vst.msk [vmem:[#allocation3 + $0x50] sm:$0xff] %vm974, %v947
      %986 = vst.msk [vmem:[#allocation3 + $0x58] sm:$0xff] %vm974, %v949
      %987 = vst.msk [vmem:[#allocation3 + $0x60] sm:$0xff] %vm974, %v951
      %988 = vst.msk [vmem:[#allocation3 + $0x68] sm:$0xff] %vm974, %v953
      %989 = vst.msk [vmem:[#allocation3 + $0x70] sm:$0xff] %vm974, %v955
      %990 = vst.msk [vmem:[#allocation3 + $0x78] sm:$0xff] %vm974, %v957
      %v991 = vld [vmem:[%s636] sm:$0xff]
      %v992 = vld [vmem:[%s636 + $0x8] sm:$0xff]
      %v993 = vld [vmem:[%s636 + $0x18] sm:$0xff]
      %v994 = vld [vmem:[%s636 + $0x20] sm:$0xff]
      %v995 = vld [vmem:[%s636 + $0x30] sm:$0xff]
      %v996 = vld [vmem:[%s636 + $0x38] sm:$0xff]
      %v997 = vld [vmem:[%s636 + $0x48] sm:$0xff]
      %v998 = vld [vmem:[%s636 + $0x50] sm:$0xff]
      %v999 = vld [vmem:[%s636 + $0x60] sm:$0xff]
      %v1000 = vld [vmem:[%s636 + $0x68] sm:$0xff]
      %v1001 = vld [vmem:[%s636 + $0x78] sm:$0xff]
      %v1002 = vld [vmem:[%s636 + $0x80] sm:$0xff]
      %v1003 = vld [vmem:[%s636 + $0x90] sm:$0xff]
      %v1004 = vld [vmem:[%s636 + $0x98] sm:$0xff]
      %v1005 = vld [vmem:[%s636 + $0xa8] sm:$0xff]
      %v1006 = vld [vmem:[%s636 + $0xb0] sm:$0xff]
      %v1007 = vld [vmem:[%s636 + $0xc0] sm:$0xff]
      %v1008 = vld [vmem:[%s636 + $0xc8] sm:$0xff]
      %v1009 = vld [vmem:[%s636 + $0xd8] sm:$0xff]
      %v1010 = vld [vmem:[%s636 + $0xe0] sm:$0xff]
      %v1011 = vld [vmem:[%s636 + $0xf0] sm:$0xff]
      %v1012 = vld [vmem:[%s636 + $0xf8] sm:$0xff]
      %v1013 = vld [vmem:[%s636 + $0x108] sm:$0xff]
      %v1014 = vld [vmem:[%s636 + $0x110] sm:$0xff]
      %v1015 = vld [vmem:[%s636 + $0x120] sm:$0xff]
      %v1016 = vld [vmem:[%s636 + $0x128] sm:$0xff]
      %v1017 = vld [vmem:[%s636 + $0x138] sm:$0xff]
      %v1018 = vld [vmem:[%s636 + $0x140] sm:$0xff]
      %v1019 = vld [vmem:[%s636 + $0x150] sm:$0xff]
      %v1020 = vld [vmem:[%s636 + $0x158] sm:$0xff]
      %v1021 = vld [vmem:[%s636 + $0x168] sm:$0xff]
      %v1022 = vld [vmem:[%s636 + $0x170] sm:$0xff]
      %v1023 = vpack.c.bf16 %v992, %v991
      %v1024 = vpack.c.bf16 %v994, %v993
      %v1025 = vpack.c.bf16 %v996, %v995
      %v1026 = vpack.c.bf16 %v998, %v997
      %v1027 = vpack.c.bf16 %v1000, %v999
      %v1028 = vpack.c.bf16 %v1002, %v1001
      %v1029 = vpack.c.bf16 %v1004, %v1003
      %v1030 = vpack.c.bf16 %v1006, %v1005
      %v1031 = vpack.c.bf16 %v1008, %v1007
      %v1032 = vpack.c.bf16 %v1010, %v1009
      %v1033 = vpack.c.bf16 %v1012, %v1011
      %v1034 = vpack.c.bf16 %v1014, %v1013
      %v1035 = vpack.c.bf16 %v1016, %v1015
      %v1036 = vpack.c.bf16 %v1018, %v1017
      %v1037 = vpack.c.bf16 %v1020, %v1019
      %v1038 = vpack.c.bf16 %v1022, %v1021
      %1055 = vrot.lane.b32.xlu0 %v1023, 12
      %v1056 = vpop.permute.xlu0 %1055
      %1057 = vrot.lane.b32.xlu0 %v1024, 12
      %v1058 = vpop.permute.xlu0 %1057
      %1059 = vrot.lane.b32.xlu0 %v1025, 12
      %v1060 = vpop.permute.xlu0 %1059
      %1061 = vrot.lane.b32.xlu0 %v1026, 12
      %v1062 = vpop.permute.xlu0 %1061
      %1063 = vrot.lane.b32.xlu0 %v1027, 12
      %v1064 = vpop.permute.xlu0 %1063
      %1065 = vrot.lane.b32.xlu0 %v1028, 12
      %v1066 = vpop.permute.xlu0 %1065
      %1067 = vrot.lane.b32.xlu0 %v1029, 12
      %v1068 = vpop.permute.xlu0 %1067
      %1069 = vrot.lane.b32.xlu0 %v1030, 12
      %v1070 = vpop.permute.xlu0 %1069
      %1071 = vrot.lane.b32.xlu0 %v1031, 12
      %v1072 = vpop.permute.xlu0 %1071
      %1073 = vrot.lane.b32.xlu0 %v1032, 12
      %v1074 = vpop.permute.xlu0 %1073
      %1075 = vrot.lane.b32.xlu0 %v1033, 12
      %v1076 = vpop.permute.xlu0 %1075
      %1077 = vrot.lane.b32.xlu0 %v1034, 12
      %v1078 = vpop.permute.xlu0 %1077
      %1079 = vrot.lane.b32.xlu0 %v1035, 12
      %v1080 = vpop.permute.xlu0 %1079
      %1081 = vrot.lane.b32.xlu0 %v1036, 12
      %v1082 = vpop.permute.xlu0 %1081
      %1083 = vrot.lane.b32.xlu0 %v1037, 12
      %v1084 = vpop.permute.xlu0 %1083
      %1085 = vrot.lane.b32.xlu0 %v1038, 12
      %v1086 = vpop.permute.xlu0 %1085
      %vm1103 = vcmask 130144
      %1104 = vst.msk [vmem:[#allocation3] sm:$0xff] %vm1103, %v1056
      %1105 = vst.msk [vmem:[#allocation3 + $0x8] sm:$0xff] %vm1103, %v1058
      %1106 = vst.msk [vmem:[#allocation3 + $0x10] sm:$0xff] %vm1103, %v1060
      %1107 = vst.msk [vmem:[#allocation3 + $0x18] sm:$0xff] %vm1103, %v1062
      %1108 = vst.msk [vmem:[#allocation3 + $0x20] sm:$0xff] %vm1103, %v1064
      %1109 = vst.msk [vmem:[#allocation3 + $0x28] sm:$0xff] %vm1103, %v1066
      %1110 = vst.msk [vmem:[#allocation3 + $0x30] sm:$0xff] %vm1103, %v1068
      %1111 = vst.msk [vmem:[#allocation3 + $0x38] sm:$0xff] %vm1103, %v1070
      %1112 = vst.msk [vmem:[#allocation3 + $0x40] sm:$0xff] %vm1103, %v1072
      %1113 = vst.msk [vmem:[#allocation3 + $0x48] sm:$0xff] %vm1103, %v1074
      %1114 = vst.msk [vmem:[#allocation3 + $0x50] sm:$0xff] %vm1103, %v1076
      %1115 = vst.msk [vmem:[#allocation3 + $0x58] sm:$0xff] %vm1103, %v1078
      %1116 = vst.msk [vmem:[#allocation3 + $0x60] sm:$0xff] %vm1103, %v1080
      %1117 = vst.msk [vmem:[#allocation3 + $0x68] sm:$0xff] %vm1103, %v1082
      %1118 = vst.msk [vmem:[#allocation3 + $0x70] sm:$0xff] %vm1103, %v1084
      %1119 = vst.msk [vmem:[#allocation3 + $0x78] sm:$0xff] %vm1103, %v1086
      %v1120 = vld [vmem:[%s636 + $0x1] sm:$0xff]
      %v1121 = vld [vmem:[%s636 + $0x9] sm:$0xff]
      %v1122 = vld [vmem:[%s636 + $0x19] sm:$0xff]
      %v1123 = vld [vmem:[%s636 + $0x21] sm:$0xff]
      %v1124 = vld [vmem:[%s636 + $0x31] sm:$0xff]
      %v1125 = vld [vmem:[%s636 + $0x39] sm:$0xff]
      %v1126 = vld [vmem:[%s636 + $0x49] sm:$0xff]
      %v1127 = vld [vmem:[%s636 + $0x51] sm:$0xff]
      %v1128 = vld [vmem:[%s636 + $0x61] sm:$0xff]
      %v1129 = vld [vmem:[%s636 + $0x69] sm:$0xff]
      %v1130 = vld [vmem:[%s636 + $0x79] sm:$0xff]
      %v1131 = vld [vmem:[%s636 + $0x81] sm:$0xff]
      %v1132 = vld [vmem:[%s636 + $0x91] sm:$0xff]
      %v1133 = vld [vmem:[%s636 + $0x99] sm:$0xff]
      %v1134 = vld [vmem:[%s636 + $0xa9] sm:$0xff]
      %v1135 = vld [vmem:[%s636 + $0xb1] sm:$0xff]
      %v1136 = vld [vmem:[%s636 + $0xc1] sm:$0xff]
      %v1137 = vld [vmem:[%s636 + $0xc9] sm:$0xff]
      %v1138 = vld [vmem:[%s636 + $0xd9] sm:$0xff]
      %v1139 = vld [vmem:[%s636 + $0xe1] sm:$0xff]
      %v1140 = vld [vmem:[%s636 + $0xf1] sm:$0xff]
      %v1141 = vld [vmem:[%s636 + $0xf9] sm:$0xff]
      %v1142 = vld [vmem:[%s636 + $0x109] sm:$0xff]
      %v1143 = vld [vmem:[%s636 + $0x111] sm:$0xff]
      %v1144 = vld [vmem:[%s636 + $0x121] sm:$0xff]
      %v1145 = vld [vmem:[%s636 + $0x129] sm:$0xff]
      %v1146 = vld [vmem:[%s636 + $0x139] sm:$0xff]
      %v1147 = vld [vmem:[%s636 + $0x141] sm:$0xff]
      %v1148 = vld [vmem:[%s636 + $0x151] sm:$0xff]
      %v1149 = vld [vmem:[%s636 + $0x159] sm:$0xff]
      %v1150 = vld [vmem:[%s636 + $0x169] sm:$0xff]
      %v1151 = vld [vmem:[%s636 + $0x171] sm:$0xff]
      %v1152 = vpack.c.bf16 %v1121, %v1120
      %v1153 = vpack.c.bf16 %v1123, %v1122
      %v1154 = vpack.c.bf16 %v1125, %v1124
      %v1155 = vpack.c.bf16 %v1127, %v1126
      %v1156 = vpack.c.bf16 %v1129, %v1128
      %v1157 = vpack.c.bf16 %v1131, %v1130
      %v1158 = vpack.c.bf16 %v1133, %v1132
      %v1159 = vpack.c.bf16 %v1135, %v1134
      %v1160 = vpack.c.bf16 %v1137, %v1136
      %v1161 = vpack.c.bf16 %v1139, %v1138
      %v1162 = vpack.c.bf16 %v1141, %v1140
      %v1163 = vpack.c.bf16 %v1143, %v1142
      %v1164 = vpack.c.bf16 %v1145, %v1144
      %v1165 = vpack.c.bf16 %v1147, %v1146
      %v1166 = vpack.c.bf16 %v1149, %v1148
      %v1167 = vpack.c.bf16 %v1151, %v1150
      %1184 = vrot.lane.b32.xlu0 %v1152, 16
      %v1185 = vpop.permute.xlu0 %1184
      %1186 = vrot.lane.b32.xlu0 %v1153, 16
      %v1187 = vpop.permute.xlu0 %1186
      %1188 = vrot.lane.b32.xlu0 %v1154, 16
      %v1189 = vpop.permute.xlu0 %1188
      %1190 = vrot.lane.b32.xlu0 %v1155, 16
      %v1191 = vpop.permute.xlu0 %1190
      %1192 = vrot.lane.b32.xlu0 %v1156, 16
      %v1193 = vpop.permute.xlu0 %1192
      %1194 = vrot.lane.b32.xlu0 %v1157, 16
      %v1195 = vpop.permute.xlu0 %1194
      %1196 = vrot.lane.b32.xlu0 %v1158, 16
      %v1197 = vpop.permute.xlu0 %1196
      %1198 = vrot.lane.b32.xlu0 %v1159, 16
      %v1199 = vpop.permute.xlu0 %1198
      %1200 = vrot.lane.b32.xlu0 %v1160, 16
      %v1201 = vpop.permute.xlu0 %1200
      %1202 = vrot.lane.b32.xlu0 %v1161, 16
      %v1203 = vpop.permute.xlu0 %1202
      %1204 = vrot.lane.b32.xlu0 %v1162, 16
      %v1205 = vpop.permute.xlu0 %1204
      %1206 = vrot.lane.b32.xlu0 %v1163, 16
      %v1207 = vpop.permute.xlu0 %1206
      %1208 = vrot.lane.b32.xlu0 %v1164, 16
      %v1209 = vpop.permute.xlu0 %1208
      %1210 = vrot.lane.b32.xlu0 %v1165, 16
      %v1211 = vpop.permute.xlu0 %1210
      %1212 = vrot.lane.b32.xlu0 %v1166, 16
      %v1213 = vpop.permute.xlu0 %1212
      %1214 = vrot.lane.b32.xlu0 %v1167, 16
      %v1215 = vpop.permute.xlu0 %1214
      %vm1232 = vcmask 162944
      %1233 = vst.msk [vmem:[#allocation3] sm:$0xff] %vm1232, %v1185
      %1234 = vst.msk [vmem:[#allocation3 + $0x8] sm:$0xff] %vm1232, %v1187
      %1235 = vst.msk [vmem:[#allocation3 + $0x10] sm:$0xff] %vm1232, %v1189
      %1236 = vst.msk [vmem:[#allocation3 + $0x18] sm:$0xff] %vm1232, %v1191
      %1237 = vst.msk [vmem:[#allocation3 + $0x20] sm:$0xff] %vm1232, %v1193
      %1238 = vst.msk [vmem:[#allocation3 + $0x28] sm:$0xff] %vm1232, %v1195
      %1239 = vst.msk [vmem:[#allocation3 + $0x30] sm:$0xff] %vm1232, %v1197
      %1240 = vst.msk [vmem:[#allocation3 + $0x38] sm:$0xff] %vm1232, %v1199
      %1241 = vst.msk [vmem:[#allocation3 + $0x40] sm:$0xff] %vm1232, %v1201
      %1242 = vst.msk [vmem:[#allocation3 + $0x48] sm:$0xff] %vm1232, %v1203
      %1243 = vst.msk [vmem:[#allocation3 + $0x50] sm:$0xff] %vm1232, %v1205
      %1244 = vst.msk [vmem:[#allocation3 + $0x58] sm:$0xff] %vm1232, %v1207
      %1245 = vst.msk [vmem:[#allocation3 + $0x60] sm:$0xff] %vm1232, %v1209
      %1246 = vst.msk [vmem:[#allocation3 + $0x68] sm:$0xff] %vm1232, %v1211
      %1247 = vst.msk [vmem:[#allocation3 + $0x70] sm:$0xff] %vm1232, %v1213
      %1248 = vst.msk [vmem:[#allocation3 + $0x78] sm:$0xff] %vm1232, %v1215
      %v1249 = vld [vmem:[%s636 + $0x2] sm:$0xff]
      %v1250 = vld [vmem:[%s636 + $0xa] sm:$0xff]
      %v1251 = vld [vmem:[%s636 + $0x1a] sm:$0xff]
      %v1252 = vld [vmem:[%s636 + $0x22] sm:$0xff]
      %v1253 = vld [vmem:[%s636 + $0x32] sm:$0xff]
      %v1254 = vld [vmem:[%s636 + $0x3a] sm:$0xff]
      %v1255 = vld [vmem:[%s636 + $0x4a] sm:$0xff]
      %v1256 = vld [vmem:[%s636 + $0x52] sm:$0xff]
      %v1257 = vld [vmem:[%s636 + $0x62] sm:$0xff]
      %v1258 = vld [vmem:[%s636 + $0x6a] sm:$0xff]
      %v1259 = vld [vmem:[%s636 + $0x7a] sm:$0xff]
      %v1260 = vld [vmem:[%s636 + $0x82] sm:$0xff]
      %v1261 = vld [vmem:[%s636 + $0x92] sm:$0xff]
      %v1262 = vld [vmem:[%s636 + $0x9a] sm:$0xff]
      %v1263 = vld [vmem:[%s636 + $0xaa] sm:$0xff]
      %v1264 = vld [vmem:[%s636 + $0xb2] sm:$0xff]
      %v1265 = vld [vmem:[%s636 + $0xc2] sm:$0xff]
      %v1266 = vld [vmem:[%s636 + $0xca] sm:$0xff]
      %v1267 = vld [vmem:[%s636 + $0xda] sm:$0xff]
      %v1268 = vld [vmem:[%s636 + $0xe2] sm:$0xff]
      %v1269 = vld [vmem:[%s636 + $0xf2] sm:$0xff]
      %v1270 = vld [vmem:[%s636 + $0xfa] sm:$0xff]
      %v1271 = vld [vmem:[%s636 + $0x10a] sm:$0xff]
      %v1272 = vld [vmem:[%s636 + $0x112] sm:$0xff]
      %v1273 = vld [vmem:[%s636 + $0x122] sm:$0xff]
      %v1274 = vld [vmem:[%s636 + $0x12a] sm:$0xff]
      %v1275 = vld [vmem:[%s636 + $0x13a] sm:$0xff]
      %v1276 = vld [vmem:[%s636 + $0x142] sm:$0xff]
      %v1277 = vld [vmem:[%s636 + $0x152] sm:$0xff]
      %v1278 = vld [vmem:[%s636 + $0x15a] sm:$0xff]
      %v1279 = vld [vmem:[%s636 + $0x16a] sm:$0xff]
      %v1280 = vld [vmem:[%s636 + $0x172] sm:$0xff]
      %v1281 = vpack.c.bf16 %v1250, %v1249
      %v1282 = vpack.c.bf16 %v1252, %v1251
      %v1283 = vpack.c.bf16 %v1254, %v1253
      %v1284 = vpack.c.bf16 %v1256, %v1255
      %v1285 = vpack.c.bf16 %v1258, %v1257
      %v1286 = vpack.c.bf16 %v1260, %v1259
      %v1287 = vpack.c.bf16 %v1262, %v1261
      %v1288 = vpack.c.bf16 %v1264, %v1263
      %v1289 = vpack.c.bf16 %v1266, %v1265
      %v1290 = vpack.c.bf16 %v1268, %v1267
      %v1291 = vpack.c.bf16 %v1270, %v1269
      %v1292 = vpack.c.bf16 %v1272, %v1271
      %v1293 = vpack.c.bf16 %v1274, %v1273
      %v1294 = vpack.c.bf16 %v1276, %v1275
      %v1295 = vpack.c.bf16 %v1278, %v1277
      %v1296 = vpack.c.bf16 %v1280, %v1279
      %1313 = vrot.lane.b32.xlu0 %v1281, 20
      %v1314 = vpop.permute.xlu0 %1313
      %1315 = vrot.lane.b32.xlu0 %v1282, 20
      %v1316 = vpop.permute.xlu0 %1315
      %1317 = vrot.lane.b32.xlu0 %v1283, 20
      %v1318 = vpop.permute.xlu0 %1317
      %1319 = vrot.lane.b32.xlu0 %v1284, 20
      %v1320 = vpop.permute.xlu0 %1319
      %1321 = vrot.lane.b32.xlu0 %v1285, 20
      %v1322 = vpop.permute.xlu0 %1321
      %1323 = vrot.lane.b32.xlu0 %v1286, 20
      %v1324 = vpop.permute.xlu0 %1323
      %1325 = vrot.lane.b32.xlu0 %v1287, 20
      %v1326 = vpop.permute.xlu0 %1325
      %1327 = vrot.lane.b32.xlu0 %v1288, 20
      %v1328 = vpop.permute.xlu0 %1327
      %1329 = vrot.lane.b32.xlu0 %v1289, 20
      %v1330 = vpop.permute.xlu0 %1329
      %1331 = vrot.lane.b32.xlu0 %v1290, 20
      %v1332 = vpop.permute.xlu0 %1331
      %1333 = vrot.lane.b32.xlu0 %v1291, 20
      %v1334 = vpop.permute.xlu0 %1333
      %1335 = vrot.lane.b32.xlu0 %v1292, 20
      %v1336 = vpop.permute.xlu0 %1335
      %1337 = vrot.lane.b32.xlu0 %v1293, 20
      %v1338 = vpop.permute.xlu0 %1337
      %1339 = vrot.lane.b32.xlu0 %v1294, 20
      %v1340 = vpop.permute.xlu0 %1339
      %1341 = vrot.lane.b32.xlu0 %v1295, 20
      %v1342 = vpop.permute.xlu0 %1341
      %1343 = vrot.lane.b32.xlu0 %v1296, 20
      %v1344 = vpop.permute.xlu0 %1343
      %vm1361 = vcmask 195744
      %1362 = vst.msk [vmem:[#allocation3] sm:$0xff] %vm1361, %v1314
      %1363 = vst.msk [vmem:[#allocation3 + $0x8] sm:$0xff] %vm1361, %v1316
      %1364 = vst.msk [vmem:[#allocation3 + $0x10] sm:$0xff] %vm1361, %v1318
      %1365 = vst.msk [vmem:[#allocation3 + $0x18] sm:$0xff] %vm1361, %v1320
      %1366 = vst.msk [vmem:[#allocation3 + $0x20] sm:$0xff] %vm1361, %v1322
      %1367 = vst.msk [vmem:[#allocation3 + $0x28] sm:$0xff] %vm1361, %v1324
      %1368 = vst.msk [vmem:[#allocation3 + $0x30] sm:$0xff] %vm1361, %v1326
      %1369 = vst.msk [vmem:[#allocation3 + $0x38] sm:$0xff] %vm1361, %v1328
      %1370 = vst.msk [vmem:[#allocation3 + $0x40] sm:$0xff] %vm1361, %v1330
      %1371 = vst.msk [vmem:[#allocation3 + $0x48] sm:$0xff] %vm1361, %v1332
      %1372 = vst.msk [vmem:[#allocation3 + $0x50] sm:$0xff] %vm1361, %v1334
      %1373 = vst.msk [vmem:[#allocation3 + $0x58] sm:$0xff] %vm1361, %v1336
      %1374 = vst.msk [vmem:[#allocation3 + $0x60] sm:$0xff] %vm1361, %v1338
      %1375 = vst.msk [vmem:[#allocation3 + $0x68] sm:$0xff] %vm1361, %v1340
      %1376 = vst.msk [vmem:[#allocation3 + $0x70] sm:$0xff] %vm1361, %v1342
      %1377 = vst.msk [vmem:[#allocation3 + $0x78] sm:$0xff] %vm1361, %v1344
      %s1378 = scalar_lea.vmem [#allocation2], 48
      %v1379 = vld [vmem:[%s1378] sm:$0xff]
      %v1380 = vld [vmem:[%s1378 + $0x8] sm:$0xff]
      %v1381 = vld [vmem:[%s1378 + $0x18] sm:$0xff]
      %v1382 = vld [vmem:[%s1378 + $0x20] sm:$0xff]
      %v1383 = vld [vmem:[%s1378 + $0x30] sm:$0xff]
      %v1384 = vld [vmem:[%s1378 + $0x38] sm:$0xff]
      %v1385 = vld [vmem:[%s1378 + $0x48] sm:$0xff]
      %v1386 = vld [vmem:[%s1378 + $0x50] sm:$0xff]
      %v1387 = vld [vmem:[%s1378 + $0x60] sm:$0xff]
      %v1388 = vld [vmem:[%s1378 + $0x68] sm:$0xff]
      %v1389 = vld [vmem:[%s1378 + $0x78] sm:$0xff]
      %v1390 = vld [vmem:[%s1378 + $0x80] sm:$0xff]
      %v1391 = vld [vmem:[%s1378 + $0x90] sm:$0xff]
      %v1392 = vld [vmem:[%s1378 + $0x98] sm:$0xff]
      %v1393 = vld [vmem:[%s1378 + $0xa8] sm:$0xff]
      %v1394 = vld [vmem:[%s1378 + $0xb0] sm:$0xff]
      %v1395 = vld [vmem:[%s1378 + $0xc0] sm:$0xff]
      %v1396 = vld [vmem:[%s1378 + $0xc8] sm:$0xff]
      %v1397 = vld [vmem:[%s1378 + $0xd8] sm:$0xff]
      %v1398 = vld [vmem:[%s1378 + $0xe0] sm:$0xff]
      %v1399 = vld [vmem:[%s1378 + $0xf0] sm:$0xff]
      %v1400 = vld [vmem:[%s1378 + $0xf8] sm:$0xff]
      %v1401 = vld [vmem:[%s1378 + $0x108] sm:$0xff]
      %v1402 = vld [vmem:[%s1378 + $0x110] sm:$0xff]
      %v1403 = vld [vmem:[%s1378 + $0x120] sm:$0xff]
      %v1404 = vld [vmem:[%s1378 + $0x128] sm:$0xff]
      %v1405 = vld [vmem:[%s1378 + $0x138] sm:$0xff]
      %v1406 = vld [vmem:[%s1378 + $0x140] sm:$0xff]
      %v1407 = vld [vmem:[%s1378 + $0x150] sm:$0xff]
      %v1408 = vld [vmem:[%s1378 + $0x158] sm:$0xff]
      %v1409 = vld [vmem:[%s1378 + $0x168] sm:$0xff]
      %v1410 = vld [vmem:[%s1378 + $0x170] sm:$0xff]
      %v1411 = vpack.c.bf16 %v1380, %v1379
      %v1412 = vpack.c.bf16 %v1382, %v1381
      %v1413 = vpack.c.bf16 %v1384, %v1383
      %v1414 = vpack.c.bf16 %v1386, %v1385
      %v1415 = vpack.c.bf16 %v1388, %v1387
      %v1416 = vpack.c.bf16 %v1390, %v1389
      %v1417 = vpack.c.bf16 %v1392, %v1391
      %v1418 = vpack.c.bf16 %v1394, %v1393
      %v1419 = vpack.c.bf16 %v1396, %v1395
      %v1420 = vpack.c.bf16 %v1398, %v1397
      %v1421 = vpack.c.bf16 %v1400, %v1399
      %v1422 = vpack.c.bf16 %v1402, %v1401
      %v1423 = vpack.c.bf16 %v1404, %v1403
      %v1424 = vpack.c.bf16 %v1406, %v1405
      %v1425 = vpack.c.bf16 %v1408, %v1407
      %v1426 = vpack.c.bf16 %v1410, %v1409
      %1443 = vrot.lane.b32.xlu0 %v1411, 24
      %v1444 = vpop.permute.xlu0 %1443
      %1445 = vrot.lane.b32.xlu0 %v1412, 24
      %v1446 = vpop.permute.xlu0 %1445
      %1447 = vrot.lane.b32.xlu0 %v1413, 24
      %v1448 = vpop.permute.xlu0 %1447
      %1449 = vrot.lane.b32.xlu0 %v1414, 24
      %v1450 = vpop.permute.xlu0 %1449
      %1451 = vrot.lane.b32.xlu0 %v1415, 24
      %v1452 = vpop.permute.xlu0 %1451
      %1453 = vrot.lane.b32.xlu0 %v1416, 24
      %v1454 = vpop.permute.xlu0 %1453
      %1455 = vrot.lane.b32.xlu0 %v1417, 24
      %v1456 = vpop.permute.xlu0 %1455
      %1457 = vrot.lane.b32.xlu0 %v1418, 24
      %v1458 = vpop.permute.xlu0 %1457
      %1459 = vrot.lane.b32.xlu0 %v1419, 24
      %v1460 = vpop.permute.xlu0 %1459
      %1461 = vrot.lane.b32.xlu0 %v1420, 24
      %v1462 = vpop.permute.xlu0 %1461
      %1463 = vrot.lane.b32.xlu0 %v1421, 24
      %v1464 = vpop.permute.xlu0 %1463
      %1465 = vrot.lane.b32.xlu0 %v1422, 24
      %v1466 = vpop.permute.xlu0 %1465
      %1467 = vrot.lane.b32.xlu0 %v1423, 24
      %v1468 = vpop.permute.xlu0 %1467
      %1469 = vrot.lane.b32.xlu0 %v1424, 24
      %v1470 = vpop.permute.xlu0 %1469
      %1471 = vrot.lane.b32.xlu0 %v1425, 24
      %v1472 = vpop.permute.xlu0 %1471
      %1473 = vrot.lane.b32.xlu0 %v1426, 24
      %v1474 = vpop.permute.xlu0 %1473
      %vm1491 = vcmask 228544
      %1492 = vst.msk [vmem:[#allocation3] sm:$0xff] %vm1491, %v1444
      %1493 = vst.msk [vmem:[#allocation3 + $0x8] sm:$0xff] %vm1491, %v1446
      %1494 = vst.msk [vmem:[#allocation3 + $0x10] sm:$0xff] %vm1491, %v1448
      %1495 = vst.msk [vmem:[#allocation3 + $0x18] sm:$0xff] %vm1491, %v1450
      %1496 = vst.msk [vmem:[#allocation3 + $0x20] sm:$0xff] %vm1491, %v1452
      %1497 = vst.msk [vmem:[#allocation3 + $0x28] sm:$0xff] %vm1491, %v1454
      %1498 = vst.msk [vmem:[#allocation3 + $0x30] sm:$0xff] %vm1491, %v1456
      %1499 = vst.msk [vmem:[#allocation3 + $0x38] sm:$0xff] %vm1491, %v1458
      %1500 = vst.msk [vmem:[#allocation3 + $0x40] sm:$0xff] %vm1491, %v1460
      %1501 = vst.msk [vmem:[#allocation3 + $0x48] sm:$0xff] %vm1491, %v1462
      %1502 = vst.msk [vmem:[#allocation3 + $0x50] sm:$0xff] %vm1491, %v1464
      %1503 = vst.msk [vmem:[#allocation3 + $0x58] sm:$0xff] %vm1491, %v1466
      %1504 = vst.msk [vmem:[#allocation3 + $0x60] sm:$0xff] %vm1491, %v1468
      %1505 = vst.msk [vmem:[#allocation3 + $0x68] sm:$0xff] %vm1491, %v1470
      %1506 = vst.msk [vmem:[#allocation3 + $0x70] sm:$0xff] %vm1491, %v1472
      %1507 = vst.msk [vmem:[#allocation3 + $0x78] sm:$0xff] %vm1491, %v1474
      %v1508 = vld [vmem:[%s1378 + $0x1] sm:$0xff]
      %v1509 = vld [vmem:[%s1378 + $0x9] sm:$0xff]
      %v1510 = vld [vmem:[%s1378 + $0x19] sm:$0xff]
      %v1511 = vld [vmem:[%s1378 + $0x21] sm:$0xff]
      %v1512 = vld [vmem:[%s1378 + $0x31] sm:$0xff]
      %v1513 = vld [vmem:[%s1378 + $0x39] sm:$0xff]
      %v1514 = vld [vmem:[%s1378 + $0x49] sm:$0xff]
      %v1515 = vld [vmem:[%s1378 + $0x51] sm:$0xff]
      %v1516 = vld [vmem:[%s1378 + $0x61] sm:$0xff]
      %v1517 = vld [vmem:[%s1378 + $0x69] sm:$0xff]
      %v1518 = vld [vmem:[%s1378 + $0x79] sm:$0xff]
      %v1519 = vld [vmem:[%s1378 + $0x81] sm:$0xff]
      %v1520 = vld [vmem:[%s1378 + $0x91] sm:$0xff]
      %v1521 = vld [vmem:[%s1378 + $0x99] sm:$0xff]
      %v1522 = vld [vmem:[%s1378 + $0xa9] sm:$0xff]
      %v1523 = vld [vmem:[%s1378 + $0xb1] sm:$0xff]
      %v1524 = vld [vmem:[%s1378 + $0xc1] sm:$0xff]
      %v1525 = vld [vmem:[%s1378 + $0xc9] sm:$0xff]
      %v1526 = vld [vmem:[%s1378 + $0xd9] sm:$0xff]
      %v1527 = vld [vmem:[%s1378 + $0xe1] sm:$0xff]
      %v1528 = vld [vmem:[%s1378 + $0xf1] sm:$0xff]
      %v1529 = vld [vmem:[%s1378 + $0xf9] sm:$0xff]
      %v1530 = vld [vmem:[%s1378 + $0x109] sm:$0xff]
      %v1531 = vld [vmem:[%s1378 + $0x111] sm:$0xff]
      %v1532 = vld [vmem:[%s1378 + $0x121] sm:$0xff]
      %v1533 = vld [vmem:[%s1378 + $0x129] sm:$0xff]
      %v1534 = vld [vmem:[%s1378 + $0x139] sm:$0xff]
      %v1535 = vld [vmem:[%s1378 + $0x141] sm:$0xff]
      %v1536 = vld [vmem:[%s1378 + $0x151] sm:$0xff]
      %v1537 = vld [vmem:[%s1378 + $0x159] sm:$0xff]
      %v1538 = vld [vmem:[%s1378 + $0x169] sm:$0xff]
      %v1539 = vld [vmem:[%s1378 + $0x171] sm:$0xff]
      %v1540 = vpack.c.bf16 %v1509, %v1508
      %v1541 = vpack.c.bf16 %v1511, %v1510
      %v1542 = vpack.c.bf16 %v1513, %v1512
      %v1543 = vpack.c.bf16 %v1515, %v1514
      %v1544 = vpack.c.bf16 %v1517, %v1516
      %v1545 = vpack.c.bf16 %v1519, %v1518
      %v1546 = vpack.c.bf16 %v1521, %v1520
      %v1547 = vpack.c.bf16 %v1523, %v1522
      %v1548 = vpack.c.bf16 %v1525, %v1524
      %v1549 = vpack.c.bf16 %v1527, %v1526
      %v1550 = vpack.c.bf16 %v1529, %v1528
      %v1551 = vpack.c.bf16 %v1531, %v1530
      %v1552 = vpack.c.bf16 %v1533, %v1532
      %v1553 = vpack.c.bf16 %v1535, %v1534
      %v1554 = vpack.c.bf16 %v1537, %v1536
      %v1555 = vpack.c.bf16 %v1539, %v1538
      %1572 = vrot.lane.b32.xlu0 %v1540, 28
      %v1573 = vpop.permute.xlu0 %1572
      %1574 = vrot.lane.b32.xlu0 %v1541, 28
      %v1575 = vpop.permute.xlu0 %1574
      %1576 = vrot.lane.b32.xlu0 %v1542, 28
      %v1577 = vpop.permute.xlu0 %1576
      %1578 = vrot.lane.b32.xlu0 %v1543, 28
      %v1579 = vpop.permute.xlu0 %1578
      %1580 = vrot.lane.b32.xlu0 %v1544, 28
      %v1581 = vpop.permute.xlu0 %1580
      %1582 = vrot.lane.b32.xlu0 %v1545, 28
      %v1583 = vpop.permute.xlu0 %1582
      %1584 = vrot.lane.b32.xlu0 %v1546, 28
      %v1585 = vpop.permute.xlu0 %1584
      %1586 = vrot.lane.b32.xlu0 %v1547, 28
      %v1587 = vpop.permute.xlu0 %1586
      %1588 = vrot.lane.b32.xlu0 %v1548, 28
      %v1589 = vpop.permute.xlu0 %1588
      %1590 = vrot.lane.b32.xlu0 %v1549, 28
      %v1591 = vpop.permute.xlu0 %1590
      %1592 = vrot.lane.b32.xlu0 %v1550, 28
      %v1593 = vpop.permute.xlu0 %1592
      %1594 = vrot.lane.b32.xlu0 %v1551, 28
      %v1595 = vpop.permute.xlu0 %1594
      %1596 = vrot.lane.b32.xlu0 %v1552, 28
      %v1597 = vpop.permute.xlu0 %1596
      %1598 = vrot.lane.b32.xlu0 %v1553, 28
      %v1599 = vpop.permute.xlu0 %1598
      %1600 = vrot.lane.b32.xlu0 %v1554, 28
      %v1601 = vpop.permute.xlu0 %1600
      %1602 = vrot.lane.b32.xlu0 %v1555, 28
      %v1603 = vpop.permute.xlu0 %1602
      %vm1620 = vcmask 261344
      %1621 = vst.msk [vmem:[#allocation3] sm:$0xff] %vm1620, %v1573
      %1622 = vst.msk [vmem:[#allocation3 + $0x8] sm:$0xff] %vm1620, %v1575
      %1623 = vst.msk [vmem:[#allocation3 + $0x10] sm:$0xff] %vm1620, %v1577
      %1624 = vst.msk [vmem:[#allocation3 + $0x18] sm:$0xff] %vm1620, %v1579
      %1625 = vst.msk [vmem:[#allocation3 + $0x20] sm:$0xff] %vm1620, %v1581
      %1626 = vst.msk [vmem:[#allocation3 + $0x28] sm:$0xff] %vm1620, %v1583
      %1627 = vst.msk [vmem:[#allocation3 + $0x30] sm:$0xff] %vm1620, %v1585
      %1628 = vst.msk [vmem:[#allocation3 + $0x38] sm:$0xff] %vm1620, %v1587
      %1629 = vst.msk [vmem:[#allocation3 + $0x40] sm:$0xff] %vm1620, %v1589
      %1630 = vst.msk [vmem:[#allocation3 + $0x48] sm:$0xff] %vm1620, %v1591
      %1631 = vst.msk [vmem:[#allocation3 + $0x50] sm:$0xff] %vm1620, %v1593
      %1632 = vst.msk [vmem:[#allocation3 + $0x58] sm:$0xff] %vm1620, %v1595
      %1633 = vst.msk [vmem:[#allocation3 + $0x60] sm:$0xff] %vm1620, %v1597
      %1634 = vst.msk [vmem:[#allocation3 + $0x68] sm:$0xff] %vm1620, %v1599
      %1635 = vst.msk [vmem:[#allocation3 + $0x70] sm:$0xff] %vm1620, %v1601
      %1636 = vst.msk [vmem:[#allocation3 + $0x78] sm:$0xff] %vm1620, %v1603
      %v1637 = vld [vmem:[%s1378 + $0x2] sm:$0xff]
      %v1638 = vld [vmem:[%s1378 + $0xa] sm:$0xff]
      %v1639 = vld [vmem:[%s1378 + $0x1a] sm:$0xff]
      %v1640 = vld [vmem:[%s1378 + $0x22] sm:$0xff]
      %v1641 = vld [vmem:[%s1378 + $0x32] sm:$0xff]
      %v1642 = vld [vmem:[%s1378 + $0x3a] sm:$0xff]
      %v1643 = vld [vmem:[%s1378 + $0x4a] sm:$0xff]
      %v1644 = vld [vmem:[%s1378 + $0x52] sm:$0xff]
      %v1645 = vld [vmem:[%s1378 + $0x62] sm:$0xff]
      %v1646 = vld [vmem:[%s1378 + $0x6a] sm:$0xff]
      %v1647 = vld [vmem:[%s1378 + $0x7a] sm:$0xff]
      %v1648 = vld [vmem:[%s1378 + $0x82] sm:$0xff]
      %v1649 = vld [vmem:[%s1378 + $0x92] sm:$0xff]
      %v1650 = vld [vmem:[%s1378 + $0x9a] sm:$0xff]
      %v1651 = vld [vmem:[%s1378 + $0xaa] sm:$0xff]
      %v1652 = vld [vmem:[%s1378 + $0xb2] sm:$0xff]
      %v1653 = vld [vmem:[%s1378 + $0xc2] sm:$0xff]
      %v1654 = vld [vmem:[%s1378 + $0xca] sm:$0xff]
      %v1655 = vld [vmem:[%s1378 + $0xda] sm:$0xff]
      %v1656 = vld [vmem:[%s1378 + $0xe2] sm:$0xff]
      %v1657 = vld [vmem:[%s1378 + $0xf2] sm:$0xff]
      %v1658 = vld [vmem:[%s1378 + $0xfa] sm:$0xff]
      %v1659 = vld [vmem:[%s1378 + $0x10a] sm:$0xff]
      %v1660 = vld [vmem:[%s1378 + $0x112] sm:$0xff]
      %v1661 = vld [vmem:[%s1378 + $0x122] sm:$0xff]
      %v1662 = vld [vmem:[%s1378 + $0x12a] sm:$0xff]
      %v1663 = vld [vmem:[%s1378 + $0x13a] sm:$0xff]
      %v1664 = vld [vmem:[%s1378 + $0x142] sm:$0xff]
      %v1665 = vld [vmem:[%s1378 + $0x152] sm:$0xff]
      %v1666 = vld [vmem:[%s1378 + $0x15a] sm:$0xff]
      %v1667 = vld [vmem:[%s1378 + $0x16a] sm:$0xff]
      %v1668 = vld [vmem:[%s1378 + $0x172] sm:$0xff]
      %v1669 = vpack.c.bf16 %v1638, %v1637
      %v1670 = vpack.c.bf16 %v1640, %v1639
      %v1671 = vpack.c.bf16 %v1642, %v1641
      %v1672 = vpack.c.bf16 %v1644, %v1643
      %v1673 = vpack.c.bf16 %v1646, %v1645
      %v1674 = vpack.c.bf16 %v1648, %v1647
      %v1675 = vpack.c.bf16 %v1650, %v1649
      %v1676 = vpack.c.bf16 %v1652, %v1651
      %v1677 = vpack.c.bf16 %v1654, %v1653
      %v1678 = vpack.c.bf16 %v1656, %v1655
      %v1679 = vpack.c.bf16 %v1658, %v1657
      %v1680 = vpack.c.bf16 %v1660, %v1659
      %v1681 = vpack.c.bf16 %v1662, %v1661
      %v1682 = vpack.c.bf16 %v1664, %v1663
      %v1683 = vpack.c.bf16 %v1666, %v1665
      %v1684 = vpack.c.bf16 %v1668, %v1667
      %1701 = vrot.lane.b32.xlu0 %v1669, 32
      %v1702 = vpop.permute.xlu0 %1701
      %1703 = vrot.lane.b32.xlu0 %v1670, 32
      %v1704 = vpop.permute.xlu0 %1703
      %1705 = vrot.lane.b32.xlu0 %v1671, 32
      %v1706 = vpop.permute.xlu0 %1705
      %1707 = vrot.lane.b32.xlu0 %v1672, 32
      %v1708 = vpop.permute.xlu0 %1707
      %1709 = vrot.lane.b32.xlu0 %v1673, 32
      %v1710 = vpop.permute.xlu0 %1709
      %1711 = vrot.lane.b32.xlu0 %v1674, 32
      %v1712 = vpop.permute.xlu0 %1711
      %1713 = vrot.lane.b32.xlu0 %v1675, 32
      %v1714 = vpop.permute.xlu0 %1713
      %1715 = vrot.lane.b32.xlu0 %v1676, 32
      %v1716 = vpop.permute.xlu0 %1715
      %1717 = vrot.lane.b32.xlu0 %v1677, 32
      %v1718 = vpop.permute.xlu0 %1717
      %1719 = vrot.lane.b32.xlu0 %v1678, 32
      %v1720 = vpop.permute.xlu0 %1719
      %1721 = vrot.lane.b32.xlu0 %v1679, 32
      %v1722 = vpop.permute.xlu0 %1721
      %1723 = vrot.lane.b32.xlu0 %v1680, 32
      %v1724 = vpop.permute.xlu0 %1723
      %1725 = vrot.lane.b32.xlu0 %v1681, 32
      %v1726 = vpop.permute.xlu0 %1725
      %1727 = vrot.lane.b32.xlu0 %v1682, 32
      %v1728 = vpop.permute.xlu0 %1727
      %1729 = vrot.lane.b32.xlu0 %v1683, 32
      %v1730 = vpop.permute.xlu0 %1729
      %1731 = vrot.lane.b32.xlu0 %v1684, 32
      %v1732 = vpop.permute.xlu0 %1731
      %vm1749 = vcmask 294144
      %1750 = vst.msk [vmem:[#allocation3] sm:$0xff] %vm1749, %v1702
      %1751 = vst.msk [vmem:[#allocation3 + $0x8] sm:$0xff] %vm1749, %v1704
      %1752 = vst.msk [vmem:[#allocation3 + $0x10] sm:$0xff] %vm1749, %v1706
      %1753 = vst.msk [vmem:[#allocation3 + $0x18] sm:$0xff] %vm1749, %v1708
      %1754 = vst.msk [vmem:[#allocation3 + $0x20] sm:$0xff] %vm1749, %v1710
      %1755 = vst.msk [vmem:[#allocation3 + $0x28] sm:$0xff] %vm1749, %v1712
      %1756 = vst.msk [vmem:[#allocation3 + $0x30] sm:$0xff] %vm1749, %v1714
      %1757 = vst.msk [vmem:[#allocation3 + $0x38] sm:$0xff] %vm1749, %v1716
      %1758 = vst.msk [vmem:[#allocation3 + $0x40] sm:$0xff] %vm1749, %v1718
      %1759 = vst.msk [vmem:[#allocation3 + $0x48] sm:$0xff] %vm1749, %v1720
      %1760 = vst.msk [vmem:[#allocation3 + $0x50] sm:$0xff] %vm1749, %v1722
      %1761 = vst.msk [vmem:[#allocation3 + $0x58] sm:$0xff] %vm1749, %v1724
      %1762 = vst.msk [vmem:[#allocation3 + $0x60] sm:$0xff] %vm1749, %v1726
      %1763 = vst.msk [vmem:[#allocation3 + $0x68] sm:$0xff] %vm1749, %v1728
      %1764 = vst.msk [vmem:[#allocation3 + $0x70] sm:$0xff] %vm1749, %v1730
      %1765 = vst.msk [vmem:[#allocation3 + $0x78] sm:$0xff] %vm1749, %v1732
      %v1766 = vld [vmem:[#allocation3] sm:$0xff]
      %v1767 = vld [vmem:[#allocation3 + $0x8] sm:$0xff]
      %v1768 = vld [vmem:[#allocation3 + $0x10] sm:$0xff]
      %v1769 = vld [vmem:[#allocation3 + $0x18] sm:$0xff]
      %v1770 = vld [vmem:[#allocation3 + $0x20] sm:$0xff]
      %v1771 = vld [vmem:[#allocation3 + $0x28] sm:$0xff]
      %v1772 = vld [vmem:[#allocation3 + $0x30] sm:$0xff]
      %v1773 = vld [vmem:[#allocation3 + $0x38] sm:$0xff]
      %v1774 = vld [vmem:[#allocation3 + $0x40] sm:$0xff]
      %v1775 = vld [vmem:[#allocation3 + $0x48] sm:$0xff]
      %v1776 = vld [vmem:[#allocation3 + $0x50] sm:$0xff]
      %v1777 = vld [vmem:[#allocation3 + $0x58] sm:$0xff]
      %v1778 = vld [vmem:[#allocation3 + $0x60] sm:$0xff]
      %v1779 = vld [vmem:[#allocation3 + $0x68] sm:$0xff]
      %v1780 = vld [vmem:[#allocation3 + $0x70] sm:$0xff]
      %v1781 = vld [vmem:[#allocation3 + $0x78] sm:$0xff]
      %v1782 = vld [vmem:[%s3] sm:$0xf]
      %v1783 = vld [vmem:[%s3 + $0x4] sm:$0xf]
      %v1784 = vld [vmem:[%s3 + $0x8] sm:$0xf]
      %v1785 = vld [vmem:[%s3 + $0xc] sm:$0xf]
      %v1786 = vld [vmem:[%s3 + $0x10] sm:$0x3]
      %v1787 = vld [vmem:[%s395] sm:$0x1]
      %v1789 = vlaneseq
      %v1790 = vshrl.u32 %v1789, 7
      %v1791 = vsub.s32 0, %v1790
      %v1792 = vrot.slane %v1787, %v1791
      %v1799 = vunpack.c.l.b16 %v1782
      %v1800 = vunpack.c.l.b16 %v1783
      %v1801 = vunpack.c.l.b16 %v1784
      %v1802 = vunpack.c.l.b16 %v1785
      %v1803 = vunpack.c.l.b16 %v1786
      %v1804 = vpack.c.b16 %v1800, %v1799
      %v1805 = vpack.c.b16 %v1802, %v1801
      %v1806 = vpack.c.b16 %v1803, %v1803
      %vm1809 = vcmask 293888
      %v1811 = vsel %vm1809, %v1766, 0
      %v1814 = vsel %vm1809, %v1767, 0
      %v1817 = vsel %vm1809, %v1768, 0
      %v1820 = vsel %vm1809, %v1769, 0
      %v1823 = vsel %vm1809, %v1770, 0
      %v1826 = vsel %vm1809, %v1771, 0
      %v1829 = vsel %vm1809, %v1772, 0
      %v1832 = vsel %vm1809, %v1773, 0
      %v1835 = vsel %vm1809, %v1774, 0
      %v1838 = vsel %vm1809, %v1775, 0
      %v1841 = vsel %vm1809, %v1776, 0
      %v1844 = vsel %vm1809, %v1777, 0
      %v1847 = vsel %vm1809, %v1778, 0
      %v1850 = vsel %vm1809, %v1779, 0
      %v1853 = vsel %vm1809, %v1780, 0
      %v1856 = vsel %vm1809, %v1781, 0
      %vm1858 = vcmask 1041408
      %v1860 = vsel %vm1858, %v1806, 0
      %1862 = vmatprep.subr.bf16.mxu0 0
      %1863 = vmatpush1.bf16.msra.mxu0 %v1804
      %1864 = vmatprep.subr.bf16.mxu0 0
      %1865 = vmatpush1.bf16.msra.mxu0 %v1805
      %1866 = vmatprep.subr.bf16.mxu0 0
      %1867 = vmatpush1.bf16.msra.mxu0 %v1860
      %1868 = vmatprep.subr.bf16.mxu0 0
      %1869 = vmatpush1.bf16.msra.mxu0 0
      %1870 = vmatprep.subr.bf16.mxu0 0
      %1871 = vmatpush1.bf16.msra.mxu0 0
      %1872 = vmatprep.subr.bf16.mxu0 0
      %1873 = vmatpush1.bf16.msra.mxu0 0
      %1874 = vmatprep.subr.bf16.mxu0 0
      %1875 = vmatpush1.bf16.msra.mxu0 0
      %1876 = vmatprep.subr.bf16.mxu0 0
      %1877 = vmatpush1.bf16.msra.mxu0 0
      %1878 = vmatprep.subr.bf16.mxu0 0
      %1879 = vmatpush1.bf16.msra.mxu0 0
      %1880 = vmatprep.subr.bf16.mxu0 0
      %1881 = vmatpush1.bf16.msra.mxu0 0
      %1882 = vmatprep.subr.bf16.mxu0 0
      %1883 = vmatpush1.bf16.msra.mxu0 0
      %1884 = vmatprep.subr.bf16.mxu0 0
      %1885 = vmatpush1.bf16.msra.mxu0 0
      %1886 = vmatprep.subr.bf16.mxu0 0
      %1887 = vmatpush1.bf16.msra.mxu0 0
      %1888 = vmatprep.subr.bf16.mxu0 0
      %1889 = vmatpush1.bf16.msra.mxu0 0
      %1890 = vmatprep.subr.bf16.mxu0 0
      %1891 = vmatpush1.bf16.msra.mxu0 0
      %1892 = vmatprep.subr.bf16.mxu0 0
      %1893 = vmatpush1.bf16.msra.mxu0 0
      %1894 = vmatprep.mubr.bf16.mxu0 0
      %1895 = vmatmul.mubr.bf16.gmra.mrb[0].mxu0 %v1811
      %v1896 = vpop.f32.mrb[0].mxu0
      %v1897 = vadd.f32 %v1792, %v1896
      %v1898 = vpop.f32.mrb[0].mxu0
      %v1899 = vpop.f32.mrb[0].mxu0
      %v1900 = vadd.f32 %v1792, %v1899
      %v1901 = vpop.f32.mrb[0].mxu0
      %1902 = vmatprep.mubr.bf16.mxu0 0
      %1903 = vmatmul.mubr.bf16.gmra.mrb[0].mxu0 %v1814
      %v1904 = vpop.f32.mrb[0].mxu0
      %v1905 = vadd.f32 %v1792, %v1904
      %v1906 = vpop.f32.mrb[0].mxu0
      %v1907 = vpop.f32.mrb[0].mxu0
      %v1908 = vadd.f32 %v1792, %v1907
      %v1909 = vpop.f32.mrb[0].mxu0
      %1910 = vmatprep.mubr.bf16.mxu0 0
      %1911 = vmatmul.mubr.bf16.gmra.mrb[0].mxu0 %v1817
      %v1912 = vpop.f32.mrb[0].mxu0
      %v1913 = vadd.f32 %v1792, %v1912
      %v1914 = vpop.f32.mrb[0].mxu0
      %v1915 = vpop.f32.mrb[0].mxu0
      %v1916 = vadd.f32 %v1792, %v1915
      %v1917 = vpop.f32.mrb[0].mxu0
      %1918 = vmatprep.mubr.bf16.mxu0 0
      %1919 = vmatmul.mubr.bf16.gmra.mrb[0].mxu0 %v1820
      %v1920 = vpop.f32.mrb[0].mxu0
      %v1921 = vadd.f32 %v1792, %v1920
      %v1922 = vpop.f32.mrb[0].mxu0
      %v1923 = vpop.f32.mrb[0].mxu0
      %v1924 = vadd.f32 %v1792, %v1923
      %v1925 = vpop.f32.mrb[0].mxu0
      %1926 = vmatprep.mubr.bf16.mxu0 0
      %1927 = vmatmul.mubr.bf16.gmra.mrb[0].mxu0 %v1823
      %v1928 = vpop.f32.mrb[0].mxu0
      %v1929 = vadd.f32 %v1792, %v1928
      %v1930 = vpop.f32.mrb[0].mxu0
      %v1931 = vpop.f32.mrb[0].mxu0
      %v1932 = vadd.f32 %v1792, %v1931
      %v1933 = vpop.f32.mrb[0].mxu0
      %1934 = vmatprep.mubr.bf16.mxu0 0
      %1935 = vmatmul.mubr.bf16.gmra.mrb[0].mxu0 %v1826
      %v1936 = vpop.f32.mrb[0].mxu0
      %v1937 = vadd.f32 %v1792, %v1936
      %v1938 = vpop.f32.mrb[0].mxu0
      %v1939 = vpop.f32.mrb[0].mxu0
      %v1940 = vadd.f32 %v1792, %v1939
      %v1941 = vpop.f32.mrb[0].mxu0
      %1942 = vmatprep.mubr.bf16.mxu0 0
      %1943 = vmatmul.mubr.bf16.gmra.mrb[0].mxu0 %v1829
      %v1944 = vpop.f32.mrb[0].mxu0
      %v1945 = vadd.f32 %v1792, %v1944
      %v1946 = vpop.f32.mrb[0].mxu0
      %v1947 = vpop.f32.mrb[0].mxu0
      %v1948 = vadd.f32 %v1792, %v1947
      %v1949 = vpop.f32.mrb[0].mxu0
      %1950 = vmatprep.mubr.bf16.mxu0 0
      %1951 = vmatmul.mubr.bf16.gmra.mrb[0].mxu0 %v1832
      %v1952 = vpop.f32.mrb[0].mxu0
      %v1953 = vadd.f32 %v1792, %v1952
      %v1954 = vpop.f32.mrb[0].mxu0
      %v1955 = vpop.f32.mrb[0].mxu0
      %v1956 = vadd.f32 %v1792, %v1955
      %v1957 = vpop.f32.mrb[0].mxu0
      %1958 = vmatprep.mubr.bf16.mxu0 0
      %1959 = vmatmul.mubr.bf16.gmra.mrb[0].mxu0 %v1835
      %v1960 = vpop.f32.mrb[0].mxu0
      %v1961 = vadd.f32 %v1792, %v1960
      %v1962 = vpop.f32.mrb[0].mxu0
      %v1963 = vpop.f32.mrb[0].mxu0
      %v1964 = vadd.f32 %v1792, %v1963
      %v1965 = vpop.f32.mrb[0].mxu0
      %1966 = vmatprep.mubr.bf16.mxu0 0
      %1967 = vmatmul.mubr.bf16.gmra.mrb[0].mxu0 %v1838
      %v1968 = vpop.f32.mrb[0].mxu0
      %v1969 = vadd.f32 %v1792, %v1968
      %v1970 = vpop.f32.mrb[0].mxu0
      %v1971 = vpop.f32.mrb[0].mxu0
      %v1972 = vadd.f32 %v1792, %v1971
      %v1973 = vpop.f32.mrb[0].mxu0
      %1974 = vmatprep.mubr.bf16.mxu0 0
      %1975 = vmatmul.mubr.bf16.gmra.mrb[0].mxu0 %v1841
      %v1976 = vpop.f32.mrb[0].mxu0
      %v1977 = vadd.f32 %v1792, %v1976
      %v1978 = vpop.f32.mrb[0].mxu0
      %v1979 = vpop.f32.mrb[0].mxu0
      %v1980 = vadd.f32 %v1792, %v1979
      %v1981 = vpop.f32.mrb[0].mxu0
      %1982 = vmatprep.mubr.bf16.mxu0 0
      %1983 = vmatmul.mubr.bf16.gmra.mrb[0].mxu0 %v1844
      %v1984 = vpop.f32.mrb[0].mxu0
      %v1985 = vadd.f32 %v1792, %v1984
      %v1986 = vpop.f32.mrb[0].mxu0
      %v1987 = vpop.f32.mrb[0].mxu0
      %v1988 = vadd.f32 %v1792, %v1987
      %v1989 = vpop.f32.mrb[0].mxu0
      %1990 = vmatprep.mubr.bf16.mxu0 0
      %1991 = vmatmul.mubr.bf16.gmra.mrb[0].mxu0 %v1847
      %v1992 = vpop.f32.mrb[0].mxu0
      %v1993 = vadd.f32 %v1792, %v1992
      %v1994 = vpop.f32.mrb[0].mxu0
      %v1995 = vpop.f32.mrb[0].mxu0
      %v1996 = vadd.f32 %v1792, %v1995
      %v1997 = vpop.f32.mrb[0].mxu0
      %1998 = vmatprep.mubr.bf16.mxu0 0
      %1999 = vmatmul.mubr.bf16.gmra.mrb[0].mxu0 %v1850
      %v2000 = vpop.f32.mrb[0].mxu0
      %v2001 = vadd.f32 %v1792, %v2000
      %v2002 = vpop.f32.mrb[0].mxu0
      %v2003 = vpop.f32.mrb[0].mxu0
      %v2004 = vadd.f32 %v1792, %v2003
      %v2005 = vpop.f32.mrb[0].mxu0
      %2006 = vmatprep.mubr.bf16.mxu0 0
      %2007 = vmatmul.mubr.bf16.gmra.mrb[0].mxu0 %v1853
      %v2008 = vpop.f32.mrb[0].mxu0
      %v2009 = vadd.f32 %v1792, %v2008
      %v2010 = vpop.f32.mrb[0].mxu0
      %v2011 = vpop.f32.mrb[0].mxu0
      %v2012 = vadd.f32 %v1792, %v2011
      %v2013 = vpop.f32.mrb[0].mxu0
      %2014 = vmatprep.mubr.bf16.mxu0 0
      %2015 = vmatmul.mubr.bf16.gmra.mrb[0].mxu0 %v1856
      %v2016 = vpop.f32.mrb[0].mxu0
      %v2017 = vadd.f32 %v1792, %v2016
      %v2018 = vpop.f32.mrb[0].mxu0
      %v2019 = vpop.f32.mrb[0].mxu0
      %v2020 = vadd.f32 %v1792, %v2019
      %v2021 = vpop.f32.mrb[0].mxu0
      %2022 = vdwg.mxu0
      %v2023 = vld [vmem:[%s5] sm:$0x1]
      %v2025 = vlaneseq
      %v2026 = vshrl.u32 %v2025, 7
      %v2027 = vsub.s32 0, %v2026
      %v2028 = vrot.slane %v2023, %v2027
      %v2030 = vmul.f32 %v1897, %v2028
      %v2031 = vmul.f32 %v1900, %v2028
      %v2032 = vmul.f32 %v1905, %v2028
      %v2033 = vmul.f32 %v1908, %v2028
      %v2034 = vmul.f32 %v1913, %v2028
      %v2035 = vmul.f32 %v1916, %v2028
      %v2036 = vmul.f32 %v1921, %v2028
      %v2037 = vmul.f32 %v1924, %v2028
      %v2038 = vmul.f32 %v1929, %v2028
      %v2039 = vmul.f32 %v1932, %v2028
      %v2040 = vmul.f32 %v1937, %v2028
      %v2041 = vmul.f32 %v1940, %v2028
      %v2042 = vmul.f32 %v1945, %v2028
      %v2043 = vmul.f32 %v1948, %v2028
      %v2044 = vmul.f32 %v1953, %v2028
      %v2045 = vmul.f32 %v1956, %v2028
      %v2046 = vmul.f32 %v1961, %v2028
      %v2047 = vmul.f32 %v1964, %v2028
      %v2048 = vmul.f32 %v1969, %v2028
      %v2049 = vmul.f32 %v1972, %v2028
      %v2050 = vmul.f32 %v1977, %v2028
      %v2051 = vmul.f32 %v1980, %v2028
      %v2052 = vmul.f32 %v1985, %v2028
      %v2053 = vmul.f32 %v1988, %v2028
      %v2054 = vmul.f32 %v1993, %v2028
      %v2055 = vmul.f32 %v1996, %v2028
      %v2056 = vmul.f32 %v2001, %v2028
      %v2057 = vmul.f32 %v2004, %v2028
      %v2058 = vmul.f32 %v2009, %v2028
      %v2059 = vmul.f32 %v2012, %v2028
      %v2060 = vmul.f32 %v2017, %v2028
      %v2061 = vmul.f32 %v2020, %v2028
      %v2062 = vld [vmem:[%s6] sm:$0x1]
      %v2064 = vlaneseq
      %v2065 = vshrl.u32 %v2064, 7
      %v2066 = vsub.s32 0, %v2065
      %v2067 = vrot.slane %v2062, %v2066
      %v2069 = vadd.f32 %v2030, %v2067
      %v2070 = vadd.f32 %v2031, %v2067
      %v2071 = vadd.f32 %v2032, %v2067
      %v2072 = vadd.f32 %v2033, %v2067
      %v2073 = vadd.f32 %v2034, %v2067
      %v2074 = vadd.f32 %v2035, %v2067
      %v2075 = vadd.f32 %v2036, %v2067
      %v2076 = vadd.f32 %v2037, %v2067
      %v2077 = vadd.f32 %v2038, %v2067
      %v2078 = vadd.f32 %v2039, %v2067
      %v2079 = vadd.f32 %v2040, %v2067
      %v2080 = vadd.f32 %v2041, %v2067
      %v2081 = vadd.f32 %v2042, %v2067
      %v2082 = vadd.f32 %v2043, %v2067
      %v2083 = vadd.f32 %v2044, %v2067
      %v2084 = vadd.f32 %v2045, %v2067
      %v2085 = vadd.f32 %v2046, %v2067
      %v2086 = vadd.f32 %v2047, %v2067
      %v2087 = vadd.f32 %v2048, %v2067
      %v2088 = vadd.f32 %v2049, %v2067
      %v2089 = vadd.f32 %v2050, %v2067
      %v2090 = vadd.f32 %v2051, %v2067
      %v2091 = vadd.f32 %v2052, %v2067
      %v2092 = vadd.f32 %v2053, %v2067
      %v2093 = vadd.f32 %v2054, %v2067
      %v2094 = vadd.f32 %v2055, %v2067
      %v2095 = vadd.f32 %v2056, %v2067
      %v2096 = vadd.f32 %v2057, %v2067
      %v2097 = vadd.f32 %v2058, %v2067
      %v2098 = vadd.f32 %v2059, %v2067
      %v2099 = vadd.f32 %v2060, %v2067
      %v2100 = vadd.f32 %v2061, %v2067
      %v2101 = vmax.f32 %v2069, 0.0
      %v2102 = vmax.f32 %v2070, 0.0
      %v2103 = vmax.f32 %v2071, 0.0
      %v2104 = vmax.f32 %v2072, 0.0
      %v2105 = vmax.f32 %v2073, 0.0
      %v2106 = vmax.f32 %v2074, 0.0
      %v2107 = vmax.f32 %v2075, 0.0
      %v2108 = vmax.f32 %v2076, 0.0
      %v2109 = vmax.f32 %v2077, 0.0
      %v2110 = vmax.f32 %v2078, 0.0
      %v2111 = vmax.f32 %v2079, 0.0
      %v2112 = vmax.f32 %v2080, 0.0
      %v2113 = vmax.f32 %v2081, 0.0
      %v2114 = vmax.f32 %v2082, 0.0
      %v2115 = vmax.f32 %v2083, 0.0
      %v2116 = vmax.f32 %v2084, 0.0
      %v2117 = vmax.f32 %v2085, 0.0
      %v2118 = vmax.f32 %v2086, 0.0
      %v2119 = vmax.f32 %v2087, 0.0
      %v2120 = vmax.f32 %v2088, 0.0
      %v2121 = vmax.f32 %v2089, 0.0
      %v2122 = vmax.f32 %v2090, 0.0
      %v2123 = vmax.f32 %v2091, 0.0
      %v2124 = vmax.f32 %v2092, 0.0
      %v2125 = vmax.f32 %v2093, 0.0
      %v2126 = vmax.f32 %v2094, 0.0
      %v2127 = vmax.f32 %v2095, 0.0
      %v2128 = vmax.f32 %v2096, 0.0
      %v2129 = vmax.f32 %v2097, 0.0
      %v2130 = vmax.f32 %v2098, 0.0
      %v2131 = vmax.f32 %v2099, 0.0
      %v2132 = vmax.f32 %v2100, 0.0
      %s2133 = scalar_lea.vmem [#allocation4], 24
      %2134 = vst.msk [vmem:[%s2133 + $0x1] sm:$0xff] %vm448, %v2101
      %2135 = vst.msk [vmem:[%s2133 + $0x9] sm:$0xff] %vm448, %v2102
      %2136 = vst.msk [vmem:[%s2133 + $0x19] sm:$0xff] %vm448, %v2103
      %2137 = vst.msk [vmem:[%s2133 + $0x21] sm:$0xff] %vm448, %v2104
      %2138 = vst.msk [vmem:[%s2133 + $0x31] sm:$0xff] %vm448, %v2105
      %2139 = vst.msk [vmem:[%s2133 + $0x39] sm:$0xff] %vm448, %v2106
      %2140 = vst.msk [vmem:[%s2133 + $0x49] sm:$0xff] %vm448, %v2107
      %2141 = vst.msk [vmem:[%s2133 + $0x51] sm:$0xff] %vm448, %v2108
      %2142 = vst.msk [vmem:[%s2133 + $0x61] sm:$0xff] %vm448, %v2109
      %2143 = vst.msk [vmem:[%s2133 + $0x69] sm:$0xff] %vm448, %v2110
      %2144 = vst.msk [vmem:[%s2133 + $0x79] sm:$0xff] %vm448, %v2111
      %2145 = vst.msk [vmem:[%s2133 + $0x81] sm:$0xff] %vm448, %v2112
      %2146 = vst.msk [vmem:[%s2133 + $0x91] sm:$0xff] %vm448, %v2113
      %2147 = vst.msk [vmem:[%s2133 + $0x99] sm:$0xff] %vm448, %v2114
      %2148 = vst.msk [vmem:[%s2133 + $0xa9] sm:$0xff] %vm448, %v2115
      %2149 = vst.msk [vmem:[%s2133 + $0xb1] sm:$0xff] %vm448, %v2116
      %2150 = vst.msk [vmem:[%s2133 + $0xc1] sm:$0xff] %vm448, %v2117
      %2151 = vst.msk [vmem:[%s2133 + $0xc9] sm:$0xff] %vm448, %v2118
      %2152 = vst.msk [vmem:[%s2133 + $0xd9] sm:$0xff] %vm448, %v2119
      %2153 = vst.msk [vmem:[%s2133 + $0xe1] sm:$0xff] %vm448, %v2120
      %2154 = vst.msk [vmem:[%s2133 + $0xf1] sm:$0xff] %vm448, %v2121
      %2155 = vst.msk [vmem:[%s2133 + $0xf9] sm:$0xff] %vm448, %v2122
      %2156 = vst.msk [vmem:[%s2133 + $0x109] sm:$0xff] %vm448, %v2123
      %2157 = vst.msk [vmem:[%s2133 + $0x111] sm:$0xff] %vm448, %v2124
      %2158 = vst.msk [vmem:[%s2133 + $0x121] sm:$0xff] %vm448, %v2125
      %2159 = vst.msk [vmem:[%s2133 + $0x129] sm:$0xff] %vm448, %v2126
      %2160 = vst.msk [vmem:[%s2133 + $0x139] sm:$0xff] %vm448, %v2127
      %2161 = vst.msk [vmem:[%s2133 + $0x141] sm:$0xff] %vm448, %v2128
      %2162 = vst.msk [vmem:[%s2133 + $0x151] sm:$0xff] %vm448, %v2129
      %2163 = vst.msk [vmem:[%s2133 + $0x159] sm:$0xff] %vm448, %v2130
      %2164 = vst.msk [vmem:[%s2133 + $0x169] sm:$0xff] %vm448, %v2131
      %2165 = vst.msk [vmem:[%s2133 + $0x171] sm:$0xff] %vm448, %v2132
      %v2166 = vld [vmem:[#allocation4] sm:$0xff]
      %v2167 = vld [vmem:[#allocation4 + $0x8] sm:$0xff]
      %v2168 = vld [vmem:[#allocation4 + $0x18] sm:$0xff]
      %v2169 = vld [vmem:[#allocation4 + $0x20] sm:$0xff]
      %v2170 = vld [vmem:[#allocation4 + $0x30] sm:$0xff]
      %v2171 = vld [vmem:[#allocation4 + $0x38] sm:$0xff]
      %v2172 = vld [vmem:[#allocation4 + $0x48] sm:$0xff]
      %v2173 = vld [vmem:[#allocation4 + $0x50] sm:$0xff]
      %v2174 = vld [vmem:[#allocation4 + $0x60] sm:$0xff]
      %v2175 = vld [vmem:[#allocation4 + $0x68] sm:$0xff]
      %v2176 = vld [vmem:[#allocation4 + $0x78] sm:$0xff]
      %v2177 = vld [vmem:[#allocation4 + $0x80] sm:$0xff]
      %v2178 = vld [vmem:[#allocation4 + $0x90] sm:$0xff]
      %v2179 = vld [vmem:[#allocation4 + $0x98] sm:$0xff]
      %v2180 = vld [vmem:[#allocation4 + $0xa8] sm:$0xff]
      %v2181 = vld [vmem:[#allocation4 + $0xb0] sm:$0xff]
      %v2182 = vld [vmem:[#allocation4 + $0xc0] sm:$0xff]
      %v2183 = vld [vmem:[#allocation4 + $0xc8] sm:$0xff]
      %v2184 = vld [vmem:[#allocation4 + $0xd8] sm:$0xff]
      %v2185 = vld [vmem:[#allocation4 + $0xe0] sm:$0xff]
      %v2186 = vld [vmem:[#allocation4 + $0xf0] sm:$0xff]
      %v2187 = vld [vmem:[#allocation4 + $0xf8] sm:$0xff]
      %v2188 = vld [vmem:[#allocation4 + $0x108] sm:$0xff]
      %v2189 = vld [vmem:[#allocation4 + $0x110] sm:$0xff]
      %v2190 = vld [vmem:[#allocation4 + $0x120] sm:$0xff]
      %v2191 = vld [vmem:[#allocation4 + $0x128] sm:$0xff]
      %v2192 = vld [vmem:[#allocation4 + $0x138] sm:$0xff]
      %v2193 = vld [vmem:[#allocation4 + $0x140] sm:$0xff]
      %v2194 = vld [vmem:[#allocation4 + $0x150] sm:$0xff]
      %v2195 = vld [vmem:[#allocation4 + $0x158] sm:$0xff]
      %v2196 = vld [vmem:[#allocation4 + $0x168] sm:$0xff]
      %v2197 = vld [vmem:[#allocation4 + $0x170] sm:$0xff]
      %v2198 = vpack.c.bf16 %v2167, %v2166
      %v2199 = vpack.c.bf16 %v2169, %v2168
      %v2200 = vpack.c.bf16 %v2171, %v2170
      %v2201 = vpack.c.bf16 %v2173, %v2172
      %v2202 = vpack.c.bf16 %v2175, %v2174
      %v2203 = vpack.c.bf16 %v2177, %v2176
      %v2204 = vpack.c.bf16 %v2179, %v2178
      %v2205 = vpack.c.bf16 %v2181, %v2180
      %v2206 = vpack.c.bf16 %v2183, %v2182
      %v2207 = vpack.c.bf16 %v2185, %v2184
      %v2208 = vpack.c.bf16 %v2187, %v2186
      %v2209 = vpack.c.bf16 %v2189, %v2188
      %v2210 = vpack.c.bf16 %v2191, %v2190
      %v2211 = vpack.c.bf16 %v2193, %v2192
      %v2212 = vpack.c.bf16 %v2195, %v2194
      %v2213 = vpack.c.bf16 %v2197, %v2196
      %2214 = vst.msk [vmem:[#allocation5] sm:$0xff] %vm448, %v2198
      %2215 = vst.msk [vmem:[#allocation5 + $0x8] sm:$0xff] %vm448, %v2199
      %2216 = vst.msk [vmem:[#allocation5 + $0x10] sm:$0xff] %vm448, %v2200
      %2217 = vst.msk [vmem:[#allocation5 + $0x18] sm:$0xff] %vm448, %v2201
      %2218 = vst.msk [vmem:[#allocation5 + $0x20] sm:$0xff] %vm448, %v2202
      %2219 = vst.msk [vmem:[#allocation5 + $0x28] sm:$0xff] %vm448, %v2203
      %2220 = vst.msk [vmem:[#allocation5 + $0x30] sm:$0xff] %vm448, %v2204
      %2221 = vst.msk [vmem:[#allocation5 + $0x38] sm:$0xff] %vm448, %v2205
      %2222 = vst.msk [vmem:[#allocation5 + $0x40] sm:$0xff] %vm448, %v2206
      %2223 = vst.msk [vmem:[#allocation5 + $0x48] sm:$0xff] %vm448, %v2207
      %2224 = vst.msk [vmem:[#allocation5 + $0x50] sm:$0xff] %vm448, %v2208
      %2225 = vst.msk [vmem:[#allocation5 + $0x58] sm:$0xff] %vm448, %v2209
      %2226 = vst.msk [vmem:[#allocation5 + $0x60] sm:$0xff] %vm448, %v2210
      %2227 = vst.msk [vmem:[#allocation5 + $0x68] sm:$0xff] %vm448, %v2211
      %2228 = vst.msk [vmem:[#allocation5 + $0x70] sm:$0xff] %vm448, %v2212
      %2229 = vst.msk [vmem:[#allocation5 + $0x78] sm:$0xff] %vm448, %v2213
      %v2230 = vld [vmem:[#allocation4 + $0x1] sm:$0xff]
      %v2231 = vld [vmem:[#allocation4 + $0x9] sm:$0xff]
      %v2232 = vld [vmem:[#allocation4 + $0x19] sm:$0xff]
      %v2233 = vld [vmem:[#allocation4 + $0x21] sm:$0xff]
      %v2234 = vld [vmem:[#allocation4 + $0x31] sm:$0xff]
      %v2235 = vld [vmem:[#allocation4 + $0x39] sm:$0xff]
      %v2236 = vld [vmem:[#allocation4 + $0x49] sm:$0xff]
      %v2237 = vld [vmem:[#allocation4 + $0x51] sm:$0xff]
      %v2238 = vld [vmem:[#allocation4 + $0x61] sm:$0xff]
      %v2239 = vld [vmem:[#allocation4 + $0x69] sm:$0xff]
      %v2240 = vld [vmem:[#allocation4 + $0x79] sm:$0xff]
      %v2241 = vld [vmem:[#allocation4 + $0x81] sm:$0xff]
      %v2242 = vld [vmem:[#allocation4 + $0x91] sm:$0xff]
      %v2243 = vld [vmem:[#allocation4 + $0x99] sm:$0xff]
      %v2244 = vld [vmem:[#allocation4 + $0xa9] sm:$0xff]
      %v2245 = vld [vmem:[#allocation4 + $0xb1] sm:$0xff]
      %v2246 = vld [vmem:[#allocation4 + $0xc1] sm:$0xff]
      %v2247 = vld [vmem:[#allocation4 + $0xc9] sm:$0xff]
      %v2248 = vld [vmem:[#allocation4 + $0xd9] sm:$0xff]
      %v2249 = vld [vmem:[#allocation4 + $0xe1] sm:$0xff]
      %v2250 = vld [vmem:[#allocation4 + $0xf1] sm:$0xff]
      %v2251 = vld [vmem:[#allocation4 + $0xf9] sm:$0xff]
      %v2252 = vld [vmem:[#allocation4 + $0x109] sm:$0xff]
      %v2253 = vld [vmem:[#allocation4 + $0x111] sm:$0xff]
      %v2254 = vld [vmem:[#allocation4 + $0x121] sm:$0xff]
      %v2255 = vld [vmem:[#allocation4 + $0x129] sm:$0xff]
      %v2256 = vld [vmem:[#allocation4 + $0x139] sm:$0xff]
      %v2257 = vld [vmem:[#allocation4 + $0x141] sm:$0xff]
      %v2258 = vld [vmem:[#allocation4 + $0x151] sm:$0xff]
      %v2259 = vld [vmem:[#allocation4 + $0x159] sm:$0xff]
      %v2260 = vld [vmem:[#allocation4 + $0x169] sm:$0xff]
      %v2261 = vld [vmem:[#allocation4 + $0x171] sm:$0xff]
      %v2262 = vpack.c.bf16 %v2231, %v2230
      %v2263 = vpack.c.bf16 %v2233, %v2232
      %v2264 = vpack.c.bf16 %v2235, %v2234
      %v2265 = vpack.c.bf16 %v2237, %v2236
      %v2266 = vpack.c.bf16 %v2239, %v2238
      %v2267 = vpack.c.bf16 %v2241, %v2240
      %v2268 = vpack.c.bf16 %v2243, %v2242
      %v2269 = vpack.c.bf16 %v2245, %v2244
      %v2270 = vpack.c.bf16 %v2247, %v2246
      %v2271 = vpack.c.bf16 %v2249, %v2248
      %v2272 = vpack.c.bf16 %v2251, %v2250
      %v2273 = vpack.c.bf16 %v2253, %v2252
      %v2274 = vpack.c.bf16 %v2255, %v2254
      %v2275 = vpack.c.bf16 %v2257, %v2256
      %v2276 = vpack.c.bf16 %v2259, %v2258
      %v2277 = vpack.c.bf16 %v2261, %v2260
      %2294 = vrot.lane.b32.xlu0 %v2262, 8
      %v2295 = vpop.permute.xlu0 %2294
      %2296 = vrot.lane.b32.xlu0 %v2263, 8
      %v2297 = vpop.permute.xlu0 %2296
      %2298 = vrot.lane.b32.xlu0 %v2264, 8
      %v2299 = vpop.permute.xlu0 %2298
      %2300 = vrot.lane.b32.xlu0 %v2265, 8
      %v2301 = vpop.permute.xlu0 %2300
      %2302 = vrot.lane.b32.xlu0 %v2266, 8
      %v2303 = vpop.permute.xlu0 %2302
      %2304 = vrot.lane.b32.xlu0 %v2267, 8
      %v2305 = vpop.permute.xlu0 %2304
      %2306 = vrot.lane.b32.xlu0 %v2268, 8
      %v2307 = vpop.permute.xlu0 %2306
      %2308 = vrot.lane.b32.xlu0 %v2269, 8
      %v2309 = vpop.permute.xlu0 %2308
      %2310 = vrot.lane.b32.xlu0 %v2270, 8
      %v2311 = vpop.permute.xlu0 %2310
      %2312 = vrot.lane.b32.xlu0 %v2271, 8
      %v2313 = vpop.permute.xlu0 %2312
      %2314 = vrot.lane.b32.xlu0 %v2272, 8
      %v2315 = vpop.permute.xlu0 %2314
      %2316 = vrot.lane.b32.xlu0 %v2273, 8
      %v2317 = vpop.permute.xlu0 %2316
      %2318 = vrot.lane.b32.xlu0 %v2274, 8
      %v2319 = vpop.permute.xlu0 %2318
      %2320 = vrot.lane.b32.xlu0 %v2275, 8
      %v2321 = vpop.permute.xlu0 %2320
      %2322 = vrot.lane.b32.xlu0 %v2276, 8
      %v2323 = vpop.permute.xlu0 %2322
      %2324 = vrot.lane.b32.xlu0 %v2277, 8
      %v2325 = vpop.permute.xlu0 %2324
      %vm2342 = vcmask 130112
      %2343 = vst.msk [vmem:[#allocation5] sm:$0xff] %vm2342, %v2295
      %2344 = vst.msk [vmem:[#allocation5 + $0x8] sm:$0xff] %vm2342, %v2297
      %2345 = vst.msk [vmem:[#allocation5 + $0x10] sm:$0xff] %vm2342, %v2299
      %2346 = vst.msk [vmem:[#allocation5 + $0x18] sm:$0xff] %vm2342, %v2301
      %2347 = vst.msk [vmem:[#allocation5 + $0x20] sm:$0xff] %vm2342, %v2303
      %2348 = vst.msk [vmem:[#allocation5 + $0x28] sm:$0xff] %vm2342, %v2305
      %2349 = vst.msk [vmem:[#allocation5 + $0x30] sm:$0xff] %vm2342, %v2307
      %2350 = vst.msk [vmem:[#allocation5 + $0x38] sm:$0xff] %vm2342, %v2309
      %2351 = vst.msk [vmem:[#allocation5 + $0x40] sm:$0xff] %vm2342, %v2311
      %2352 = vst.msk [vmem:[#allocation5 + $0x48] sm:$0xff] %vm2342, %v2313
      %2353 = vst.msk [vmem:[#allocation5 + $0x50] sm:$0xff] %vm2342, %v2315
      %2354 = vst.msk [vmem:[#allocation5 + $0x58] sm:$0xff] %vm2342, %v2317
      %2355 = vst.msk [vmem:[#allocation5 + $0x60] sm:$0xff] %vm2342, %v2319
      %2356 = vst.msk [vmem:[#allocation5 + $0x68] sm:$0xff] %vm2342, %v2321
      %2357 = vst.msk [vmem:[#allocation5 + $0x70] sm:$0xff] %vm2342, %v2323
      %2358 = vst.msk [vmem:[#allocation5 + $0x78] sm:$0xff] %vm2342, %v2325
      %v2359 = vld [vmem:[#allocation4 + $0x2] sm:$0xff]
      %v2360 = vld [vmem:[#allocation4 + $0xa] sm:$0xff]
      %v2361 = vld [vmem:[#allocation4 + $0x1a] sm:$0xff]
      %v2362 = vld [vmem:[#allocation4 + $0x22] sm:$0xff]
      %v2363 = vld [vmem:[#allocation4 + $0x32] sm:$0xff]
      %v2364 = vld [vmem:[#allocation4 + $0x3a] sm:$0xff]
      %v2365 = vld [vmem:[#allocation4 + $0x4a] sm:$0xff]
      %v2366 = vld [vmem:[#allocation4 + $0x52] sm:$0xff]
      %v2367 = vld [vmem:[#allocation4 + $0x62] sm:$0xff]
      %v2368 = vld [vmem:[#allocation4 + $0x6a] sm:$0xff]
      %v2369 = vld [vmem:[#allocation4 + $0x7a] sm:$0xff]
      %v2370 = vld [vmem:[#allocation4 + $0x82] sm:$0xff]
      %v2371 = vld [vmem:[#allocation4 + $0x92] sm:$0xff]
      %v2372 = vld [vmem:[#allocation4 + $0x9a] sm:$0xff]
      %v2373 = vld [vmem:[#allocation4 + $0xaa] sm:$0xff]
      %v2374 = vld [vmem:[#allocation4 + $0xb2] sm:$0xff]
      %v2375 = vld [vmem:[#allocation4 + $0xc2] sm:$0xff]
      %v2376 = vld [vmem:[#allocation4 + $0xca] sm:$0xff]
      %v2377 = vld [vmem:[#allocation4 + $0xda] sm:$0xff]
      %v2378 = vld [vmem:[#allocation4 + $0xe2] sm:$0xff]
      %v2379 = vld [vmem:[#allocation4 + $0xf2] sm:$0xff]
      %v2380 = vld [vmem:[#allocation4 + $0xfa] sm:$0xff]
      %v2381 = vld [vmem:[#allocation4 + $0x10a] sm:$0xff]
      %v2382 = vld [vmem:[#allocation4 + $0x112] sm:$0xff]
      %v2383 = vld [vmem:[#allocation4 + $0x122] sm:$0xff]
      %v2384 = vld [vmem:[#allocation4 + $0x12a] sm:$0xff]
      %v2385 = vld [vmem:[#allocation4 + $0x13a] sm:$0xff]
      %v2386 = vld [vmem:[#allocation4 + $0x142] sm:$0xff]
      %v2387 = vld [vmem:[#allocation4 + $0x152] sm:$0xff]
      %v2388 = vld [vmem:[#allocation4 + $0x15a] sm:$0xff]
      %v2389 = vld [vmem:[#allocation4 + $0x16a] sm:$0xff]
      %v2390 = vld [vmem:[#allocation4 + $0x172] sm:$0xff]
      %v2391 = vpack.c.bf16 %v2360, %v2359
      %v2392 = vpack.c.bf16 %v2362, %v2361
      %v2393 = vpack.c.bf16 %v2364, %v2363
      %v2394 = vpack.c.bf16 %v2366, %v2365
      %v2395 = vpack.c.bf16 %v2368, %v2367
      %v2396 = vpack.c.bf16 %v2370, %v2369
      %v2397 = vpack.c.bf16 %v2372, %v2371
      %v2398 = vpack.c.bf16 %v2374, %v2373
      %v2399 = vpack.c.bf16 %v2376, %v2375
      %v2400 = vpack.c.bf16 %v2378, %v2377
      %v2401 = vpack.c.bf16 %v2380, %v2379
      %v2402 = vpack.c.bf16 %v2382, %v2381
      %v2403 = vpack.c.bf16 %v2384, %v2383
      %v2404 = vpack.c.bf16 %v2386, %v2385
      %v2405 = vpack.c.bf16 %v2388, %v2387
      %v2406 = vpack.c.bf16 %v2390, %v2389
      %2423 = vrot.lane.b32.xlu0 %v2391, 16
      %v2424 = vpop.permute.xlu0 %2423
      %2425 = vrot.lane.b32.xlu0 %v2392, 16
      %v2426 = vpop.permute.xlu0 %2425
      %2427 = vrot.lane.b32.xlu0 %v2393, 16
      %v2428 = vpop.permute.xlu0 %2427
      %2429 = vrot.lane.b32.xlu0 %v2394, 16
      %v2430 = vpop.permute.xlu0 %2429
      %2431 = vrot.lane.b32.xlu0 %v2395, 16
      %v2432 = vpop.permute.xlu0 %2431
      %2433 = vrot.lane.b32.xlu0 %v2396, 16
      %v2434 = vpop.permute.xlu0 %2433
      %2435 = vrot.lane.b32.xlu0 %v2397, 16
      %v2436 = vpop.permute.xlu0 %2435
      %2437 = vrot.lane.b32.xlu0 %v2398, 16
      %v2438 = vpop.permute.xlu0 %2437
      %2439 = vrot.lane.b32.xlu0 %v2399, 16
      %v2440 = vpop.permute.xlu0 %2439
      %2441 = vrot.lane.b32.xlu0 %v2400, 16
      %v2442 = vpop.permute.xlu0 %2441
      %2443 = vrot.lane.b32.xlu0 %v2401, 16
      %v2444 = vpop.permute.xlu0 %2443
      %2445 = vrot.lane.b32.xlu0 %v2402, 16
      %v2446 = vpop.permute.xlu0 %2445
      %2447 = vrot.lane.b32.xlu0 %v2403, 16
      %v2448 = vpop.permute.xlu0 %2447
      %2449 = vrot.lane.b32.xlu0 %v2404, 16
      %v2450 = vpop.permute.xlu0 %2449
      %2451 = vrot.lane.b32.xlu0 %v2405, 16
      %v2452 = vpop.permute.xlu0 %2451
      %2453 = vrot.lane.b32.xlu0 %v2406, 16
      %v2454 = vpop.permute.xlu0 %2453
      %vm2471 = vcmask 195712
      %2472 = vst.msk [vmem:[#allocation5] sm:$0xff] %vm2471, %v2424
      %2473 = vst.msk [vmem:[#allocation5 + $0x8] sm:$0xff] %vm2471, %v2426
      %2474 = vst.msk [vmem:[#allocation5 + $0x10] sm:$0xff] %vm2471, %v2428
      %2475 = vst.msk [vmem:[#allocation5 + $0x18] sm:$0xff] %vm2471, %v2430
      %2476 = vst.msk [vmem:[#allocation5 + $0x20] sm:$0xff] %vm2471, %v2432
      %2477 = vst.msk [vmem:[#allocation5 + $0x28] sm:$0xff] %vm2471, %v2434
      %2478 = vst.msk [vmem:[#allocation5 + $0x30] sm:$0xff] %vm2471, %v2436
      %2479 = vst.msk [vmem:[#allocation5 + $0x38] sm:$0xff] %vm2471, %v2438
      %2480 = vst.msk [vmem:[#allocation5 + $0x40] sm:$0xff] %vm2471, %v2440
      %2481 = vst.msk [vmem:[#allocation5 + $0x48] sm:$0xff] %vm2471, %v2442
      %2482 = vst.msk [vmem:[#allocation5 + $0x50] sm:$0xff] %vm2471, %v2444
      %2483 = vst.msk [vmem:[#allocation5 + $0x58] sm:$0xff] %vm2471, %v2446
      %2484 = vst.msk [vmem:[#allocation5 + $0x60] sm:$0xff] %vm2471, %v2448
      %2485 = vst.msk [vmem:[#allocation5 + $0x68] sm:$0xff] %vm2471, %v2450
      %2486 = vst.msk [vmem:[#allocation5 + $0x70] sm:$0xff] %vm2471, %v2452
      %2487 = vst.msk [vmem:[#allocation5 + $0x78] sm:$0xff] %vm2471, %v2454
      %v2488 = vld [vmem:[%s2133] sm:$0xff]
      %v2489 = vld [vmem:[%s2133 + $0x8] sm:$0xff]
      %v2490 = vld [vmem:[%s2133 + $0x18] sm:$0xff]
      %v2491 = vld [vmem:[%s2133 + $0x20] sm:$0xff]
      %v2492 = vld [vmem:[%s2133 + $0x30] sm:$0xff]
      %v2493 = vld [vmem:[%s2133 + $0x38] sm:$0xff]
      %v2494 = vld [vmem:[%s2133 + $0x48] sm:$0xff]
      %v2495 = vld [vmem:[%s2133 + $0x50] sm:$0xff]
      %v2496 = vld [vmem:[%s2133 + $0x60] sm:$0xff]
      %v2497 = vld [vmem:[%s2133 + $0x68] sm:$0xff]
      %v2498 = vld [vmem:[%s2133 + $0x78] sm:$0xff]
      %v2499 = vld [vmem:[%s2133 + $0x80] sm:$0xff]
      %v2500 = vld [vmem:[%s2133 + $0x90] sm:$0xff]
      %v2501 = vld [vmem:[%s2133 + $0x98] sm:$0xff]
      %v2502 = vld [vmem:[%s2133 + $0xa8] sm:$0xff]
      %v2503 = vld [vmem:[%s2133 + $0xb0] sm:$0xff]
      %v2504 = vld [vmem:[%s2133 + $0xc0] sm:$0xff]
      %v2505 = vld [vmem:[%s2133 + $0xc8] sm:$0xff]
      %v2506 = vld [vmem:[%s2133 + $0xd8] sm:$0xff]
      %v2507 = vld [vmem:[%s2133 + $0xe0] sm:$0xff]
      %v2508 = vld [vmem:[%s2133 + $0xf0] sm:$0xff]
      %v2509 = vld [vmem:[%s2133 + $0xf8] sm:$0xff]
      %v2510 = vld [vmem:[%s2133 + $0x108] sm:$0xff]
      %v2511 = vld [vmem:[%s2133 + $0x110] sm:$0xff]
      %v2512 = vld [vmem:[%s2133 + $0x120] sm:$0xff]
      %v2513 = vld [vmem:[%s2133 + $0x128] sm:$0xff]
      %v2514 = vld [vmem:[%s2133 + $0x138] sm:$0xff]
      %v2515 = vld [vmem:[%s2133 + $0x140] sm:$0xff]
      %v2516 = vld [vmem:[%s2133 + $0x150] sm:$0xff]
      %v2517 = vld [vmem:[%s2133 + $0x158] sm:$0xff]
      %v2518 = vld [vmem:[%s2133 + $0x168] sm:$0xff]
      %v2519 = vld [vmem:[%s2133 + $0x170] sm:$0xff]
      %v2520 = vpack.c.bf16 %v2489, %v2488
      %v2521 = vpack.c.bf16 %v2491, %v2490
      %v2522 = vpack.c.bf16 %v2493, %v2492
      %v2523 = vpack.c.bf16 %v2495, %v2494
      %v2524 = vpack.c.bf16 %v2497, %v2496
      %v2525 = vpack.c.bf16 %v2499, %v2498
      %v2526 = vpack.c.bf16 %v2501, %v2500
      %v2527 = vpack.c.bf16 %v2503, %v2502
      %v2528 = vpack.c.bf16 %v2505, %v2504
      %v2529 = vpack.c.bf16 %v2507, %v2506
      %v2530 = vpack.c.bf16 %v2509, %v2508
      %v2531 = vpack.c.bf16 %v2511, %v2510
      %v2532 = vpack.c.bf16 %v2513, %v2512
      %v2533 = vpack.c.bf16 %v2515, %v2514
      %v2534 = vpack.c.bf16 %v2517, %v2516
      %v2535 = vpack.c.bf16 %v2519, %v2518
      %2552 = vrot.lane.b32.xlu0 %v2520, 24
      %v2553 = vpop.permute.xlu0 %2552
      %2554 = vrot.lane.b32.xlu0 %v2521, 24
      %v2555 = vpop.permute.xlu0 %2554
      %2556 = vrot.lane.b32.xlu0 %v2522, 24
      %v2557 = vpop.permute.xlu0 %2556
      %2558 = vrot.lane.b32.xlu0 %v2523, 24
      %v2559 = vpop.permute.xlu0 %2558
      %2560 = vrot.lane.b32.xlu0 %v2524, 24
      %v2561 = vpop.permute.xlu0 %2560
      %2562 = vrot.lane.b32.xlu0 %v2525, 24
      %v2563 = vpop.permute.xlu0 %2562
      %2564 = vrot.lane.b32.xlu0 %v2526, 24
      %v2565 = vpop.permute.xlu0 %2564
      %2566 = vrot.lane.b32.xlu0 %v2527, 24
      %v2567 = vpop.permute.xlu0 %2566
      %2568 = vrot.lane.b32.xlu0 %v2528, 24
      %v2569 = vpop.permute.xlu0 %2568
      %2570 = vrot.lane.b32.xlu0 %v2529, 24
      %v2571 = vpop.permute.xlu0 %2570
      %2572 = vrot.lane.b32.xlu0 %v2530, 24
      %v2573 = vpop.permute.xlu0 %2572
      %2574 = vrot.lane.b32.xlu0 %v2531, 24
      %v2575 = vpop.permute.xlu0 %2574
      %2576 = vrot.lane.b32.xlu0 %v2532, 24
      %v2577 = vpop.permute.xlu0 %2576
      %2578 = vrot.lane.b32.xlu0 %v2533, 24
      %v2579 = vpop.permute.xlu0 %2578
      %2580 = vrot.lane.b32.xlu0 %v2534, 24
      %v2581 = vpop.permute.xlu0 %2580
      %2582 = vrot.lane.b32.xlu0 %v2535, 24
      %v2583 = vpop.permute.xlu0 %2582
      %vm2600 = vcmask 261312
      %2601 = vst.msk [vmem:[#allocation5] sm:$0xff] %vm2600, %v2553
      %2602 = vst.msk [vmem:[#allocation5 + $0x8] sm:$0xff] %vm2600, %v2555
      %2603 = vst.msk [vmem:[#allocation5 + $0x10] sm:$0xff] %vm2600, %v2557
      %2604 = vst.msk [vmem:[#allocation5 + $0x18] sm:$0xff] %vm2600, %v2559
      %2605 = vst.msk [vmem:[#allocation5 + $0x20] sm:$0xff] %vm2600, %v2561
      %2606 = vst.msk [vmem:[#allocation5 + $0x28] sm:$0xff] %vm2600, %v2563
      %2607 = vst.msk [vmem:[#allocation5 + $0x30] sm:$0xff] %vm2600, %v2565
      %2608 = vst.msk [vmem:[#allocation5 + $0x38] sm:$0xff] %vm2600, %v2567
      %2609 = vst.msk [vmem:[#allocation5 + $0x40] sm:$0xff] %vm2600, %v2569
      %2610 = vst.msk [vmem:[#allocation5 + $0x48] sm:$0xff] %vm2600, %v2571
      %2611 = vst.msk [vmem:[#allocation5 + $0x50] sm:$0xff] %vm2600, %v2573
      %2612 = vst.msk [vmem:[#allocation5 + $0x58] sm:$0xff] %vm2600, %v2575
      %2613 = vst.msk [vmem:[#allocation5 + $0x60] sm:$0xff] %vm2600, %v2577
      %2614 = vst.msk [vmem:[#allocation5 + $0x68] sm:$0xff] %vm2600, %v2579
      %2615 = vst.msk [vmem:[#allocation5 + $0x70] sm:$0xff] %vm2600, %v2581
      %2616 = vst.msk [vmem:[#allocation5 + $0x78] sm:$0xff] %vm2600, %v2583
      %v2617 = vld [vmem:[%s2133 + $0x1] sm:$0xff]
      %v2618 = vld [vmem:[%s2133 + $0x9] sm:$0xff]
      %v2619 = vld [vmem:[%s2133 + $0x19] sm:$0xff]
      %v2620 = vld [vmem:[%s2133 + $0x21] sm:$0xff]
      %v2621 = vld [vmem:[%s2133 + $0x31] sm:$0xff]
      %v2622 = vld [vmem:[%s2133 + $0x39] sm:$0xff]
      %v2623 = vld [vmem:[%s2133 + $0x49] sm:$0xff]
      %v2624 = vld [vmem:[%s2133 + $0x51] sm:$0xff]
      %v2625 = vld [vmem:[%s2133 + $0x61] sm:$0xff]
      %v2626 = vld [vmem:[%s2133 + $0x69] sm:$0xff]
      %v2627 = vld [vmem:[%s2133 + $0x79] sm:$0xff]
      %v2628 = vld [vmem:[%s2133 + $0x81] sm:$0xff]
      %v2629 = vld [vmem:[%s2133 + $0x91] sm:$0xff]
      %v2630 = vld [vmem:[%s2133 + $0x99] sm:$0xff]
      %v2631 = vld [vmem:[%s2133 + $0xa9] sm:$0xff]
      %v2632 = vld [vmem:[%s2133 + $0xb1] sm:$0xff]
      %v2633 = vld [vmem:[%s2133 + $0xc1] sm:$0xff]
      %v2634 = vld [vmem:[%s2133 + $0xc9] sm:$0xff]
      %v2635 = vld [vmem:[%s2133 + $0xd9] sm:$0xff]
      %v2636 = vld [vmem:[%s2133 + $0xe1] sm:$0xff]
      %v2637 = vld [vmem:[%s2133 + $0xf1] sm:$0xff]
      %v2638 = vld [vmem:[%s2133 + $0xf9] sm:$0xff]
      %v2639 = vld [vmem:[%s2133 + $0x109] sm:$0xff]
      %v2640 = vld [vmem:[%s2133 + $0x111] sm:$0xff]
      %v2641 = vld [vmem:[%s2133 + $0x121] sm:$0xff]
      %v2642 = vld [vmem:[%s2133 + $0x129] sm:$0xff]
      %v2643 = vld [vmem:[%s2133 + $0x139] sm:$0xff]
      %v2644 = vld [vmem:[%s2133 + $0x141] sm:$0xff]
      %v2645 = vld [vmem:[%s2133 + $0x151] sm:$0xff]
      %v2646 = vld [vmem:[%s2133 + $0x159] sm:$0xff]
      %v2647 = vld [vmem:[%s2133 + $0x169] sm:$0xff]
      %v2648 = vld [vmem:[%s2133 + $0x171] sm:$0xff]
      %v2649 = vpack.c.bf16 %v2618, %v2617
      %v2650 = vpack.c.bf16 %v2620, %v2619
      %v2651 = vpack.c.bf16 %v2622, %v2621
      %v2652 = vpack.c.bf16 %v2624, %v2623
      %v2653 = vpack.c.bf16 %v2626, %v2625
      %v2654 = vpack.c.bf16 %v2628, %v2627
      %v2655 = vpack.c.bf16 %v2630, %v2629
      %v2656 = vpack.c.bf16 %v2632, %v2631
      %v2657 = vpack.c.bf16 %v2634, %v2633
      %v2658 = vpack.c.bf16 %v2636, %v2635
      %v2659 = vpack.c.bf16 %v2638, %v2637
      %v2660 = vpack.c.bf16 %v2640, %v2639
      %v2661 = vpack.c.bf16 %v2642, %v2641
      %v2662 = vpack.c.bf16 %v2644, %v2643
      %v2663 = vpack.c.bf16 %v2646, %v2645
      %v2664 = vpack.c.bf16 %v2648, %v2647
      %2681 = vrot.lane.b32.xlu0 %v2649, 32
      %v2682 = vpop.permute.xlu0 %2681
      %2683 = vrot.lane.b32.xlu0 %v2650, 32
      %v2684 = vpop.permute.xlu0 %2683
      %2685 = vrot.lane.b32.xlu0 %v2651, 32
      %v2686 = vpop.permute.xlu0 %2685
      %2687 = vrot.lane.b32.xlu0 %v2652, 32
      %v2688 = vpop.permute.xlu0 %2687
      %2689 = vrot.lane.b32.xlu0 %v2653, 32
      %v2690 = vpop.permute.xlu0 %2689
      %2691 = vrot.lane.b32.xlu0 %v2654, 32
      %v2692 = vpop.permute.xlu0 %2691
      %2693 = vrot.lane.b32.xlu0 %v2655, 32
      %v2694 = vpop.permute.xlu0 %2693
      %2695 = vrot.lane.b32.xlu0 %v2656, 32
      %v2696 = vpop.permute.xlu0 %2695
      %2697 = vrot.lane.b32.xlu0 %v2657, 32
      %v2698 = vpop.permute.xlu0 %2697
      %2699 = vrot.lane.b32.xlu0 %v2658, 32
      %v2700 = vpop.permute.xlu0 %2699
      %2701 = vrot.lane.b32.xlu0 %v2659, 32
      %v2702 = vpop.permute.xlu0 %2701
      %2703 = vrot.lane.b32.xlu0 %v2660, 32
      %v2704 = vpop.permute.xlu0 %2703
      %2705 = vrot.lane.b32.xlu0 %v2661, 32
      %v2706 = vpop.permute.xlu0 %2705
      %2707 = vrot.lane.b32.xlu0 %v2662, 32
      %v2708 = vpop.permute.xlu0 %2707
      %2709 = vrot.lane.b32.xlu0 %v2663, 32
      %v2710 = vpop.permute.xlu0 %2709
      %2711 = vrot.lane.b32.xlu0 %v2664, 32
      %v2712 = vpop.permute.xlu0 %2711
      %vm2729 = vcmask 326912
      %2730 = vst.msk [vmem:[#allocation5] sm:$0xff] %vm2729, %v2682
      %2731 = vst.msk [vmem:[#allocation5 + $0x8] sm:$0xff] %vm2729, %v2684
      %2732 = vst.msk [vmem:[#allocation5 + $0x10] sm:$0xff] %vm2729, %v2686
      %2733 = vst.msk [vmem:[#allocation5 + $0x18] sm:$0xff] %vm2729, %v2688
      %2734 = vst.msk [vmem:[#allocation5 + $0x20] sm:$0xff] %vm2729, %v2690
      %2735 = vst.msk [vmem:[#allocation5 + $0x28] sm:$0xff] %vm2729, %v2692
      %2736 = vst.msk [vmem:[#allocation5 + $0x30] sm:$0xff] %vm2729, %v2694
      %2737 = vst.msk [vmem:[#allocation5 + $0x38] sm:$0xff] %vm2729, %v2696
      %2738 = vst.msk [vmem:[#allocation5 + $0x40] sm:$0xff] %vm2729, %v2698
      %2739 = vst.msk [vmem:[#allocation5 + $0x48] sm:$0xff] %vm2729, %v2700
      %2740 = vst.msk [vmem:[#allocation5 + $0x50] sm:$0xff] %vm2729, %v2702
      %2741 = vst.msk [vmem:[#allocation5 + $0x58] sm:$0xff] %vm2729, %v2704
      %2742 = vst.msk [vmem:[#allocation5 + $0x60] sm:$0xff] %vm2729, %v2706
      %2743 = vst.msk [vmem:[#allocation5 + $0x68] sm:$0xff] %vm2729, %v2708
      %2744 = vst.msk [vmem:[#allocation5 + $0x70] sm:$0xff] %vm2729, %v2710
      %2745 = vst.msk [vmem:[#allocation5 + $0x78] sm:$0xff] %vm2729, %v2712
      %v2746 = vld [vmem:[%s2133 + $0x2] sm:$0xff]
      %v2747 = vld [vmem:[%s2133 + $0xa] sm:$0xff]
      %v2748 = vld [vmem:[%s2133 + $0x1a] sm:$0xff]
      %v2749 = vld [vmem:[%s2133 + $0x22] sm:$0xff]
      %v2750 = vld [vmem:[%s2133 + $0x32] sm:$0xff]
      %v2751 = vld [vmem:[%s2133 + $0x3a] sm:$0xff]
      %v2752 = vld [vmem:[%s2133 + $0x4a] sm:$0xff]
      %v2753 = vld [vmem:[%s2133 + $0x52] sm:$0xff]
      %v2754 = vld [vmem:[%s2133 + $0x62] sm:$0xff]
      %v2755 = vld [vmem:[%s2133 + $0x6a] sm:$0xff]
      %v2756 = vld [vmem:[%s2133 + $0x7a] sm:$0xff]
      %v2757 = vld [vmem:[%s2133 + $0x82] sm:$0xff]
      %v2758 = vld [vmem:[%s2133 + $0x92] sm:$0xff]
      %v2759 = vld [vmem:[%s2133 + $0x9a] sm:$0xff]
      %v2760 = vld [vmem:[%s2133 + $0xaa] sm:$0xff]
      %v2761 = vld [vmem:[%s2133 + $0xb2] sm:$0xff]
      %v2762 = vld [vmem:[%s2133 + $0xc2] sm:$0xff]
      %v2763 = vld [vmem:[%s2133 + $0xca] sm:$0xff]
      %v2764 = vld [vmem:[%s2133 + $0xda] sm:$0xff]
      %v2765 = vld [vmem:[%s2133 + $0xe2] sm:$0xff]
      %v2766 = vld [vmem:[%s2133 + $0xf2] sm:$0xff]
      %v2767 = vld [vmem:[%s2133 + $0xfa] sm:$0xff]
      %v2768 = vld [vmem:[%s2133 + $0x10a] sm:$0xff]
      %v2769 = vld [vmem:[%s2133 + $0x112] sm:$0xff]
      %v2770 = vld [vmem:[%s2133 + $0x122] sm:$0xff]
      %v2771 = vld [vmem:[%s2133 + $0x12a] sm:$0xff]
      %v2772 = vld [vmem:[%s2133 + $0x13a] sm:$0xff]
      %v2773 = vld [vmem:[%s2133 + $0x142] sm:$0xff]
      %v2774 = vld [vmem:[%s2133 + $0x152] sm:$0xff]
      %v2775 = vld [vmem:[%s2133 + $0x15a] sm:$0xff]
      %v2776 = vld [vmem:[%s2133 + $0x16a] sm:$0xff]
      %v2777 = vld [vmem:[%s2133 + $0x172] sm:$0xff]
      %v2778 = vpack.c.bf16 %v2747, %v2746
      %v2779 = vpack.c.bf16 %v2749, %v2748
      %v2780 = vpack.c.bf16 %v2751, %v2750
      %v2781 = vpack.c.bf16 %v2753, %v2752
      %v2782 = vpack.c.bf16 %v2755, %v2754
      %v2783 = vpack.c.bf16 %v2757, %v2756
      %v2784 = vpack.c.bf16 %v2759, %v2758
      %v2785 = vpack.c.bf16 %v2761, %v2760
      %v2786 = vpack.c.bf16 %v2763, %v2762
      %v2787 = vpack.c.bf16 %v2765, %v2764
      %v2788 = vpack.c.bf16 %v2767, %v2766
      %v2789 = vpack.c.bf16 %v2769, %v2768
      %v2790 = vpack.c.bf16 %v2771, %v2770
      %v2791 = vpack.c.bf16 %v2773, %v2772
      %v2792 = vpack.c.bf16 %v2775, %v2774
      %v2793 = vpack.c.bf16 %v2777, %v2776
      %2810 = vrot.lane.b32.xlu0 %v2778, 40
      %v2811 = vpop.permute.xlu0 %2810
      %2812 = vrot.lane.b32.xlu0 %v2779, 40
      %v2813 = vpop.permute.xlu0 %2812
      %2814 = vrot.lane.b32.xlu0 %v2780, 40
      %v2815 = vpop.permute.xlu0 %2814
      %2816 = vrot.lane.b32.xlu0 %v2781, 40
      %v2817 = vpop.permute.xlu0 %2816
      %2818 = vrot.lane.b32.xlu0 %v2782, 40
      %v2819 = vpop.permute.xlu0 %2818
      %2820 = vrot.lane.b32.xlu0 %v2783, 40
      %v2821 = vpop.permute.xlu0 %2820
      %2822 = vrot.lane.b32.xlu0 %v2784, 40
      %v2823 = vpop.permute.xlu0 %2822
      %2824 = vrot.lane.b32.xlu0 %v2785, 40
      %v2825 = vpop.permute.xlu0 %2824
      %2826 = vrot.lane.b32.xlu0 %v2786, 40
      %v2827 = vpop.permute.xlu0 %2826
      %2828 = vrot.lane.b32.xlu0 %v2787, 40
      %v2829 = vpop.permute.xlu0 %2828
      %2830 = vrot.lane.b32.xlu0 %v2788, 40
      %v2831 = vpop.permute.xlu0 %2830
      %2832 = vrot.lane.b32.xlu0 %v2789, 40
      %v2833 = vpop.permute.xlu0 %2832
      %2834 = vrot.lane.b32.xlu0 %v2790, 40
      %v2835 = vpop.permute.xlu0 %2834
      %2836 = vrot.lane.b32.xlu0 %v2791, 40
      %v2837 = vpop.permute.xlu0 %2836
      %2838 = vrot.lane.b32.xlu0 %v2792, 40
      %v2839 = vpop.permute.xlu0 %2838
      %2840 = vrot.lane.b32.xlu0 %v2793, 40
      %v2841 = vpop.permute.xlu0 %2840
      %vm2858 = vcmask 392512
      %2859 = vst.msk [vmem:[#allocation5] sm:$0xff] %vm2858, %v2811
      %2860 = vst.msk [vmem:[#allocation5 + $0x8] sm:$0xff] %vm2858, %v2813
      %2861 = vst.msk [vmem:[#allocation5 + $0x10] sm:$0xff] %vm2858, %v2815
      %2862 = vst.msk [vmem:[#allocation5 + $0x18] sm:$0xff] %vm2858, %v2817
      %2863 = vst.msk [vmem:[#allocation5 + $0x20] sm:$0xff] %vm2858, %v2819
      %2864 = vst.msk [vmem:[#allocation5 + $0x28] sm:$0xff] %vm2858, %v2821
      %2865 = vst.msk [vmem:[#allocation5 + $0x30] sm:$0xff] %vm2858, %v2823
      %2866 = vst.msk [vmem:[#allocation5 + $0x38] sm:$0xff] %vm2858, %v2825
      %2867 = vst.msk [vmem:[#allocation5 + $0x40] sm:$0xff] %vm2858, %v2827
      %2868 = vst.msk [vmem:[#allocation5 + $0x48] sm:$0xff] %vm2858, %v2829
      %2869 = vst.msk [vmem:[#allocation5 + $0x50] sm:$0xff] %vm2858, %v2831
      %2870 = vst.msk [vmem:[#allocation5 + $0x58] sm:$0xff] %vm2858, %v2833
      %2871 = vst.msk [vmem:[#allocation5 + $0x60] sm:$0xff] %vm2858, %v2835
      %2872 = vst.msk [vmem:[#allocation5 + $0x68] sm:$0xff] %vm2858, %v2837
      %2873 = vst.msk [vmem:[#allocation5 + $0x70] sm:$0xff] %vm2858, %v2839
      %2874 = vst.msk [vmem:[#allocation5 + $0x78] sm:$0xff] %vm2858, %v2841
      %s2875 = scalar_lea.vmem [#allocation4], 48
      %v2876 = vld [vmem:[%s2875] sm:$0xff]
      %v2877 = vld [vmem:[%s2875 + $0x8] sm:$0xff]
      %v2878 = vld [vmem:[%s2875 + $0x18] sm:$0xff]
      %v2879 = vld [vmem:[%s2875 + $0x20] sm:$0xff]
      %v2880 = vld [vmem:[%s2875 + $0x30] sm:$0xff]
      %v2881 = vld [vmem:[%s2875 + $0x38] sm:$0xff]
      %v2882 = vld [vmem:[%s2875 + $0x48] sm:$0xff]
      %v2883 = vld [vmem:[%s2875 + $0x50] sm:$0xff]
      %v2884 = vld [vmem:[%s2875 + $0x60] sm:$0xff]
      %v2885 = vld [vmem:[%s2875 + $0x68] sm:$0xff]
      %v2886 = vld [vmem:[%s2875 + $0x78] sm:$0xff]
      %v2887 = vld [vmem:[%s2875 + $0x80] sm:$0xff]
      %v2888 = vld [vmem:[%s2875 + $0x90] sm:$0xff]
      %v2889 = vld [vmem:[%s2875 + $0x98] sm:$0xff]
      %v2890 = vld [vmem:[%s2875 + $0xa8] sm:$0xff]
      %v2891 = vld [vmem:[%s2875 + $0xb0] sm:$0xff]
      %v2892 = vld [vmem:[%s2875 + $0xc0] sm:$0xff]
      %v2893 = vld [vmem:[%s2875 + $0xc8] sm:$0xff]
      %v2894 = vld [vmem:[%s2875 + $0xd8] sm:$0xff]
      %v2895 = vld [vmem:[%s2875 + $0xe0] sm:$0xff]
      %v2896 = vld [vmem:[%s2875 + $0xf0] sm:$0xff]
      %v2897 = vld [vmem:[%s2875 + $0xf8] sm:$0xff]
      %v2898 = vld [vmem:[%s2875 + $0x108] sm:$0xff]
      %v2899 = vld [vmem:[%s2875 + $0x110] sm:$0xff]
      %v2900 = vld [vmem:[%s2875 + $0x120] sm:$0xff]
      %v2901 = vld [vmem:[%s2875 + $0x128] sm:$0xff]
      %v2902 = vld [vmem:[%s2875 + $0x138] sm:$0xff]
      %v2903 = vld [vmem:[%s2875 + $0x140] sm:$0xff]
      %v2904 = vld [vmem:[%s2875 + $0x150] sm:$0xff]
      %v2905 = vld [vmem:[%s2875 + $0x158] sm:$0xff]
      %v2906 = vld [vmem:[%s2875 + $0x168] sm:$0xff]
      %v2907 = vld [vmem:[%s2875 + $0x170] sm:$0xff]
      %v2908 = vpack.c.bf16 %v2877, %v2876
      %v2909 = vpack.c.bf16 %v2879, %v2878
      %v2910 = vpack.c.bf16 %v2881, %v2880
      %v2911 = vpack.c.bf16 %v2883, %v2882
      %v2912 = vpack.c.bf16 %v2885, %v2884
      %v2913 = vpack.c.bf16 %v2887, %v2886
      %v2914 = vpack.c.bf16 %v2889, %v2888
      %v2915 = vpack.c.bf16 %v2891, %v2890
      %v2916 = vpack.c.bf16 %v2893, %v2892
      %v2917 = vpack.c.bf16 %v2895, %v2894
      %v2918 = vpack.c.bf16 %v2897, %v2896
      %v2919 = vpack.c.bf16 %v2899, %v2898
      %v2920 = vpack.c.bf16 %v2901, %v2900
      %v2921 = vpack.c.bf16 %v2903, %v2902
      %v2922 = vpack.c.bf16 %v2905, %v2904
      %v2923 = vpack.c.bf16 %v2907, %v2906
      %2940 = vrot.lane.b32.xlu0 %v2908, 48
      %v2941 = vpop.permute.xlu0 %2940
      %2942 = vrot.lane.b32.xlu0 %v2909, 48
      %v2943 = vpop.permute.xlu0 %2942
      %2944 = vrot.lane.b32.xlu0 %v2910, 48
      %v2945 = vpop.permute.xlu0 %2944
      %2946 = vrot.lane.b32.xlu0 %v2911, 48
      %v2947 = vpop.permute.xlu0 %2946
      %2948 = vrot.lane.b32.xlu0 %v2912, 48
      %v2949 = vpop.permute.xlu0 %2948
      %2950 = vrot.lane.b32.xlu0 %v2913, 48
      %v2951 = vpop.permute.xlu0 %2950
      %2952 = vrot.lane.b32.xlu0 %v2914, 48
      %v2953 = vpop.permute.xlu0 %2952
      %2954 = vrot.lane.b32.xlu0 %v2915, 48
      %v2955 = vpop.permute.xlu0 %2954
      %2956 = vrot.lane.b32.xlu0 %v2916, 48
      %v2957 = vpop.permute.xlu0 %2956
      %2958 = vrot.lane.b32.xlu0 %v2917, 48
      %v2959 = vpop.permute.xlu0 %2958
      %2960 = vrot.lane.b32.xlu0 %v2918, 48
      %v2961 = vpop.permute.xlu0 %2960
      %2962 = vrot.lane.b32.xlu0 %v2919, 48
      %v2963 = vpop.permute.xlu0 %2962
      %2964 = vrot.lane.b32.xlu0 %v2920, 48
      %v2965 = vpop.permute.xlu0 %2964
      %2966 = vrot.lane.b32.xlu0 %v2921, 48
      %v2967 = vpop.permute.xlu0 %2966
      %2968 = vrot.lane.b32.xlu0 %v2922, 48
      %v2969 = vpop.permute.xlu0 %2968
      %2970 = vrot.lane.b32.xlu0 %v2923, 48
      %v2971 = vpop.permute.xlu0 %2970
      %vm2988 = vcmask 458112
      %2989 = vst.msk [vmem:[#allocation5] sm:$0xff] %vm2988, %v2941
      %2990 = vst.msk [vmem:[#allocation5 + $0x8] sm:$0xff] %vm2988, %v2943
      %2991 = vst.msk [vmem:[#allocation5 + $0x10] sm:$0xff] %vm2988, %v2945
      %2992 = vst.msk [vmem:[#allocation5 + $0x18] sm:$0xff] %vm2988, %v2947
      %2993 = vst.msk [vmem:[#allocation5 + $0x20] sm:$0xff] %vm2988, %v2949
      %2994 = vst.msk [vmem:[#allocation5 + $0x28] sm:$0xff] %vm2988, %v2951
      %2995 = vst.msk [vmem:[#allocation5 + $0x30] sm:$0xff] %vm2988, %v2953
      %2996 = vst.msk [vmem:[#allocation5 + $0x38] sm:$0xff] %vm2988, %v2955
      %2997 = vst.msk [vmem:[#allocation5 + $0x40] sm:$0xff] %vm2988, %v2957
      %2998 = vst.msk [vmem:[#allocation5 + $0x48] sm:$0xff] %vm2988, %v2959
      %2999 = vst.msk [vmem:[#allocation5 + $0x50] sm:$0xff] %vm2988, %v2961
      %3000 = vst.msk [vmem:[#allocation5 + $0x58] sm:$0xff] %vm2988, %v2963
      %3001 = vst.msk [vmem:[#allocation5 + $0x60] sm:$0xff] %vm2988, %v2965
      %3002 = vst.msk [vmem:[#allocation5 + $0x68] sm:$0xff] %vm2988, %v2967
      %3003 = vst.msk [vmem:[#allocation5 + $0x70] sm:$0xff] %vm2988, %v2969
      %3004 = vst.msk [vmem:[#allocation5 + $0x78] sm:$0xff] %vm2988, %v2971
      %v3005 = vld [vmem:[%s2875 + $0x1] sm:$0xff]
      %v3006 = vld [vmem:[%s2875 + $0x9] sm:$0xff]
      %v3007 = vld [vmem:[%s2875 + $0x19] sm:$0xff]
      %v3008 = vld [vmem:[%s2875 + $0x21] sm:$0xff]
      %v3009 = vld [vmem:[%s2875 + $0x31] sm:$0xff]
      %v3010 = vld [vmem:[%s2875 + $0x39] sm:$0xff]
      %v3011 = vld [vmem:[%s2875 + $0x49] sm:$0xff]
      %v3012 = vld [vmem:[%s2875 + $0x51] sm:$0xff]
      %v3013 = vld [vmem:[%s2875 + $0x61] sm:$0xff]
      %v3014 = vld [vmem:[%s2875 + $0x69] sm:$0xff]
      %v3015 = vld [vmem:[%s2875 + $0x79] sm:$0xff]
      %v3016 = vld [vmem:[%s2875 + $0x81] sm:$0xff]
      %v3017 = vld [vmem:[%s2875 + $0x91] sm:$0xff]
      %v3018 = vld [vmem:[%s2875 + $0x99] sm:$0xff]
      %v3019 = vld [vmem:[%s2875 + $0xa9] sm:$0xff]
      %v3020 = vld [vmem:[%s2875 + $0xb1] sm:$0xff]
      %v3021 = vld [vmem:[%s2875 + $0xc1] sm:$0xff]
      %v3022 = vld [vmem:[%s2875 + $0xc9] sm:$0xff]
      %v3023 = vld [vmem:[%s2875 + $0xd9] sm:$0xff]
      %v3024 = vld [vmem:[%s2875 + $0xe1] sm:$0xff]
      %v3025 = vld [vmem:[%s2875 + $0xf1] sm:$0xff]
      %v3026 = vld [vmem:[%s2875 + $0xf9] sm:$0xff]
      %v3027 = vld [vmem:[%s2875 + $0x109] sm:$0xff]
      %v3028 = vld [vmem:[%s2875 + $0x111] sm:$0xff]
      %v3029 = vld [vmem:[%s2875 + $0x121] sm:$0xff]
      %v3030 = vld [vmem:[%s2875 + $0x129] sm:$0xff]
      %v3031 = vld [vmem:[%s2875 + $0x139] sm:$0xff]
      %v3032 = vld [vmem:[%s2875 + $0x141] sm:$0xff]
      %v3033 = vld [vmem:[%s2875 + $0x151] sm:$0xff]
      %v3034 = vld [vmem:[%s2875 + $0x159] sm:$0xff]
      %v3035 = vld [vmem:[%s2875 + $0x169] sm:$0xff]
      %v3036 = vld [vmem:[%s2875 + $0x171] sm:$0xff]
      %v3037 = vpack.c.bf16 %v3006, %v3005
      %v3038 = vpack.c.bf16 %v3008, %v3007
      %v3039 = vpack.c.bf16 %v3010, %v3009
      %v3040 = vpack.c.bf16 %v3012, %v3011
      %v3041 = vpack.c.bf16 %v3014, %v3013
      %v3042 = vpack.c.bf16 %v3016, %v3015
      %v3043 = vpack.c.bf16 %v3018, %v3017
      %v3044 = vpack.c.bf16 %v3020, %v3019
      %v3045 = vpack.c.bf16 %v3022, %v3021
      %v3046 = vpack.c.bf16 %v3024, %v3023
      %v3047 = vpack.c.bf16 %v3026, %v3025
      %v3048 = vpack.c.bf16 %v3028, %v3027
      %v3049 = vpack.c.bf16 %v3030, %v3029
      %v3050 = vpack.c.bf16 %v3032, %v3031
      %v3051 = vpack.c.bf16 %v3034, %v3033
      %v3052 = vpack.c.bf16 %v3036, %v3035
      %3069 = vrot.lane.b32.xlu0 %v3037, 56
      %v3070 = vpop.permute.xlu0 %3069
      %3071 = vrot.lane.b32.xlu0 %v3038, 56
      %v3072 = vpop.permute.xlu0 %3071
      %3073 = vrot.lane.b32.xlu0 %v3039, 56
      %v3074 = vpop.permute.xlu0 %3073
      %3075 = vrot.lane.b32.xlu0 %v3040, 56
      %v3076 = vpop.permute.xlu0 %3075
      %3077 = vrot.lane.b32.xlu0 %v3041, 56
      %v3078 = vpop.permute.xlu0 %3077
      %3079 = vrot.lane.b32.xlu0 %v3042, 56
      %v3080 = vpop.permute.xlu0 %3079
      %3081 = vrot.lane.b32.xlu0 %v3043, 56
      %v3082 = vpop.permute.xlu0 %3081
      %3083 = vrot.lane.b32.xlu0 %v3044, 56
      %v3084 = vpop.permute.xlu0 %3083
      %3085 = vrot.lane.b32.xlu0 %v3045, 56
      %v3086 = vpop.permute.xlu0 %3085
      %3087 = vrot.lane.b32.xlu0 %v3046, 56
      %v3088 = vpop.permute.xlu0 %3087
      %3089 = vrot.lane.b32.xlu0 %v3047, 56
      %v3090 = vpop.permute.xlu0 %3089
      %3091 = vrot.lane.b32.xlu0 %v3048, 56
      %v3092 = vpop.permute.xlu0 %3091
      %3093 = vrot.lane.b32.xlu0 %v3049, 56
      %v3094 = vpop.permute.xlu0 %3093
      %3095 = vrot.lane.b32.xlu0 %v3050, 56
      %v3096 = vpop.permute.xlu0 %3095
      %3097 = vrot.lane.b32.xlu0 %v3051, 56
      %v3098 = vpop.permute.xlu0 %3097
      %3099 = vrot.lane.b32.xlu0 %v3052, 56
      %v3100 = vpop.permute.xlu0 %3099
      %vm3117 = vcmask 523712
      %3118 = vst.msk [vmem:[#allocation5] sm:$0xff] %vm3117, %v3070
      %3119 = vst.msk [vmem:[#allocation5 + $0x8] sm:$0xff] %vm3117, %v3072
      %3120 = vst.msk [vmem:[#allocation5 + $0x10] sm:$0xff] %vm3117, %v3074
      %3121 = vst.msk [vmem:[#allocation5 + $0x18] sm:$0xff] %vm3117, %v3076
      %3122 = vst.msk [vmem:[#allocation5 + $0x20] sm:$0xff] %vm3117, %v3078
      %3123 = vst.msk [vmem:[#allocation5 + $0x28] sm:$0xff] %vm3117, %v3080
      %3124 = vst.msk [vmem:[#allocation5 + $0x30] sm:$0xff] %vm3117, %v3082
      %3125 = vst.msk [vmem:[#allocation5 + $0x38] sm:$0xff] %vm3117, %v3084
      %3126 = vst.msk [vmem:[#allocation5 + $0x40] sm:$0xff] %vm3117, %v3086
      %3127 = vst.msk [vmem:[#allocation5 + $0x48] sm:$0xff] %vm3117, %v3088
      %3128 = vst.msk [vmem:[#allocation5 + $0x50] sm:$0xff] %vm3117, %v3090
      %3129 = vst.msk [vmem:[#allocation5 + $0x58] sm:$0xff] %vm3117, %v3092
      %3130 = vst.msk [vmem:[#allocation5 + $0x60] sm:$0xff] %vm3117, %v3094
      %3131 = vst.msk [vmem:[#allocation5 + $0x68] sm:$0xff] %vm3117, %v3096
      %3132 = vst.msk [vmem:[#allocation5 + $0x70] sm:$0xff] %vm3117, %v3098
      %3133 = vst.msk [vmem:[#allocation5 + $0x78] sm:$0xff] %vm3117, %v3100
      %v3134 = vld [vmem:[%s2875 + $0x2] sm:$0xff]
      %v3135 = vld [vmem:[%s2875 + $0xa] sm:$0xff]
      %v3136 = vld [vmem:[%s2875 + $0x1a] sm:$0xff]
      %v3137 = vld [vmem:[%s2875 + $0x22] sm:$0xff]
      %v3138 = vld [vmem:[%s2875 + $0x32] sm:$0xff]
      %v3139 = vld [vmem:[%s2875 + $0x3a] sm:$0xff]
      %v3140 = vld [vmem:[%s2875 + $0x4a] sm:$0xff]
      %v3141 = vld [vmem:[%s2875 + $0x52] sm:$0xff]
      %v3142 = vld [vmem:[%s2875 + $0x62] sm:$0xff]
      %v3143 = vld [vmem:[%s2875 + $0x6a] sm:$0xff]
      %v3144 = vld [vmem:[%s2875 + $0x7a] sm:$0xff]
      %v3145 = vld [vmem:[%s2875 + $0x82] sm:$0xff]
      %v3146 = vld [vmem:[%s2875 + $0x92] sm:$0xff]
      %v3147 = vld [vmem:[%s2875 + $0x9a] sm:$0xff]
      %v3148 = vld [vmem:[%s2875 + $0xaa] sm:$0xff]
      %v3149 = vld [vmem:[%s2875 + $0xb2] sm:$0xff]
      %v3150 = vld [vmem:[%s2875 + $0xc2] sm:$0xff]
      %v3151 = vld [vmem:[%s2875 + $0xca] sm:$0xff]
      %v3152 = vld [vmem:[%s2875 + $0xda] sm:$0xff]
      %v3153 = vld [vmem:[%s2875 + $0xe2] sm:$0xff]
      %v3154 = vld [vmem:[%s2875 + $0xf2] sm:$0xff]
      %v3155 = vld [vmem:[%s2875 + $0xfa] sm:$0xff]
      %v3156 = vld [vmem:[%s2875 + $0x10a] sm:$0xff]
      %v3157 = vld [vmem:[%s2875 + $0x112] sm:$0xff]
      %v3158 = vld [vmem:[%s2875 + $0x122] sm:$0xff]
      %v3159 = vld [vmem:[%s2875 + $0x12a] sm:$0xff]
      %v3160 = vld [vmem:[%s2875 + $0x13a] sm:$0xff]
      %v3161 = vld [vmem:[%s2875 + $0x142] sm:$0xff]
      %v3162 = vld [vmem:[%s2875 + $0x152] sm:$0xff]
      %v3163 = vld [vmem:[%s2875 + $0x15a] sm:$0xff]
      %v3164 = vld [vmem:[%s2875 + $0x16a] sm:$0xff]
      %v3165 = vld [vmem:[%s2875 + $0x172] sm:$0xff]
      %v3166 = vpack.c.bf16 %v3135, %v3134
      %v3167 = vpack.c.bf16 %v3137, %v3136
      %v3168 = vpack.c.bf16 %v3139, %v3138
      %v3169 = vpack.c.bf16 %v3141, %v3140
      %v3170 = vpack.c.bf16 %v3143, %v3142
      %v3171 = vpack.c.bf16 %v3145, %v3144
      %v3172 = vpack.c.bf16 %v3147, %v3146
      %v3173 = vpack.c.bf16 %v3149, %v3148
      %v3174 = vpack.c.bf16 %v3151, %v3150
      %v3175 = vpack.c.bf16 %v3153, %v3152
      %v3176 = vpack.c.bf16 %v3155, %v3154
      %v3177 = vpack.c.bf16 %v3157, %v3156
      %v3178 = vpack.c.bf16 %v3159, %v3158
      %v3179 = vpack.c.bf16 %v3161, %v3160
      %v3180 = vpack.c.bf16 %v3163, %v3162
      %v3181 = vpack.c.bf16 %v3165, %v3164
      %3198 = vrot.lane.b32.xlu0 %v3166, 64
      %v3199 = vpop.permute.xlu0 %3198
      %3200 = vrot.lane.b32.xlu0 %v3167, 64
      %v3201 = vpop.permute.xlu0 %3200
      %3202 = vrot.lane.b32.xlu0 %v3168, 64
      %v3203 = vpop.permute.xlu0 %3202
      %3204 = vrot.lane.b32.xlu0 %v3169, 64
      %v3205 = vpop.permute.xlu0 %3204
      %3206 = vrot.lane.b32.xlu0 %v3170, 64
      %v3207 = vpop.permute.xlu0 %3206
      %3208 = vrot.lane.b32.xlu0 %v3171, 64
      %v3209 = vpop.permute.xlu0 %3208
      %3210 = vrot.lane.b32.xlu0 %v3172, 64
      %v3211 = vpop.permute.xlu0 %3210
      %3212 = vrot.lane.b32.xlu0 %v3173, 64
      %v3213 = vpop.permute.xlu0 %3212
      %3214 = vrot.lane.b32.xlu0 %v3174, 64
      %v3215 = vpop.permute.xlu0 %3214
      %3216 = vrot.lane.b32.xlu0 %v3175, 64
      %v3217 = vpop.permute.xlu0 %3216
      %3218 = vrot.lane.b32.xlu0 %v3176, 64
      %v3219 = vpop.permute.xlu0 %3218
      %3220 = vrot.lane.b32.xlu0 %v3177, 64
      %v3221 = vpop.permute.xlu0 %3220
      %3222 = vrot.lane.b32.xlu0 %v3178, 64
      %v3223 = vpop.permute.xlu0 %3222
      %3224 = vrot.lane.b32.xlu0 %v3179, 64
      %v3225 = vpop.permute.xlu0 %3224
      %3226 = vrot.lane.b32.xlu0 %v3180, 64
      %v3227 = vpop.permute.xlu0 %3226
      %3228 = vrot.lane.b32.xlu0 %v3181, 64
      %v3229 = vpop.permute.xlu0 %3228
      %vm3246 = vcmask 589312
      %3247 = vst.msk [vmem:[#allocation5] sm:$0xff] %vm3246, %v3199
      %3248 = vst.msk [vmem:[#allocation5 + $0x8] sm:$0xff] %vm3246, %v3201
      %3249 = vst.msk [vmem:[#allocation5 + $0x10] sm:$0xff] %vm3246, %v3203
      %3250 = vst.msk [vmem:[#allocation5 + $0x18] sm:$0xff] %vm3246, %v3205
      %3251 = vst.msk [vmem:[#allocation5 + $0x20] sm:$0xff] %vm3246, %v3207
      %3252 = vst.msk [vmem:[#allocation5 + $0x28] sm:$0xff] %vm3246, %v3209
      %3253 = vst.msk [vmem:[#allocation5 + $0x30] sm:$0xff] %vm3246, %v3211
      %3254 = vst.msk [vmem:[#allocation5 + $0x38] sm:$0xff] %vm3246, %v3213
      %3255 = vst.msk [vmem:[#allocation5 + $0x40] sm:$0xff] %vm3246, %v3215
      %3256 = vst.msk [vmem:[#allocation5 + $0x48] sm:$0xff] %vm3246, %v3217
      %3257 = vst.msk [vmem:[#allocation5 + $0x50] sm:$0xff] %vm3246, %v3219
      %3258 = vst.msk [vmem:[#allocation5 + $0x58] sm:$0xff] %vm3246, %v3221
      %3259 = vst.msk [vmem:[#allocation5 + $0x60] sm:$0xff] %vm3246, %v3223
      %3260 = vst.msk [vmem:[#allocation5 + $0x68] sm:$0xff] %vm3246, %v3225
      %3261 = vst.msk [vmem:[#allocation5 + $0x70] sm:$0xff] %vm3246, %v3227
      %3262 = vst.msk [vmem:[#allocation5 + $0x78] sm:$0xff] %vm3246, %v3229
      %v3263 = vld [vmem:[#allocation5] sm:$0xff]
      %v3264 = vld [vmem:[#allocation5 + $0x8] sm:$0xff]
      %v3265 = vld [vmem:[#allocation5 + $0x10] sm:$0xff]
      %v3266 = vld [vmem:[#allocation5 + $0x18] sm:$0xff]
      %v3267 = vld [vmem:[#allocation5 + $0x20] sm:$0xff]
      %v3268 = vld [vmem:[#allocation5 + $0x28] sm:$0xff]
      %v3269 = vld [vmem:[#allocation5 + $0x30] sm:$0xff]
      %v3270 = vld [vmem:[#allocation5 + $0x38] sm:$0xff]
      %v3271 = vld [vmem:[#allocation5 + $0x40] sm:$0xff]
      %v3272 = vld [vmem:[#allocation5 + $0x48] sm:$0xff]
      %v3273 = vld [vmem:[#allocation5 + $0x50] sm:$0xff]
      %v3274 = vld [vmem:[#allocation5 + $0x58] sm:$0xff]
      %v3275 = vld [vmem:[#allocation5 + $0x60] sm:$0xff]
      %v3276 = vld [vmem:[#allocation5 + $0x68] sm:$0xff]
      %v3277 = vld [vmem:[#allocation5 + $0x70] sm:$0xff]
      %v3278 = vld [vmem:[#allocation5 + $0x78] sm:$0xff]
      %v3279 = vld [vmem:[%s7] sm:$0xf]
      %v3280 = vld [vmem:[%s7 + $0x4] sm:$0xf]
      %v3281 = vld [vmem:[%s7 + $0x8] sm:$0xf]
      %v3282 = vld [vmem:[%s7 + $0xc] sm:$0xf]
      %v3283 = vld [vmem:[%s7 + $0x10] sm:$0xf]
      %v3284 = vld [vmem:[%s7 + $0x14] sm:$0xf]
      %v3285 = vld [vmem:[%s7 + $0x18] sm:$0xf]
      %v3286 = vld [vmem:[%s7 + $0x1c] sm:$0xf]
      %v3287 = vld [vmem:[%s7 + $0x20] sm:$0xf]
      %v3288 = vld [vmem:[%s392] sm:$0xff]
      %v3289 = vld [vmem:[%s392 + $0x8] sm:$0xff]
      %v3290 = vld [vmem:[%s392 + $0x10] sm:$0xff]
      %v3291 = vld [vmem:[%s392 + $0x18] sm:$0xff]
      %v3292 = vld [vmem:[%s392 + $0x20] sm:$0xff]
      %v3293 = vld [vmem:[%s392 + $0x28] sm:$0xff]
      %v3294 = vld [vmem:[%s392 + $0x30] sm:$0xff]
      %v3295 = vld [vmem:[%s392 + $0x38] sm:$0xff]
      %v3296 = vld [vmem:[%s392 + $0x40] sm:$0xff]
      %v3297 = vld [vmem:[%s392 + $0x48] sm:$0xff]
      %v3298 = vld [vmem:[%s392 + $0x50] sm:$0xff]
      %v3299 = vld [vmem:[%s392 + $0x58] sm:$0xff]
      %v3300 = vld [vmem:[%s392 + $0x60] sm:$0xff]
      %v3301 = vld [vmem:[%s392 + $0x68] sm:$0xff]
      %v3302 = vld [vmem:[%s392 + $0x70] sm:$0xff]
      %v3303 = vld [vmem:[%s392 + $0x78] sm:$0xff]
      %v3304 = vld [vmem:[%s392 + $0x80] sm:$0xff]
      %v3305 = vld [vmem:[%s392 + $0x88] sm:$0xff]
      %v3306 = vld [vmem:[%s392 + $0x90] sm:$0xff]
      %v3307 = vld [vmem:[%s392 + $0x98] sm:$0xff]
      %v3308 = vld [vmem:[%s392 + $0xa0] sm:$0xff]
      %v3309 = vld [vmem:[%s392 + $0xa8] sm:$0xff]
      %v3310 = vld [vmem:[%s392 + $0xb0] sm:$0xff]
      %v3311 = vld [vmem:[%s392 + $0xb8] sm:$0xff]
      %v3312 = vld [vmem:[%s392 + $0xc0] sm:$0xff]
      %v3313 = vld [vmem:[%s392 + $0xc8] sm:$0xff]
      %v3314 = vld [vmem:[%s392 + $0xd0] sm:$0xff]
      %v3315 = vld [vmem:[%s392 + $0xd8] sm:$0xff]
      %v3316 = vld [vmem:[%s392 + $0xe0] sm:$0xff]
      %v3317 = vld [vmem:[%s392 + $0xe8] sm:$0xff]
      %v3318 = vld [vmem:[%s392 + $0xf0] sm:$0xff]
      %v3319 = vld [vmem:[%s392 + $0xf8] sm:$0xff]
      %v3320 = vpack.c.bf16 %v3289, %v3288
      %v3321 = vpack.c.bf16 %v3291, %v3290
      %v3322 = vpack.c.bf16 %v3293, %v3292
      %v3323 = vpack.c.bf16 %v3295, %v3294
      %v3324 = vpack.c.bf16 %v3297, %v3296
      %v3325 = vpack.c.bf16 %v3299, %v3298
      %v3326 = vpack.c.bf16 %v3301, %v3300
      %v3327 = vpack.c.bf16 %v3303, %v3302
      %v3328 = vpack.c.bf16 %v3305, %v3304
      %v3329 = vpack.c.bf16 %v3307, %v3306
      %v3330 = vpack.c.bf16 %v3309, %v3308
      %v3331 = vpack.c.bf16 %v3311, %v3310
      %v3332 = vpack.c.bf16 %v3313, %v3312
      %v3333 = vpack.c.bf16 %v3315, %v3314
      %v3334 = vpack.c.bf16 %v3317, %v3316
      %v3335 = vpack.c.bf16 %v3319, %v3318
      %v3336 = vld [vmem:[%s9] sm:$0x3]
      %v3337 = vld [vmem:[%s10] sm:$0x1]
      %v3339 = vlaneseq
      %v3340 = vshrl.u32 %v3339, 7
      %v3341 = vsub.s32 0, %v3340
      %v3342 = vrot.slane %v3337, %v3341
      %v3345 = vsel %vm402, %v3320, 0
      %v3348 = vsel %vm402, %v3321, 0
      %v3351 = vsel %vm402, %v3322, 0
      %v3354 = vsel %vm402, %v3323, 0
      %v3357 = vsel %vm402, %v3324, 0
      %v3360 = vsel %vm402, %v3325, 0
      %v3363 = vsel %vm402, %v3326, 0
      %v3366 = vsel %vm402, %v3327, 0
      %v3369 = vsel %vm402, %v3328, 0
      %v3372 = vsel %vm402, %v3329, 0
      %v3375 = vsel %vm402, %v3330, 0
      %v3378 = vsel %vm402, %v3331, 0
      %v3381 = vsel %vm402, %v3332, 0
      %v3384 = vsel %vm402, %v3333, 0
      %v3387 = vsel %vm402, %v3334, 0
      %v3390 = vsel %vm402, %v3335, 0
      %v3393 = vsel %vm1858, %v3336, 0
      %3395 = vmatprep.subr.bf16.mxu0 0
      %3396 = vmatpush1.bf16.msra.mxu0 %v3393
      %3397 = vmatprep.subr.bf16.mxu0 0
      %3398 = vmatpush1.bf16.msra.mxu0 0
      %3399 = vmatprep.subr.bf16.mxu0 0
      %3400 = vmatpush1.bf16.msra.mxu0 0
      %3401 = vmatprep.subr.bf16.mxu0 0
      %3402 = vmatpush1.bf16.msra.mxu0 0
      %3403 = vmatprep.subr.bf16.mxu0 0
      %3404 = vmatpush1.bf16.msra.mxu0 0
      %3405 = vmatprep.subr.bf16.mxu0 0
      %3406 = vmatpush1.bf16.msra.mxu0 0
      %3407 = vmatprep.subr.bf16.mxu0 0
      %3408 = vmatpush1.bf16.msra.mxu0 0
      %3409 = vmatprep.subr.bf16.mxu0 0
      %3410 = vmatpush1.bf16.msra.mxu0 0
      %3411 = vmatprep.subr.bf16.mxu0 0
      %3412 = vmatpush1.bf16.msra.mxu0 0
      %3413 = vmatprep.subr.bf16.mxu0 0
      %3414 = vmatpush1.bf16.msra.mxu0 0
      %3415 = vmatprep.subr.bf16.mxu0 0
      %3416 = vmatpush1.bf16.msra.mxu0 0
      %3417 = vmatprep.subr.bf16.mxu0 0
      %3418 = vmatpush1.bf16.msra.mxu0 0
      %3419 = vmatprep.subr.bf16.mxu0 0
      %3420 = vmatpush1.bf16.msra.mxu0 0
      %3421 = vmatprep.subr.bf16.mxu0 0
      %3422 = vmatpush1.bf16.msra.mxu0 0
      %3423 = vmatprep.subr.bf16.mxu0 0
      %3424 = vmatpush1.bf16.msra.mxu0 0
      %3425 = vmatprep.subr.bf16.mxu0 0
      %3426 = vmatpush1.bf16.msra.mxu0 0
      %3427 = vmatprep.mubr.bf16.mxu0 0
      %3428 = vmatmul.mubr.bf16.gmra.mrb[0].mxu0 %v3345
      %v3429 = vpop.f32.mrb[0].mxu0
      %v3430 = vadd.f32 %v3342, %v3429
      %v3431 = vpop.f32.mrb[0].mxu0
      %v3432 = vpop.f32.mrb[0].mxu0
      %v3433 = vadd.f32 %v3342, %v3432
      %v3434 = vpop.f32.mrb[0].mxu0
      %3435 = vmatprep.mubr.bf16.mxu0 0
      %3436 = vmatmul.mubr.bf16.gmra.mrb[0].mxu0 %v3348
      %v3437 = vpop.f32.mrb[0].mxu0
      %v3438 = vadd.f32 %v3342, %v3437
      %v3439 = vpop.f32.mrb[0].mxu0
      %v3440 = vpop.f32.mrb[0].mxu0
      %v3441 = vadd.f32 %v3342, %v3440
      %v3442 = vpop.f32.mrb[0].mxu0
      %3443 = vmatprep.mubr.bf16.mxu0 0
      %3444 = vmatmul.mubr.bf16.gmra.mrb[0].mxu0 %v3351
      %v3445 = vpop.f32.mrb[0].mxu0
      %v3446 = vadd.f32 %v3342, %v3445
      %v3447 = vpop.f32.mrb[0].mxu0
      %v3448 = vpop.f32.mrb[0].mxu0
      %v3449 = vadd.f32 %v3342, %v3448
      %v3450 = vpop.f32.mrb[0].mxu0
      %3451 = vmatprep.mubr.bf16.mxu0 0
      %3452 = vmatmul.mubr.bf16.gmra.mrb[0].mxu0 %v3354
      %v3453 = vpop.f32.mrb[0].mxu0
      %v3454 = vadd.f32 %v3342, %v3453
      %v3455 = vpop.f32.mrb[0].mxu0
      %v3456 = vpop.f32.mrb[0].mxu0
      %v3457 = vadd.f32 %v3342, %v3456
      %v3458 = vpop.f32.mrb[0].mxu0
      %3459 = vmatprep.mubr.bf16.mxu0 0
      %3460 = vmatmul.mubr.bf16.gmra.mrb[0].mxu0 %v3357
      %v3461 = vpop.f32.mrb[0].mxu0
      %v3462 = vadd.f32 %v3342, %v3461
      %v3463 = vpop.f32.mrb[0].mxu0
      %v3464 = vpop.f32.mrb[0].mxu0
      %v3465 = vadd.f32 %v3342, %v3464
      %v3466 = vpop.f32.mrb[0].mxu0
      %3467 = vmatprep.mubr.bf16.mxu0 0
      %3468 = vmatmul.mubr.bf16.gmra.mrb[0].mxu0 %v3360
      %v3469 = vpop.f32.mrb[0].mxu0
      %v3470 = vadd.f32 %v3342, %v3469
      %v3471 = vpop.f32.mrb[0].mxu0
      %v3472 = vpop.f32.mrb[0].mxu0
      %v3473 = vadd.f32 %v3342, %v3472
      %v3474 = vpop.f32.mrb[0].mxu0
      %3475 = vmatprep.mubr.bf16.mxu0 0
      %3476 = vmatmul.mubr.bf16.gmra.mrb[0].mxu0 %v3363
      %v3477 = vpop.f32.mrb[0].mxu0
      %v3478 = vadd.f32 %v3342, %v3477
      %v3479 = vpop.f32.mrb[0].mxu0
      %v3480 = vpop.f32.mrb[0].mxu0
      %v3481 = vadd.f32 %v3342, %v3480
      %v3482 = vpop.f32.mrb[0].mxu0
      %3483 = vmatprep.mubr.bf16.mxu0 0
      %3484 = vmatmul.mubr.bf16.gmra.mrb[0].mxu0 %v3366
      %v3485 = vpop.f32.mrb[0].mxu0
      %v3486 = vadd.f32 %v3342, %v3485
      %v3487 = vpop.f32.mrb[0].mxu0
      %v3488 = vpop.f32.mrb[0].mxu0
      %v3489 = vadd.f32 %v3342, %v3488
      %v3490 = vpop.f32.mrb[0].mxu0
      %3491 = vmatprep.mubr.bf16.mxu0 0
      %3492 = vmatmul.mubr.bf16.gmra.mrb[0].mxu0 %v3369
      %v3493 = vpop.f32.mrb[0].mxu0
      %v3494 = vadd.f32 %v3342, %v3493
      %v3495 = vpop.f32.mrb[0].mxu0
      %v3496 = vpop.f32.mrb[0].mxu0
      %v3497 = vadd.f32 %v3342, %v3496
      %v3498 = vpop.f32.mrb[0].mxu0
      %3499 = vmatprep.mubr.bf16.mxu0 0
      %3500 = vmatmul.mubr.bf16.gmra.mrb[0].mxu0 %v3372
      %v3501 = vpop.f32.mrb[0].mxu0
      %v3502 = vadd.f32 %v3342, %v3501
      %v3503 = vpop.f32.mrb[0].mxu0
      %v3504 = vpop.f32.mrb[0].mxu0
      %v3505 = vadd.f32 %v3342, %v3504
      %v3506 = vpop.f32.mrb[0].mxu0
      %3507 = vmatprep.mubr.bf16.mxu0 0
      %3508 = vmatmul.mubr.bf16.gmra.mrb[0].mxu0 %v3375
      %v3509 = vpop.f32.mrb[0].mxu0
      %v3510 = vadd.f32 %v3342, %v3509
      %v3511 = vpop.f32.mrb[0].mxu0
      %v3512 = vpop.f32.mrb[0].mxu0
      %v3513 = vadd.f32 %v3342, %v3512
      %v3514 = vpop.f32.mrb[0].mxu0
      %3515 = vmatprep.mubr.bf16.mxu0 0
      %3516 = vmatmul.mubr.bf16.gmra.mrb[0].mxu0 %v3378
      %v3517 = vpop.f32.mrb[0].mxu0
      %v3518 = vadd.f32 %v3342, %v3517
      %v3519 = vpop.f32.mrb[0].mxu0
      %v3520 = vpop.f32.mrb[0].mxu0
      %v3521 = vadd.f32 %v3342, %v3520
      %v3522 = vpop.f32.mrb[0].mxu0
      %3523 = vmatprep.mubr.bf16.mxu0 0
      %3524 = vmatmul.mubr.bf16.gmra.mrb[0].mxu0 %v3381
      %v3525 = vpop.f32.mrb[0].mxu0
      %v3526 = vadd.f32 %v3342, %v3525
      %v3527 = vpop.f32.mrb[0].mxu0
      %v3528 = vpop.f32.mrb[0].mxu0
      %v3529 = vadd.f32 %v3342, %v3528
      %v3530 = vpop.f32.mrb[0].mxu0
      %3531 = vmatprep.mubr.bf16.mxu0 0
      %3532 = vmatmul.mubr.bf16.gmra.mrb[0].mxu0 %v3384
      %v3533 = vpop.f32.mrb[0].mxu0
      %v3534 = vadd.f32 %v3342, %v3533
      %v3535 = vpop.f32.mrb[0].mxu0
      %v3536 = vpop.f32.mrb[0].mxu0
      %v3537 = vadd.f32 %v3342, %v3536
      %v3538 = vpop.f32.mrb[0].mxu0
      %3539 = vmatprep.mubr.bf16.mxu0 0
      %3540 = vmatmul.mubr.bf16.gmra.mrb[0].mxu0 %v3387
      %v3541 = vpop.f32.mrb[0].mxu0
      %v3542 = vadd.f32 %v3342, %v3541
      %v3543 = vpop.f32.mrb[0].mxu0
      %v3544 = vpop.f32.mrb[0].mxu0
      %v3545 = vadd.f32 %v3342, %v3544
      %v3546 = vpop.f32.mrb[0].mxu0
      %3547 = vmatprep.mubr.bf16.mxu0 0
      %3548 = vmatmul.mubr.bf16.gmra.mrb[0].mxu0 %v3390
      %v3549 = vpop.f32.mrb[0].mxu0
      %v3550 = vadd.f32 %v3342, %v3549
      %v3551 = vpop.f32.mrb[0].mxu0
      %v3552 = vpop.f32.mrb[0].mxu0
      %v3553 = vadd.f32 %v3342, %v3552
      %v3554 = vpop.f32.mrb[0].mxu0
      %3555 = vdwg.mxu0
      %v3556 = vld [vmem:[%s8] sm:$0x1]
      %v3558 = vlaneseq
      %v3559 = vshrl.u32 %v3558, 7
      %v3560 = vsub.s32 0, %v3559
      %v3561 = vrot.slane %v3556, %v3560
      %v3572 = vunpack.c.l.b16 %v3279
      %v3573 = vunpack.c.l.b16 %v3280
      %v3574 = vunpack.c.l.b16 %v3281
      %v3575 = vunpack.c.l.b16 %v3282
      %v3576 = vunpack.c.l.b16 %v3283
      %v3577 = vunpack.c.l.b16 %v3284
      %v3578 = vunpack.c.l.b16 %v3285
      %v3579 = vunpack.c.l.b16 %v3286
      %v3580 = vunpack.c.l.b16 %v3287
      %v3581 = vpack.c.b16 %v3573, %v3572
      %v3582 = vpack.c.b16 %v3575, %v3574
      %v3583 = vpack.c.b16 %v3577, %v3576
      %v3584 = vpack.c.b16 %v3579, %v3578
      %v3585 = vpack.c.b16 %v3580, %v3580
      %vm3590 = vcmask 588800
      %v3592 = vsel %vm3590, %v3263, 0
      %v3595 = vsel %vm3590, %v3264, 0
      %v3598 = vsel %vm3590, %v3265, 0
      %v3601 = vsel %vm3590, %v3266, 0
      %v3604 = vsel %vm3590, %v3267, 0
      %v3607 = vsel %vm3590, %v3268, 0
      %v3610 = vsel %vm3590, %v3269, 0
      %v3613 = vsel %vm3590, %v3270, 0
      %v3616 = vsel %vm3590, %v3271, 0
      %v3619 = vsel %vm3590, %v3272, 0
      %v3622 = vsel %vm3590, %v3273, 0
      %v3625 = vsel %vm3590, %v3274, 0
      %v3628 = vsel %vm3590, %v3275, 0
      %v3631 = vsel %vm3590, %v3276, 0
      %v3634 = vsel %vm3590, %v3277, 0
      %v3637 = vsel %vm3590, %v3278, 0
      %vm3639 = vcmask 1043456
      %v3641 = vsel %vm3639, %v3585, 0
      %3643 = vmatprep.subr.bf16.mxu0 0
      %3644 = vmatpush1.bf16.msra.mxu0 %v3581
      %3645 = vmatprep.subr.bf16.mxu0 0
      %3646 = vmatpush1.bf16.msra.mxu0 %v3582
      %3647 = vmatprep.subr.bf16.mxu0 0
      %3648 = vmatpush1.bf16.msra.mxu0 %v3583
      %3649 = vmatprep.subr.bf16.mxu0 0
      %3650 = vmatpush1.bf16.msra.mxu0 %v3584
      %3651 = vmatprep.subr.bf16.mxu0 0
      %3652 = vmatpush1.bf16.msra.mxu0 %v3641
      %3653 = vmatprep.subr.bf16.mxu0 0
      %3654 = vmatpush1.bf16.msra.mxu0 0
      %3655 = vmatprep.subr.bf16.mxu0 0
      %3656 = vmatpush1.bf16.msra.mxu0 0
      %3657 = vmatprep.subr.bf16.mxu0 0
      %3658 = vmatpush1.bf16.msra.mxu0 0
      %3659 = vmatprep.subr.bf16.mxu0 0
      %3660 = vmatpush1.bf16.msra.mxu0 0
      %3661 = vmatprep.subr.bf16.mxu0 0
      %3662 = vmatpush1.bf16.msra.mxu0 0
      %3663 = vmatprep.subr.bf16.mxu0 0
      %3664 = vmatpush1.bf16.msra.mxu0 0
      %3665 = vmatprep.subr.bf16.mxu0 0
      %3666 = vmatpush1.bf16.msra.mxu0 0
      %3667 = vmatprep.subr.bf16.mxu0 0
      %3668 = vmatpush1.bf16.msra.mxu0 0
      %3669 = vmatprep.subr.bf16.mxu0 0
      %3670 = vmatpush1.bf16.msra.mxu0 0
      %3671 = vmatprep.subr.bf16.mxu0 0
      %3672 = vmatpush1.bf16.msra.mxu0 0
      %3673 = vmatprep.subr.bf16.mxu0 0
      %3674 = vmatpush1.bf16.msra.mxu0 0
      %3675 = vmatprep.mubr.bf16.mxu0 0
      %3676 = vmatmul.mubr.bf16.gmra.mrb[0].mxu0 %v3592
      %v3677 = vpop.f32.mrb[0].mxu0
      %v3678 = vadd.f32 %v3561, %v3677
      %v3679 = vpop.f32.mrb[0].mxu0
      %v3680 = vpop.f32.mrb[0].mxu0
      %v3681 = vadd.f32 %v3561, %v3680
      %v3682 = vpop.f32.mrb[0].mxu0
      %3683 = vmatprep.mubr.bf16.mxu0 0
      %3684 = vmatmul.mubr.bf16.gmra.mrb[0].mxu0 %v3595
      %v3685 = vpop.f32.mrb[0].mxu0
      %v3686 = vadd.f32 %v3561, %v3685
      %v3687 = vpop.f32.mrb[0].mxu0
      %v3688 = vpop.f32.mrb[0].mxu0
      %v3689 = vadd.f32 %v3561, %v3688
      %v3690 = vpop.f32.mrb[0].mxu0
      %3691 = vmatprep.mubr.bf16.mxu0 0
      %3692 = vmatmul.mubr.bf16.gmra.mrb[0].mxu0 %v3598
      %v3693 = vpop.f32.mrb[0].mxu0
      %v3694 = vadd.f32 %v3561, %v3693
      %v3695 = vpop.f32.mrb[0].mxu0
      %v3696 = vpop.f32.mrb[0].mxu0
      %v3697 = vadd.f32 %v3561, %v3696
      %v3698 = vpop.f32.mrb[0].mxu0
      %3699 = vmatprep.mubr.bf16.mxu0 0
      %3700 = vmatmul.mubr.bf16.gmra.mrb[0].mxu0 %v3601
      %v3701 = vpop.f32.mrb[0].mxu0
      %v3702 = vadd.f32 %v3561, %v3701
      %v3703 = vpop.f32.mrb[0].mxu0
      %v3704 = vpop.f32.mrb[0].mxu0
      %v3705 = vadd.f32 %v3561, %v3704
      %v3706 = vpop.f32.mrb[0].mxu0
      %3707 = vmatprep.mubr.bf16.mxu0 0
      %3708 = vmatmul.mubr.bf16.gmra.mrb[0].mxu0 %v3604
      %v3709 = vpop.f32.mrb[0].mxu0
      %v3710 = vadd.f32 %v3561, %v3709
      %v3711 = vpop.f32.mrb[0].mxu0
      %v3712 = vpop.f32.mrb[0].mxu0
      %v3713 = vadd.f32 %v3561, %v3712
      %v3714 = vpop.f32.mrb[0].mxu0
      %3715 = vmatprep.mubr.bf16.mxu0 0
      %3716 = vmatmul.mubr.bf16.gmra.mrb[0].mxu0 %v3607
      %v3717 = vpop.f32.mrb[0].mxu0
      %v3718 = vadd.f32 %v3561, %v3717
      %v3719 = vpop.f32.mrb[0].mxu0
      %v3720 = vpop.f32.mrb[0].mxu0
      %v3721 = vadd.f32 %v3561, %v3720
      %v3722 = vpop.f32.mrb[0].mxu0
      %3723 = vmatprep.mubr.bf16.mxu0 0
      %3724 = vmatmul.mubr.bf16.gmra.mrb[0].mxu0 %v3610
      %v3725 = vpop.f32.mrb[0].mxu0
      %v3726 = vadd.f32 %v3561, %v3725
      %v3727 = vpop.f32.mrb[0].mxu0
      %v3728 = vpop.f32.mrb[0].mxu0
      %v3729 = vadd.f32 %v3561, %v3728
      %v3730 = vpop.f32.mrb[0].mxu0
      %3731 = vmatprep.mubr.bf16.mxu0 0
      %3732 = vmatmul.mubr.bf16.gmra.mrb[0].mxu0 %v3613
      %v3733 = vpop.f32.mrb[0].mxu0
      %v3734 = vadd.f32 %v3561, %v3733
      %v3735 = vpop.f32.mrb[0].mxu0
      %v3736 = vpop.f32.mrb[0].mxu0
      %v3737 = vadd.f32 %v3561, %v3736
      %v3738 = vpop.f32.mrb[0].mxu0
      %3739 = vmatprep.mubr.bf16.mxu0 0
      %3740 = vmatmul.mubr.bf16.gmra.mrb[0].mxu0 %v3616
      %v3741 = vpop.f32.mrb[0].mxu0
      %v3742 = vadd.f32 %v3561, %v3741
      %v3743 = vpop.f32.mrb[0].mxu0
      %v3744 = vpop.f32.mrb[0].mxu0
      %v3745 = vadd.f32 %v3561, %v3744
      %v3746 = vpop.f32.mrb[0].mxu0
      %3747 = vmatprep.mubr.bf16.mxu0 0
      %3748 = vmatmul.mubr.bf16.gmra.mrb[0].mxu0 %v3619
      %v3749 = vpop.f32.mrb[0].mxu0
      %v3750 = vadd.f32 %v3561, %v3749
      %v3751 = vpop.f32.mrb[0].mxu0
      %v3752 = vpop.f32.mrb[0].mxu0
      %v3753 = vadd.f32 %v3561, %v3752
      %v3754 = vpop.f32.mrb[0].mxu0
      %3755 = vmatprep.mubr.bf16.mxu0 0
      %3756 = vmatmul.mubr.bf16.gmra.mrb[0].mxu0 %v3622
      %v3757 = vpop.f32.mrb[0].mxu0
      %v3758 = vadd.f32 %v3561, %v3757
      %v3759 = vpop.f32.mrb[0].mxu0
      %v3760 = vpop.f32.mrb[0].mxu0
      %v3761 = vadd.f32 %v3561, %v3760
      %v3762 = vpop.f32.mrb[0].mxu0
      %3763 = vmatprep.mubr.bf16.mxu0 0
      %3764 = vmatmul.mubr.bf16.gmra.mrb[0].mxu0 %v3625
      %v3765 = vpop.f32.mrb[0].mxu0
      %v3766 = vadd.f32 %v3561, %v3765
      %v3767 = vpop.f32.mrb[0].mxu0
      %v3768 = vpop.f32.mrb[0].mxu0
      %v3769 = vadd.f32 %v3561, %v3768
      %v3770 = vpop.f32.mrb[0].mxu0
      %3771 = vmatprep.mubr.bf16.mxu0 0
      %3772 = vmatmul.mubr.bf16.gmra.mrb[0].mxu0 %v3628
      %v3773 = vpop.f32.mrb[0].mxu0
      %v3774 = vadd.f32 %v3561, %v3773
      %v3775 = vpop.f32.mrb[0].mxu0
      %v3776 = vpop.f32.mrb[0].mxu0
      %v3777 = vadd.f32 %v3561, %v3776
      %v3778 = vpop.f32.mrb[0].mxu0
      %3779 = vmatprep.mubr.bf16.mxu0 0
      %3780 = vmatmul.mubr.bf16.gmra.mrb[0].mxu0 %v3631
      %v3781 = vpop.f32.mrb[0].mxu0
      %v3782 = vadd.f32 %v3561, %v3781
      %v3783 = vpop.f32.mrb[0].mxu0
      %v3784 = vpop.f32.mrb[0].mxu0
      %v3785 = vadd.f32 %v3561, %v3784
      %v3786 = vpop.f32.mrb[0].mxu0
      %3787 = vmatprep.mubr.bf16.mxu0 0
      %3788 = vmatmul.mubr.bf16.gmra.mrb[0].mxu0 %v3634
      %v3789 = vpop.f32.mrb[0].mxu0
      %v3790 = vadd.f32 %v3561, %v3789
      %v3791 = vpop.f32.mrb[0].mxu0
      %v3792 = vpop.f32.mrb[0].mxu0
      %v3793 = vadd.f32 %v3561, %v3792
      %v3794 = vpop.f32.mrb[0].mxu0
      %3795 = vmatprep.mubr.bf16.mxu0 0
      %3796 = vmatmul.mubr.bf16.gmra.mrb[0].mxu0 %v3637
      %v3797 = vpop.f32.mrb[0].mxu0
      %v3798 = vadd.f32 %v3561, %v3797
      %v3799 = vpop.f32.mrb[0].mxu0
      %v3800 = vpop.f32.mrb[0].mxu0
      %v3801 = vadd.f32 %v3561, %v3800
      %v3802 = vpop.f32.mrb[0].mxu0
      %3803 = vdwg.mxu0
      %v3804 = vadd.f32 %v3678, %v3430
      %v3805 = vadd.f32 %v3681, %v3433
      %v3806 = vadd.f32 %v3686, %v3438
      %v3807 = vadd.f32 %v3689, %v3441
      %v3808 = vadd.f32 %v3694, %v3446
      %v3809 = vadd.f32 %v3697, %v3449
      %v3810 = vadd.f32 %v3702, %v3454
      %v3811 = vadd.f32 %v3705, %v3457
      %v3812 = vadd.f32 %v3710, %v3462
      %v3813 = vadd.f32 %v3713, %v3465
      %v3814 = vadd.f32 %v3718, %v3470
      %v3815 = vadd.f32 %v3721, %v3473
      %v3816 = vadd.f32 %v3726, %v3478
      %v3817 = vadd.f32 %v3729, %v3481
      %v3818 = vadd.f32 %v3734, %v3486
      %v3819 = vadd.f32 %v3737, %v3489
      %v3820 = vadd.f32 %v3742, %v3494
      %v3821 = vadd.f32 %v3745, %v3497
      %v3822 = vadd.f32 %v3750, %v3502
      %v3823 = vadd.f32 %v3753, %v3505
      %v3824 = vadd.f32 %v3758, %v3510
      %v3825 = vadd.f32 %v3761, %v3513
      %v3826 = vadd.f32 %v3766, %v3518
      %v3827 = vadd.f32 %v3769, %v3521
      %v3828 = vadd.f32 %v3774, %v3526
      %v3829 = vadd.f32 %v3777, %v3529
      %v3830 = vadd.f32 %v3782, %v3534
      %v3831 = vadd.f32 %v3785, %v3537
      %v3832 = vadd.f32 %v3790, %v3542
      %v3833 = vadd.f32 %v3793, %v3545
      %v3834 = vadd.f32 %v3798, %v3550
      %v3835 = vadd.f32 %v3801, %v3553
      %3836 = vst.msk [vmem:[%s400] sm:$0xff] %vm448, %v3804
      %3837 = vst.msk [vmem:[%s400 + $0x8] sm:$0xff] %vm448, %v3805
      %3838 = vst.msk [vmem:[%s400 + $0x10] sm:$0xff] %vm448, %v3806
      %3839 = vst.msk [vmem:[%s400 + $0x18] sm:$0xff] %vm448, %v3807
      %3840 = vst.msk [vmem:[%s400 + $0x20] sm:$0xff] %vm448, %v3808
      %3841 = vst.msk [vmem:[%s400 + $0x28] sm:$0xff] %vm448, %v3809
      %3842 = vst.msk [vmem:[%s400 + $0x30] sm:$0xff] %vm448, %v3810
      %3843 = vst.msk [vmem:[%s400 + $0x38] sm:$0xff] %vm448, %v3811
      %3844 = vst.msk [vmem:[%s400 + $0x40] sm:$0xff] %vm448, %v3812
      %3845 = vst.msk [vmem:[%s400 + $0x48] sm:$0xff] %vm448, %v3813
      %3846 = vst.msk [vmem:[%s400 + $0x50] sm:$0xff] %vm448, %v3814
      %3847 = vst.msk [vmem:[%s400 + $0x58] sm:$0xff] %vm448, %v3815
      %3848 = vst.msk [vmem:[%s400 + $0x60] sm:$0xff] %vm448, %v3816
      %3849 = vst.msk [vmem:[%s400 + $0x68] sm:$0xff] %vm448, %v3817
      %3850 = vst.msk [vmem:[%s400 + $0x70] sm:$0xff] %vm448, %v3818
      %3851 = vst.msk [vmem:[%s400 + $0x78] sm:$0xff] %vm448, %v3819
      %3852 = vst.msk [vmem:[%s400 + $0x80] sm:$0xff] %vm448, %v3820
      %3853 = vst.msk [vmem:[%s400 + $0x88] sm:$0xff] %vm448, %v3821
      %3854 = vst.msk [vmem:[%s400 + $0x90] sm:$0xff] %vm448, %v3822
      %3855 = vst.msk [vmem:[%s400 + $0x98] sm:$0xff] %vm448, %v3823
      %3856 = vst.msk [vmem:[%s400 + $0xa0] sm:$0xff] %vm448, %v3824
      %3857 = vst.msk [vmem:[%s400 + $0xa8] sm:$0xff] %vm448, %v3825
      %3858 = vst.msk [vmem:[%s400 + $0xb0] sm:$0xff] %vm448, %v3826
      %3859 = vst.msk [vmem:[%s400 + $0xb8] sm:$0xff] %vm448, %v3827
      %3860 = vst.msk [vmem:[%s400 + $0xc0] sm:$0xff] %vm448, %v3828
      %3861 = vst.msk [vmem:[%s400 + $0xc8] sm:$0xff] %vm448, %v3829
      %3862 = vst.msk [vmem:[%s400 + $0xd0] sm:$0xff] %vm448, %v3830
      %3863 = vst.msk [vmem:[%s400 + $0xd8] sm:$0xff] %vm448, %v3831
      %3864 = vst.msk [vmem:[%s400 + $0xe0] sm:$0xff] %vm448, %v3832
      %3865 = vst.msk [vmem:[%s400 + $0xe8] sm:$0xff] %vm448, %v3833
      %3866 = vst.msk [vmem:[%s400 + $0xf0] sm:$0xff] %vm448, %v3834
      %3867 = vst.msk [vmem:[%s400 + $0xf8] sm:$0xff] %vm448, %v3835
      %p3868 = scmp.lt.s32.totalorder %s22, 1
      %s3869 = scalar_select %p3868, %s22, 1
      %s3870 = smul.addr %s3869, 32
      %s3871 = smul.addr %s3870, 8
      %s3872 = scalar_lea.vmem %s11, %s3871
      // Predicated region
      $region65: #{tpu_custom_call.1} parent=63 // pred_check
        %p3873 = pneg %p281
      $region66: #{tpu_custom_call.1} parent=63 // pred_check_branch
        %3875 = sbr.rel (%p3873) target = $region68
      $region67: #{tpu_custom_call.1} parent=63 // pred_region
        _
      $region68: #{tpu_custom_call.1} parent=63 // pred_fallthru
        _
    $region64: #{tpu_custom_call.1} parent=5 // pred_fallthru
      _
    %p3876 = scmp.le.s32.totalorder 2, %s17
    // Predicated region
    $region69: #{tpu_custom_call.1} parent=5 // pred_check
      %p3877 = pneg %p3876
    $region70: #{tpu_custom_call.1} parent=5 // pred_check_branch
      %3879 = sbr.rel (%p3877) target = $region72
    $region71: #{tpu_custom_call.1} parent=5 // pred_region
      %s3880 = ssub.s32 %s17, 2
      // Predicated region
      $region73: #{tpu_custom_call.1} parent=71 // pred_check
        %p3881 = pneg %p287
      $region74: #{tpu_custom_call.1} parent=71 // pred_check_branch
        %3883 = sbr.rel (%p3881) target = $region76
      $region75: #{tpu_custom_call.1} parent=71 // pred_region
        %p3884 = scmp.lt.s32.totalorder %s23, 1
        %s3885 = scalar_select %p3884, %s23, 1
        %s3886 = smul.addr %s3885, 32
        %s3887 = smul.addr %s3886, 8
        %s3888 = scalar_lea.vmem %s11, %s3887
      $region76: #{tpu_custom_call.1} parent=71 // pred_fallthru
        _
    $region72: #{tpu_custom_call.1} parent=5 // pred_fallthru
      _
  $region6: #{tpu_custom_call.1} parent=0 // loop_footer
    %s21 = sadd.s32 1, %s17
  $region7: #{tpu_custom_call.1} parent=0 // loop_footer_branch
    %16 = sbr.rel target = $region3
  $region8: #{tpu_custom_call.1} parent=0 // loop_exit
    _

</llo_original>
